<compile_context>
chip_gen: v7x
topology: tpu7x:2x2x1
jax: 0.10.0
libtpu: 0.0.40
codegen_flags: <defaults>
</compile_context>

<pallas_src>
import math

import jax
import jax.numpy as jnp
from jax.experimental import pallas as pl
from jax.experimental.pallas import tpu as pltpu

# ---- tiny-BERT config (consistent with BertForMaskedLM's structure) ----
VOCAB = 128
HIDDEN = 32
LAYERS = 2
HEADS = 2
HEAD_DIM = HIDDEN // HEADS
INTERMEDIATE = 64
MAX_POS = 64
TYPE_VOCAB = 2
LN_EPS = 1e-12
IGNORE_INDEX = -100  # CrossEntropyLoss default ignore_index in transformers


# ------------------------------ fused forward kernel ------------------------------

def _bert_fwd_kernel(x_ref, labels_ref, bias_ref,
                     emb_g_ref, emb_b_ref,
                     wqkv_ref, bqkv_ref, wo_ref, bo_ref,
                     ln1_g_ref, ln1_b_ref,
                     w1_ref, b1_ref, w2_ref, b2_ref,
                     ln2_g_ref, ln2_b_ref,
                     mlm_w_ref, mlm_b_ref, mlm_g_ref, mlm_beta_ref,
                     dec_w_ref, dec_b_ref,
                     loss_ref, cnt_ref):
    f32 = jnp.float32

    def ln(x, g, b):
        mu = jnp.mean(x, axis=-1, keepdims=True)
        var = jnp.mean(jnp.square(x - mu), axis=-1, keepdims=True)
        return (x - mu) * jax.lax.rsqrt(var + LN_EPS) * g + b

    def gelu(x):  # exact (erf) GELU, matching transformers' default "gelu"
        return 0.5 * x * (1.0 + jax.lax.erf(x * f32(1.0 / math.sqrt(2.0))))

    scale = f32(1.0 / math.sqrt(HEAD_DIM))
    bias = bias_ref[...]  # [BS, BS] additive block-diagonal bias (keeps batches separate)

    # embeddings were summed in glue; embedding LayerNorm here
    h = ln(x_ref[...], emb_g_ref[...], emb_b_ref[...])           # [BS, H]

    for l in range(LAYERS):
        # ---- fused QKV projection: one [BS,H] x [H,3H] MXU op ----
        qkv = jnp.dot(h, wqkv_ref[l], preferred_element_type=f32) + bqkv_ref[l]
        wo = wo_ref[l]                                           # [H, H]
        attn = jnp.zeros_like(h)
        for hd in range(HEADS):
            c = hd * HEAD_DIM
            q = qkv[:, c:c + HEAD_DIM]                           # [BS, Dh]
            k = qkv[:, HIDDEN + c:HIDDEN + c + HEAD_DIM]
            v = qkv[:, 2 * HIDDEN + c:2 * HIDDEN + c + HEAD_DIM]
            # scores via dot_general contracting last dims -> no explicit k.T transpose
            s = jax.lax.dot_general(q, k, (((1,), (1,)), ((), ())),
                                    preferred_element_type=f32)
            s = s * scale + bias
            s = s - jnp.max(s, axis=-1, keepdims=True)
            p = jnp.exp(s)
            p = p / jnp.sum(p, axis=-1, keepdims=True)
            ctx = jnp.dot(p, v, preferred_element_type=f32)      # [BS, Dh]
            # fold the output projection per head; heads never re-assembled
            attn = attn + jnp.dot(ctx, wo[c:c + HEAD_DIM, :],
                                  preferred_element_type=f32)
        attn = attn + bo_ref[l]
        h = ln(h + attn, ln1_g_ref[l], ln1_b_ref[l])

        # ---- fused FFN (w1 + GELU + w2) + residual + LayerNorm ----
        ff = gelu(jnp.dot(h, w1_ref[l], preferred_element_type=f32) + b1_ref[l])
        ff = jnp.dot(ff, w2_ref[l], preferred_element_type=f32) + b2_ref[l]
        h = ln(h + ff, ln2_g_ref[l], ln2_b_ref[l])

    # ---- MLM head: transform dense + LayerNorm + tied decoder (pre-transposed) ----
    t = gelu(jnp.dot(h, mlm_w_ref[...], preferred_element_type=f32) + mlm_b_ref[...])
    t = ln(t, mlm_g_ref[...], mlm_beta_ref[...])
    logits = jnp.dot(t, dec_w_ref[...], preferred_element_type=f32) + dec_b_ref[...]  # [BS, V]

    # ---- masked-LM cross entropy, reduced to (1,1) scalars inside the kernel ----
    labels = labels_ref[...]                                     # [BS, 1] int32
    m = jnp.max(logits, axis=-1, keepdims=True)
    lse = jnp.log(jnp.sum(jnp.exp(logits - m), axis=-1, keepdims=True)) + m
    iota = jax.lax.broadcasted_iota(jnp.int32, logits.shape, 1)
    onehot = (iota == labels).astype(f32)
    tgt = jnp.sum(logits * onehot, axis=-1, keepdims=True)
    valid = (labels != IGNORE_INDEX).astype(f32)
    per_tok = (lse - tgt) * valid
    loss_ref[...] = jnp.sum(per_tok, axis=0, keepdims=True)      # (1, 1)
    cnt_ref[...] = jnp.sum(valid, axis=0, keepdims=True)         # (1, 1)


# ------------------------------ parameters ------------------------------

def init_params(key):
    def nrm(k, shape):
        return 0.02 * jax.random.normal(k, shape, jnp.float32)

    keys = iter(jax.random.split(key, 128))
    p = {
        "word_emb": nrm(next(keys), (VOCAB, HIDDEN)),
        "pos_emb": nrm(next(keys), (MAX_POS, HIDDEN)),
        "type_emb": nrm(next(keys), (TYPE_VOCAB, HIDDEN)),
        "emb_ln_g": jnp.ones((1, HIDDEN), jnp.float32),
        "emb_ln_b": jnp.zeros((1, HIDDEN), jnp.float32),
    }
    wqkv, wo, w1, w2 = [], [], [], []
    for _ in range(LAYERS):
        wq = nrm(next(keys), (HIDDEN, HIDDEN))
        wk = nrm(next(keys), (HIDDEN, HIDDEN))
        wv = nrm(next(keys), (HIDDEN, HIDDEN))
        wqkv.append(jnp.concatenate([wq, wk, wv], axis=1))       # fused QKV weight
        wo.append(nrm(next(keys), (HIDDEN, HIDDEN)))
        w1.append(nrm(next(keys), (HIDDEN, INTERMEDIATE)))
        w2.append(nrm(next(keys), (INTERMEDIATE, HIDDEN)))
    p.update({
        "wqkv": jnp.stack(wqkv),                                  # [L, H, 3H]
        "bqkv": jnp.zeros((LAYERS, 1, 3 * HIDDEN), jnp.float32),
        "wo": jnp.stack(wo),                                      # [L, H, H]
        "bo": jnp.zeros((LAYERS, 1, HIDDEN), jnp.float32),
        "ln1_g": jnp.ones((LAYERS, 1, HIDDEN), jnp.float32),
        "ln1_b": jnp.zeros((LAYERS, 1, HIDDEN), jnp.float32),
        "w1": jnp.stack(w1),                                      # [L, H, I]
        "b1": jnp.zeros((LAYERS, 1, INTERMEDIATE), jnp.float32),
        "w2": jnp.stack(w2),                                      # [L, I, H]
        "b2": jnp.zeros((LAYERS, 1, HIDDEN), jnp.float32),
        "ln2_g": jnp.ones((LAYERS, 1, HIDDEN), jnp.float32),
        "ln2_b": jnp.zeros((LAYERS, 1, HIDDEN), jnp.float32),
        "mlm_w": nrm(next(keys), (HIDDEN, HIDDEN)),
        "mlm_b": jnp.zeros((1, HIDDEN), jnp.float32),
        "mlm_ln_g": jnp.ones((1, HIDDEN), jnp.float32),
        "mlm_ln_b": jnp.zeros((1, HIDDEN), jnp.float32),
        "decoder_b": jnp.zeros((1, VOCAB), jnp.float32),
    })
    # tied decoder weight, transposed ONCE at init (avoids a per-forward transpose)
    p["decoder_w"] = p["word_emb"].T                              # [H, V]
    return p


# ------------------------------ forward ------------------------------

@jax.jit
def bert_pretrain_forward(params, input_ids, mlm_labels):
    b, s = input_ids.shape
    bs = b * s

    # embeddings (gather is glue), everything else runs inside one Pallas kernel
    x = jnp.take(params["word_emb"], input_ids, axis=0)           # [B,S,H]
    x = x + params["pos_emb"][:s][None, :, :]
    x = x + params["type_emb"][0][None, None, :]                  # token_type_ids = 0
    x = x.reshape(bs, HIDDEN).astype(jnp.float32)

    labels = mlm_labels.reshape(bs, 1).astype(jnp.int32)

    # block-diagonal additive bias so all heads/batches share one score matmul
    # (batches never attend to each other; the original has no padding mask)
    batch_ids = jnp.repeat(jnp.arange(b, dtype=jnp.int32), s)
    attn_bias = jnp.where(batch_ids[:, None] == batch_ids[None, :],
                          jnp.float32(0.0), jnp.float32(-1e30))

    vmem = pl.BlockSpec(memory_space=pltpu.MemorySpace.VMEM)
    loss_sum, cnt = pl.pallas_call(
        _bert_fwd_kernel,
        out_shape=(jax.ShapeDtypeStruct((1, 1), jnp.float32),
                   jax.ShapeDtypeStruct((1, 1), jnp.float32)),
        in_specs=[vmem] * 23,
        out_specs=(vmem, vmem),
    )(x, labels, attn_bias,
      params["emb_ln_g"], params["emb_ln_b"],
      params["wqkv"], params["bqkv"], params["wo"], params["bo"],
      params["ln1_g"], params["ln1_b"],
      params["w1"], params["b1"], params["w2"], params["b2"],
      params["ln2_g"], params["ln2_b"],
      params["mlm_w"], params["mlm_b"], params["mlm_ln_g"], params["mlm_ln_b"],
      params["decoder_w"], params["decoder_b"])

    # outputs[0] of BertForMaskedLM with labels = masked LM cross-entropy loss
    return loss_sum[0, 0] / cnt[0, 0]


if __name__ == "__main__":
    key = jax.random.PRNGKey(0)
    pkey, ikey, lkey, mkey = jax.random.split(key, 4)

    params = init_params(pkey)

    B, S = 2, 8
    input_ids = jax.random.randint(ikey, (B, S), 0, VOCAB, dtype=jnp.int32)
    rand_labels = jax.random.randint(lkey, (B, S), 0, VOCAB, dtype=jnp.int32)
    mask = jax.random.bernoulli(mkey, 0.3, (B, S))
    mlm_labels = jnp.where(mask, rand_labels, IGNORE_INDEX).astype(jnp.int32)
    # guarantee at least one supervised position
    mlm_labels = mlm_labels.at[0, 0].set(rand_labels[0, 0])

    loss = bert_pretrain_forward(params, input_ids, mlm_labels)
    loss = jax.block_until_ready(loss)
    assert loss.shape == () and bool(jnp.isfinite(loss))
    print("KERNEL_OK")
</pallas_src>

<mosaic_0001>
module attributes {stable_mosaic.version = 11 : i64} {
  func.func @_bert_fwd_kernel(%arg0: memref<16x32xf32, #tpu.memory_space<vmem>>, %arg1: memref<16x1xi32, #tpu.memory_space<vmem>>, %arg2: memref<16x16xf32, #tpu.memory_space<vmem>>, %arg3: memref<1x32xf32, #tpu.memory_space<vmem>>, %arg4: memref<1x32xf32, #tpu.memory_space<vmem>>, %arg5: memref<2x32x96xf32, #tpu.memory_space<vmem>>, %arg6: memref<2x1x96xf32, #tpu.memory_space<vmem>>, %arg7: memref<2x32x32xf32, #tpu.memory_space<vmem>>, %arg8: memref<2x1x32xf32, #tpu.memory_space<vmem>>, %arg9: memref<2x1x32xf32, #tpu.memory_space<vmem>>, %arg10: memref<2x1x32xf32, #tpu.memory_space<vmem>>, %arg11: memref<2x32x64xf32, #tpu.memory_space<vmem>>, %arg12: memref<2x1x64xf32, #tpu.memory_space<vmem>>, %arg13: memref<2x64x32xf32, #tpu.memory_space<vmem>>, %arg14: memref<2x1x32xf32, #tpu.memory_space<vmem>>, %arg15: memref<2x1x32xf32, #tpu.memory_space<vmem>>, %arg16: memref<2x1x32xf32, #tpu.memory_space<vmem>>, %arg17: memref<32x32xf32, #tpu.memory_space<vmem>>, %arg18: memref<1x32xf32, #tpu.memory_space<vmem>>, %arg19: memref<1x32xf32, #tpu.memory_space<vmem>>, %arg20: memref<1x32xf32, #tpu.memory_space<vmem>>, %arg21: memref<32x128xf32, #tpu.memory_space<vmem>>, %arg22: memref<1x128xf32, #tpu.memory_space<vmem>>, %arg23: memref<1x1xf32, #tpu.memory_space<vmem>>, %arg24: memref<1x1xf32, #tpu.memory_space<vmem>>) attributes {dimension_semantics = [], scalar_prefetch = 0 : i64, scratch_operands = 0 : i64, tpu.core_type = #tpu.core_type<tc>} {
    %c0 = arith.constant 0 : index
    %c0_0 = arith.constant 0 : index
    %0 = vector.load %arg2[%c0, %c0_0] : memref<16x16xf32, #tpu.memory_space<vmem>>, vector<16x16xf32>
    %c0_1 = arith.constant 0 : index
    %c0_2 = arith.constant 0 : index
    %1 = vector.load %arg0[%c0_1, %c0_2] : memref<16x32xf32, #tpu.memory_space<vmem>>, vector<16x32xf32>
    %c0_3 = arith.constant 0 : index
    %c0_4 = arith.constant 0 : index
    %2 = vector.load %arg3[%c0_3, %c0_4] : memref<1x32xf32, #tpu.memory_space<vmem>>, vector<1x32xf32>
    %c0_5 = arith.constant 0 : index
    %c0_6 = arith.constant 0 : index
    %3 = vector.load %arg4[%c0_5, %c0_6] : memref<1x32xf32, #tpu.memory_space<vmem>>, vector<1x32xf32>
    %cst = arith.constant dense<0.000000e+00> : vector<16xf32>
    %4 = vector.multi_reduction <add>, %1, %cst [1] : vector<16x32xf32> to vector<16xf32>
    %5 = vector.shape_cast %4 : vector<16xf32> to vector<16x1xf32>
    %cst_7 = arith.constant 3.200000e+01 : f32
    %6 = vector.broadcast %cst_7 : f32 to vector<16x1xf32>
    %7 = arith.divf %5, %6 : vector<16x1xf32>
    %8 = vector.broadcast %7 : vector<16x1xf32> to vector<16x32xf32>
    %9 = arith.subf %1, %8 : vector<16x32xf32>
    %10 = arith.mulf %9, %9 : vector<16x32xf32>
    %cst_8 = arith.constant dense<0.000000e+00> : vector<16xf32>
    %11 = vector.multi_reduction <add>, %10, %cst_8 [1] : vector<16x32xf32> to vector<16xf32>
    %12 = vector.shape_cast %11 : vector<16xf32> to vector<16x1xf32>
    %cst_9 = arith.constant 3.200000e+01 : f32
    %13 = vector.broadcast %cst_9 : f32 to vector<16x1xf32>
    %14 = arith.divf %12, %13 : vector<16x1xf32>
    %15 = vector.broadcast %7 : vector<16x1xf32> to vector<16x32xf32>
    %16 = arith.subf %1, %15 : vector<16x32xf32>
    %cst_10 = arith.constant 9.99999996E-13 : f32
    %17 = vector.broadcast %cst_10 : f32 to vector<16x1xf32>
    %18 = arith.addf %14, %17 : vector<16x1xf32>
    %19 = math.rsqrt %18 : vector<16x1xf32>
    %20 = vector.broadcast %19 : vector<16x1xf32> to vector<16x32xf32>
    %21 = arith.mulf %16, %20 : vector<16x32xf32>
    %22 = vector.broadcast %2 : vector<1x32xf32> to vector<16x32xf32>
    %23 = arith.mulf %21, %22 : vector<16x32xf32>
    %24 = vector.broadcast %3 : vector<1x32xf32> to vector<16x32xf32>
    %25 = arith.addf %23, %24 : vector<16x32xf32>
    %c0_11 = arith.constant 0 : index
    %c0_12 = arith.constant 0 : index
    %c0_13 = arith.constant 0 : index
    %26 = vector.load %arg5[%c0_11, %c0_12, %c0_13] : memref<2x32x96xf32, #tpu.memory_space<vmem>>, vector<1x32x96xf32>
    %27 = vector.shape_cast %26 : vector<1x32x96xf32> to vector<32x96xf32>
    %cst_14 = arith.constant dense<0.000000e+00> : vector<16x96xf32>
    %28 = tpu.matmul %25, %27, %cst_14 {dimension_numbers = #tpu.dot_dimension_numbers<[1], [0], [0], [1], [0, 0, 1, 1], [], []>} : vector<16x32xf32>, vector<32x96xf32>, vector<16x96xf32> -> vector<16x96xf32>
    %c0_15 = arith.constant 0 : index
    %c0_16 = arith.constant 0 : index
    %c0_17 = arith.constant 0 : index
    %29 = vector.load %arg6[%c0_15, %c0_16, %c0_17] : memref<2x1x96xf32, #tpu.memory_space<vmem>>, vector<1x1x96xf32>
    %30 = vector.shape_cast %29 : vector<1x1x96xf32> to vector<1x96xf32>
    %31 = vector.broadcast %30 : vector<1x96xf32> to vector<16x96xf32>
    %32 = arith.addf %28, %31 : vector<16x96xf32>
    %c0_18 = arith.constant 0 : index
    %c0_19 = arith.constant 0 : index
    %c0_20 = arith.constant 0 : index
    %33 = vector.load %arg7[%c0_18, %c0_19, %c0_20] : memref<2x32x32xf32, #tpu.memory_space<vmem>>, vector<1x32x32xf32>
    %34 = vector.shape_cast %33 : vector<1x32x32xf32> to vector<32x32xf32>
    %cst_21 = arith.constant 0.000000e+00 : f32
    %35 = vector.broadcast %cst_21 : f32 to vector<16x32xf32>
    %36 = vector.extract_strided_slice %32 {offsets = [0, 0], sizes = [16, 16], strides = [1, 1]} : vector<16x96xf32> to vector<16x16xf32>
    %37 = vector.extract_strided_slice %32 {offsets = [0, 32], sizes = [16, 16], strides = [1, 1]} : vector<16x96xf32> to vector<16x16xf32>
    %38 = vector.extract_strided_slice %32 {offsets = [0, 64], sizes = [16, 16], strides = [1, 1]} : vector<16x96xf32> to vector<16x16xf32>
    %cst_22 = arith.constant dense<0.000000e+00> : vector<16x16xf32>
    %39 = tpu.matmul %36, %37, %cst_22 {dimension_numbers = #tpu.dot_dimension_numbers<[1], [1], [0], [0], [0, 0, 1, 0], [], []>} : vector<16x16xf32>, vector<16x16xf32>, vector<16x16xf32> -> vector<16x16xf32>
    %cst_23 = arith.constant 2.500000e-01 : f32
    %40 = vector.broadcast %cst_23 : f32 to vector<16x16xf32>
    %41 = arith.mulf %39, %40 : vector<16x16xf32>
    %42 = arith.addf %41, %0 : vector<16x16xf32>
    %cst_24 = arith.constant dense<0xFF800000> : vector<16xf32>
    %43 = vector.multi_reduction <maximumf>, %42, %cst_24 [1] : vector<16x16xf32> to vector<16xf32>
    %44 = vector.shape_cast %43 : vector<16xf32> to vector<16x1xf32>
    %45 = vector.broadcast %44 : vector<16x1xf32> to vector<16x16xf32>
    %46 = arith.subf %42, %45 : vector<16x16xf32>
    %47 = math.exp %46 : vector<16x16xf32>
    %cst_25 = arith.constant dense<0.000000e+00> : vector<16xf32>
    %48 = vector.multi_reduction <add>, %47, %cst_25 [1] : vector<16x16xf32> to vector<16xf32>
    %49 = vector.shape_cast %48 : vector<16xf32> to vector<16x1xf32>
    %50 = vector.broadcast %49 : vector<16x1xf32> to vector<16x16xf32>
    %51 = arith.divf %47, %50 : vector<16x16xf32>
    %cst_26 = arith.constant dense<0.000000e+00> : vector<16x16xf32>
    %52 = tpu.matmul %51, %38, %cst_26 {dimension_numbers = #tpu.dot_dimension_numbers<[1], [0], [0], [1], [0, 0, 1, 1], [], []>} : vector<16x16xf32>, vector<16x16xf32>, vector<16x16xf32> -> vector<16x16xf32>
    %53 = vector.extract_strided_slice %34 {offsets = [0, 0], sizes = [16, 32], strides = [1, 1]} : vector<32x32xf32> to vector<16x32xf32>
    %cst_27 = arith.constant dense<0.000000e+00> : vector<16x32xf32>
    %54 = tpu.matmul %52, %53, %cst_27 {dimension_numbers = #tpu.dot_dimension_numbers<[1], [0], [0], [1], [0, 0, 1, 1], [], []>} : vector<16x16xf32>, vector<16x32xf32>, vector<16x32xf32> -> vector<16x32xf32>
    %55 = arith.addf %35, %54 : vector<16x32xf32>
    %56 = vector.extract_strided_slice %32 {offsets = [0, 16], sizes = [16, 16], strides = [1, 1]} : vector<16x96xf32> to vector<16x16xf32>
    %57 = vector.extract_strided_slice %32 {offsets = [0, 48], sizes = [16, 16], strides = [1, 1]} : vector<16x96xf32> to vector<16x16xf32>
    %58 = vector.extract_strided_slice %32 {offsets = [0, 80], sizes = [16, 16], strides = [1, 1]} : vector<16x96xf32> to vector<16x16xf32>
    %cst_28 = arith.constant dense<0.000000e+00> : vector<16x16xf32>
    %59 = tpu.matmul %56, %57, %cst_28 {dimension_numbers = #tpu.dot_dimension_numbers<[1], [1], [0], [0], [0, 0, 1, 0], [], []>} : vector<16x16xf32>, vector<16x16xf32>, vector<16x16xf32> -> vector<16x16xf32>
    %cst_29 = arith.constant 2.500000e-01 : f32
    %60 = vector.broadcast %cst_29 : f32 to vector<16x16xf32>
    %61 = arith.mulf %59, %60 : vector<16x16xf32>
    %62 = arith.addf %61, %0 : vector<16x16xf32>
    %cst_30 = arith.constant dense<0xFF800000> : vector<16xf32>
    %63 = vector.multi_reduction <maximumf>, %62, %cst_30 [1] : vector<16x16xf32> to vector<16xf32>
    %64 = vector.shape_cast %63 : vector<16xf32> to vector<16x1xf32>
    %65 = vector.broadcast %64 : vector<16x1xf32> to vector<16x16xf32>
    %66 = arith.subf %62, %65 : vector<16x16xf32>
    %67 = math.exp %66 : vector<16x16xf32>
    %cst_31 = arith.constant dense<0.000000e+00> : vector<16xf32>
    %68 = vector.multi_reduction <add>, %67, %cst_31 [1] : vector<16x16xf32> to vector<16xf32>
    %69 = vector.shape_cast %68 : vector<16xf32> to vector<16x1xf32>
    %70 = vector.broadcast %69 : vector<16x1xf32> to vector<16x16xf32>
    %71 = arith.divf %67, %70 : vector<16x16xf32>
    %cst_32 = arith.constant dense<0.000000e+00> : vector<16x16xf32>
    %72 = tpu.matmul %71, %58, %cst_32 {dimension_numbers = #tpu.dot_dimension_numbers<[1], [0], [0], [1], [0, 0, 1, 1], [], []>} : vector<16x16xf32>, vector<16x16xf32>, vector<16x16xf32> -> vector<16x16xf32>
    %73 = vector.extract_strided_slice %34 {offsets = [16, 0], sizes = [16, 32], strides = [1, 1]} : vector<32x32xf32> to vector<16x32xf32>
    %cst_33 = arith.constant dense<0.000000e+00> : vector<16x32xf32>
    %74 = tpu.matmul %72, %73, %cst_33 {dimension_numbers = #tpu.dot_dimension_numbers<[1], [0], [0], [1], [0, 0, 1, 1], [], []>} : vector<16x16xf32>, vector<16x32xf32>, vector<16x32xf32> -> vector<16x32xf32>
    %75 = arith.addf %55, %74 : vector<16x32xf32>
    %c0_34 = arith.constant 0 : index
    %c0_35 = arith.constant 0 : index
    %c0_36 = arith.constant 0 : index
    %76 = vector.load %arg8[%c0_34, %c0_35, %c0_36] : memref<2x1x32xf32, #tpu.memory_space<vmem>>, vector<1x1x32xf32>
    %77 = vector.shape_cast %76 : vector<1x1x32xf32> to vector<1x32xf32>
    %78 = vector.broadcast %77 : vector<1x32xf32> to vector<16x32xf32>
    %79 = arith.addf %75, %78 : vector<16x32xf32>
    %80 = arith.addf %25, %79 : vector<16x32xf32>
    %c0_37 = arith.constant 0 : index
    %c0_38 = arith.constant 0 : index
    %c0_39 = arith.constant 0 : index
    %81 = vector.load %arg9[%c0_37, %c0_38, %c0_39] : memref<2x1x32xf32, #tpu.memory_space<vmem>>, vector<1x1x32xf32>
    %82 = vector.shape_cast %81 : vector<1x1x32xf32> to vector<1x32xf32>
    %c0_40 = arith.constant 0 : index
    %c0_41 = arith.constant 0 : index
    %c0_42 = arith.constant 0 : index
    %83 = vector.load %arg10[%c0_40, %c0_41, %c0_42] : memref<2x1x32xf32, #tpu.memory_space<vmem>>, vector<1x1x32xf32>
    %84 = vector.shape_cast %83 : vector<1x1x32xf32> to vector<1x32xf32>
    %cst_43 = arith.constant dense<0.000000e+00> : vector<16xf32>
    %85 = vector.multi_reduction <add>, %80, %cst_43 [1] : vector<16x32xf32> to vector<16xf32>
    %86 = vector.shape_cast %85 : vector<16xf32> to vector<16x1xf32>
    %cst_44 = arith.constant 3.200000e+01 : f32
    %87 = vector.broadcast %cst_44 : f32 to vector<16x1xf32>
    %88 = arith.divf %86, %87 : vector<16x1xf32>
    %89 = vector.broadcast %88 : vector<16x1xf32> to vector<16x32xf32>
    %90 = arith.subf %80, %89 : vector<16x32xf32>
    %91 = arith.mulf %90, %90 : vector<16x32xf32>
    %cst_45 = arith.constant dense<0.000000e+00> : vector<16xf32>
    %92 = vector.multi_reduction <add>, %91, %cst_45 [1] : vector<16x32xf32> to vector<16xf32>
    %93 = vector.shape_cast %92 : vector<16xf32> to vector<16x1xf32>
    %cst_46 = arith.constant 3.200000e+01 : f32
    %94 = vector.broadcast %cst_46 : f32 to vector<16x1xf32>
    %95 = arith.divf %93, %94 : vector<16x1xf32>
    %96 = vector.broadcast %88 : vector<16x1xf32> to vector<16x32xf32>
    %97 = arith.subf %80, %96 : vector<16x32xf32>
    %cst_47 = arith.constant 9.99999996E-13 : f32
    %98 = vector.broadcast %cst_47 : f32 to vector<16x1xf32>
    %99 = arith.addf %95, %98 : vector<16x1xf32>
    %100 = math.rsqrt %99 : vector<16x1xf32>
    %101 = vector.broadcast %100 : vector<16x1xf32> to vector<16x32xf32>
    %102 = arith.mulf %97, %101 : vector<16x32xf32>
    %103 = vector.broadcast %82 : vector<1x32xf32> to vector<16x32xf32>
    %104 = arith.mulf %102, %103 : vector<16x32xf32>
    %105 = vector.broadcast %84 : vector<1x32xf32> to vector<16x32xf32>
    %106 = arith.addf %104, %105 : vector<16x32xf32>
    %c0_48 = arith.constant 0 : index
    %c0_49 = arith.constant 0 : index
    %c0_50 = arith.constant 0 : index
    %107 = vector.load %arg11[%c0_48, %c0_49, %c0_50] : memref<2x32x64xf32, #tpu.memory_space<vmem>>, vector<1x32x64xf32>
    %108 = vector.shape_cast %107 : vector<1x32x64xf32> to vector<32x64xf32>
    %cst_51 = arith.constant dense<0.000000e+00> : vector<16x64xf32>
    %109 = tpu.matmul %106, %108, %cst_51 {dimension_numbers = #tpu.dot_dimension_numbers<[1], [0], [0], [1], [0, 0, 1, 1], [], []>} : vector<16x32xf32>, vector<32x64xf32>, vector<16x64xf32> -> vector<16x64xf32>
    %c0_52 = arith.constant 0 : index
    %c0_53 = arith.constant 0 : index
    %c0_54 = arith.constant 0 : index
    %110 = vector.load %arg12[%c0_52, %c0_53, %c0_54] : memref<2x1x64xf32, #tpu.memory_space<vmem>>, vector<1x1x64xf32>
    %111 = vector.shape_cast %110 : vector<1x1x64xf32> to vector<1x64xf32>
    %112 = vector.broadcast %111 : vector<1x64xf32> to vector<16x64xf32>
    %113 = arith.addf %109, %112 : vector<16x64xf32>
    %cst_55 = arith.constant 5.000000e-01 : f32
    %114 = vector.broadcast %cst_55 : f32 to vector<16x64xf32>
    %115 = arith.mulf %114, %113 : vector<16x64xf32>
    %cst_56 = arith.constant 0.707106769 : f32
    %116 = vector.broadcast %cst_56 : f32 to vector<16x64xf32>
    %117 = arith.mulf %113, %116 : vector<16x64xf32>
    %118 = math.erf %117 : vector<16x64xf32>
    %cst_57 = arith.constant 1.000000e+00 : f32
    %119 = vector.broadcast %cst_57 : f32 to vector<16x64xf32>
    %120 = arith.addf %119, %118 : vector<16x64xf32>
    %121 = arith.mulf %115, %120 : vector<16x64xf32>
    %c0_58 = arith.constant 0 : index
    %c0_59 = arith.constant 0 : index
    %c0_60 = arith.constant 0 : index
    %122 = vector.load %arg13[%c0_58, %c0_59, %c0_60] : memref<2x64x32xf32, #tpu.memory_space<vmem>>, vector<1x64x32xf32>
    %123 = vector.shape_cast %122 : vector<1x64x32xf32> to vector<64x32xf32>
    %cst_61 = arith.constant dense<0.000000e+00> : vector<16x32xf32>
    %124 = tpu.matmul %121, %123, %cst_61 {dimension_numbers = #tpu.dot_dimension_numbers<[1], [0], [0], [1], [0, 0, 1, 1], [], []>} : vector<16x64xf32>, vector<64x32xf32>, vector<16x32xf32> -> vector<16x32xf32>
    %c0_62 = arith.constant 0 : index
    %c0_63 = arith.constant 0 : index
    %c0_64 = arith.constant 0 : index
    %125 = vector.load %arg14[%c0_62, %c0_63, %c0_64] : memref<2x1x32xf32, #tpu.memory_space<vmem>>, vector<1x1x32xf32>
    %126 = vector.shape_cast %125 : vector<1x1x32xf32> to vector<1x32xf32>
    %127 = vector.broadcast %126 : vector<1x32xf32> to vector<16x32xf32>
    %128 = arith.addf %124, %127 : vector<16x32xf32>
    %129 = arith.addf %106, %128 : vector<16x32xf32>
    %c0_65 = arith.constant 0 : index
    %c0_66 = arith.constant 0 : index
    %c0_67 = arith.constant 0 : index
    %130 = vector.load %arg15[%c0_65, %c0_66, %c0_67] : memref<2x1x32xf32, #tpu.memory_space<vmem>>, vector<1x1x32xf32>
    %131 = vector.shape_cast %130 : vector<1x1x32xf32> to vector<1x32xf32>
    %c0_68 = arith.constant 0 : index
    %c0_69 = arith.constant 0 : index
    %c0_70 = arith.constant 0 : index
    %132 = vector.load %arg16[%c0_68, %c0_69, %c0_70] : memref<2x1x32xf32, #tpu.memory_space<vmem>>, vector<1x1x32xf32>
    %133 = vector.shape_cast %132 : vector<1x1x32xf32> to vector<1x32xf32>
    %cst_71 = arith.constant dense<0.000000e+00> : vector<16xf32>
    %134 = vector.multi_reduction <add>, %129, %cst_71 [1] : vector<16x32xf32> to vector<16xf32>
    %135 = vector.shape_cast %134 : vector<16xf32> to vector<16x1xf32>
    %cst_72 = arith.constant 3.200000e+01 : f32
    %136 = vector.broadcast %cst_72 : f32 to vector<16x1xf32>
    %137 = arith.divf %135, %136 : vector<16x1xf32>
    %138 = vector.broadcast %137 : vector<16x1xf32> to vector<16x32xf32>
    %139 = arith.subf %129, %138 : vector<16x32xf32>
    %140 = arith.mulf %139, %139 : vector<16x32xf32>
    %cst_73 = arith.constant dense<0.000000e+00> : vector<16xf32>
    %141 = vector.multi_reduction <add>, %140, %cst_73 [1] : vector<16x32xf32> to vector<16xf32>
    %142 = vector.shape_cast %141 : vector<16xf32> to vector<16x1xf32>
    %cst_74 = arith.constant 3.200000e+01 : f32
    %143 = vector.broadcast %cst_74 : f32 to vector<16x1xf32>
    %144 = arith.divf %142, %143 : vector<16x1xf32>
    %145 = vector.broadcast %137 : vector<16x1xf32> to vector<16x32xf32>
    %146 = arith.subf %129, %145 : vector<16x32xf32>
    %cst_75 = arith.constant 9.99999996E-13 : f32
    %147 = vector.broadcast %cst_75 : f32 to vector<16x1xf32>
    %148 = arith.addf %144, %147 : vector<16x1xf32>
    %149 = math.rsqrt %148 : vector<16x1xf32>
    %150 = vector.broadcast %149 : vector<16x1xf32> to vector<16x32xf32>
    %151 = arith.mulf %146, %150 : vector<16x32xf32>
    %152 = vector.broadcast %131 : vector<1x32xf32> to vector<16x32xf32>
    %153 = arith.mulf %151, %152 : vector<16x32xf32>
    %154 = vector.broadcast %133 : vector<1x32xf32> to vector<16x32xf32>
    %155 = arith.addf %153, %154 : vector<16x32xf32>
    %c1 = arith.constant 1 : index
    %c0_76 = arith.constant 0 : index
    %c0_77 = arith.constant 0 : index
    %156 = vector.load %arg5[%c1, %c0_76, %c0_77] : memref<2x32x96xf32, #tpu.memory_space<vmem>>, vector<1x32x96xf32>
    %157 = vector.shape_cast %156 : vector<1x32x96xf32> to vector<32x96xf32>
    %cst_78 = arith.constant dense<0.000000e+00> : vector<16x96xf32>
    %158 = tpu.matmul %155, %157, %cst_78 {dimension_numbers = #tpu.dot_dimension_numbers<[1], [0], [0], [1], [0, 0, 1, 1], [], []>} : vector<16x32xf32>, vector<32x96xf32>, vector<16x96xf32> -> vector<16x96xf32>
    %c1_79 = arith.constant 1 : index
    %c0_80 = arith.constant 0 : index
    %c0_81 = arith.constant 0 : index
    %159 = vector.load %arg6[%c1_79, %c0_80, %c0_81] : memref<2x1x96xf32, #tpu.memory_space<vmem>>, vector<1x1x96xf32>
    %160 = vector.shape_cast %159 : vector<1x1x96xf32> to vector<1x96xf32>
    %161 = vector.broadcast %160 : vector<1x96xf32> to vector<16x96xf32>
    %162 = arith.addf %158, %161 : vector<16x96xf32>
    %c1_82 = arith.constant 1 : index
    %c0_83 = arith.constant 0 : index
    %c0_84 = arith.constant 0 : index
    %163 = vector.load %arg7[%c1_82, %c0_83, %c0_84] : memref<2x32x32xf32, #tpu.memory_space<vmem>>, vector<1x32x32xf32>
    %164 = vector.shape_cast %163 : vector<1x32x32xf32> to vector<32x32xf32>
    %cst_85 = arith.constant 0.000000e+00 : f32
    %165 = vector.broadcast %cst_85 : f32 to vector<16x32xf32>
    %166 = vector.extract_strided_slice %162 {offsets = [0, 0], sizes = [16, 16], strides = [1, 1]} : vector<16x96xf32> to vector<16x16xf32>
    %167 = vector.extract_strided_slice %162 {offsets = [0, 32], sizes = [16, 16], strides = [1, 1]} : vector<16x96xf32> to vector<16x16xf32>
    %168 = vector.extract_strided_slice %162 {offsets = [0, 64], sizes = [16, 16], strides = [1, 1]} : vector<16x96xf32> to vector<16x16xf32>
    %cst_86 = arith.constant dense<0.000000e+00> : vector<16x16xf32>
    %169 = tpu.matmul %166, %167, %cst_86 {dimension_numbers = #tpu.dot_dimension_numbers<[1], [1], [0], [0], [0, 0, 1, 0], [], []>} : vector<16x16xf32>, vector<16x16xf32>, vector<16x16xf32> -> vector<16x16xf32>
    %cst_87 = arith.constant 2.500000e-01 : f32
    %170 = vector.broadcast %cst_87 : f32 to vector<16x16xf32>
    %171 = arith.mulf %169, %170 : vector<16x16xf32>
    %172 = arith.addf %171, %0 : vector<16x16xf32>
    %cst_88 = arith.constant dense<0xFF800000> : vector<16xf32>
    %173 = vector.multi_reduction <maximumf>, %172, %cst_88 [1] : vector<16x16xf32> to vector<16xf32>
    %174 = vector.shape_cast %173 : vector<16xf32> to vector<16x1xf32>
    %175 = vector.broadcast %174 : vector<16x1xf32> to vector<16x16xf32>
    %176 = arith.subf %172, %175 : vector<16x16xf32>
    %177 = math.exp %176 : vector<16x16xf32>
    %cst_89 = arith.constant dense<0.000000e+00> : vector<16xf32>
    %178 = vector.multi_reduction <add>, %177, %cst_89 [1] : vector<16x16xf32> to vector<16xf32>
    %179 = vector.shape_cast %178 : vector<16xf32> to vector<16x1xf32>
    %180 = vector.broadcast %179 : vector<16x1xf32> to vector<16x16xf32>
    %181 = arith.divf %177, %180 : vector<16x16xf32>
    %cst_90 = arith.constant dense<0.000000e+00> : vector<16x16xf32>
    %182 = tpu.matmul %181, %168, %cst_90 {dimension_numbers = #tpu.dot_dimension_numbers<[1], [0], [0], [1], [0, 0, 1, 1], [], []>} : vector<16x16xf32>, vector<16x16xf32>, vector<16x16xf32> -> vector<16x16xf32>
    %183 = vector.extract_strided_slice %164 {offsets = [0, 0], sizes = [16, 32], strides = [1, 1]} : vector<32x32xf32> to vector<16x32xf32>
    %cst_91 = arith.constant dense<0.000000e+00> : vector<16x32xf32>
    %184 = tpu.matmul %182, %183, %cst_91 {dimension_numbers = #tpu.dot_dimension_numbers<[1], [0], [0], [1], [0, 0, 1, 1], [], []>} : vector<16x16xf32>, vector<16x32xf32>, vector<16x32xf32> -> vector<16x32xf32>
    %185 = arith.addf %165, %184 : vector<16x32xf32>
    %186 = vector.extract_strided_slice %162 {offsets = [0, 16], sizes = [16, 16], strides = [1, 1]} : vector<16x96xf32> to vector<16x16xf32>
    %187 = vector.extract_strided_slice %162 {offsets = [0, 48], sizes = [16, 16], strides = [1, 1]} : vector<16x96xf32> to vector<16x16xf32>
    %188 = vector.extract_strided_slice %162 {offsets = [0, 80], sizes = [16, 16], strides = [1, 1]} : vector<16x96xf32> to vector<16x16xf32>
    %cst_92 = arith.constant dense<0.000000e+00> : vector<16x16xf32>
    %189 = tpu.matmul %186, %187, %cst_92 {dimension_numbers = #tpu.dot_dimension_numbers<[1], [1], [0], [0], [0, 0, 1, 0], [], []>} : vector<16x16xf32>, vector<16x16xf32>, vector<16x16xf32> -> vector<16x16xf32>
    %cst_93 = arith.constant 2.500000e-01 : f32
    %190 = vector.broadcast %cst_93 : f32 to vector<16x16xf32>
    %191 = arith.mulf %189, %190 : vector<16x16xf32>
    %192 = arith.addf %191, %0 : vector<16x16xf32>
    %cst_94 = arith.constant dense<0xFF800000> : vector<16xf32>
    %193 = vector.multi_reduction <maximumf>, %192, %cst_94 [1] : vector<16x16xf32> to vector<16xf32>
    %194 = vector.shape_cast %193 : vector<16xf32> to vector<16x1xf32>
    %195 = vector.broadcast %194 : vector<16x1xf32> to vector<16x16xf32>
    %196 = arith.subf %192, %195 : vector<16x16xf32>
    %197 = math.exp %196 : vector<16x16xf32>
    %cst_95 = arith.constant dense<0.000000e+00> : vector<16xf32>
    %198 = vector.multi_reduction <add>, %197, %cst_95 [1] : vector<16x16xf32> to vector<16xf32>
    %199 = vector.shape_cast %198 : vector<16xf32> to vector<16x1xf32>
    %200 = vector.broadcast %199 : vector<16x1xf32> to vector<16x16xf32>
    %201 = arith.divf %197, %200 : vector<16x16xf32>
    %cst_96 = arith.constant dense<0.000000e+00> : vector<16x16xf32>
    %202 = tpu.matmul %201, %188, %cst_96 {dimension_numbers = #tpu.dot_dimension_numbers<[1], [0], [0], [1], [0, 0, 1, 1], [], []>} : vector<16x16xf32>, vector<16x16xf32>, vector<16x16xf32> -> vector<16x16xf32>
    %203 = vector.extract_strided_slice %164 {offsets = [16, 0], sizes = [16, 32], strides = [1, 1]} : vector<32x32xf32> to vector<16x32xf32>
    %cst_97 = arith.constant dense<0.000000e+00> : vector<16x32xf32>
    %204 = tpu.matmul %202, %203, %cst_97 {dimension_numbers = #tpu.dot_dimension_numbers<[1], [0], [0], [1], [0, 0, 1, 1], [], []>} : vector<16x16xf32>, vector<16x32xf32>, vector<16x32xf32> -> vector<16x32xf32>
    %205 = arith.addf %185, %204 : vector<16x32xf32>
    %c1_98 = arith.constant 1 : index
    %c0_99 = arith.constant 0 : index
    %c0_100 = arith.constant 0 : index
    %206 = vector.load %arg8[%c1_98, %c0_99, %c0_100] : memref<2x1x32xf32, #tpu.memory_space<vmem>>, vector<1x1x32xf32>
    %207 = vector.shape_cast %206 : vector<1x1x32xf32> to vector<1x32xf32>
    %208 = vector.broadcast %207 : vector<1x32xf32> to vector<16x32xf32>
    %209 = arith.addf %205, %208 : vector<16x32xf32>
    %210 = arith.addf %155, %209 : vector<16x32xf32>
    %c1_101 = arith.constant 1 : index
    %c0_102 = arith.constant 0 : index
    %c0_103 = arith.constant 0 : index
    %211 = vector.load %arg9[%c1_101, %c0_102, %c0_103] : memref<2x1x32xf32, #tpu.memory_space<vmem>>, vector<1x1x32xf32>
    %212 = vector.shape_cast %211 : vector<1x1x32xf32> to vector<1x32xf32>
    %c1_104 = arith.constant 1 : index
    %c0_105 = arith.constant 0 : index
    %c0_106 = arith.constant 0 : index
    %213 = vector.load %arg10[%c1_104, %c0_105, %c0_106] : memref<2x1x32xf32, #tpu.memory_space<vmem>>, vector<1x1x32xf32>
    %214 = vector.shape_cast %213 : vector<1x1x32xf32> to vector<1x32xf32>
    %cst_107 = arith.constant dense<0.000000e+00> : vector<16xf32>
    %215 = vector.multi_reduction <add>, %210, %cst_107 [1] : vector<16x32xf32> to vector<16xf32>
    %216 = vector.shape_cast %215 : vector<16xf32> to vector<16x1xf32>
    %cst_108 = arith.constant 3.200000e+01 : f32
    %217 = vector.broadcast %cst_108 : f32 to vector<16x1xf32>
    %218 = arith.divf %216, %217 : vector<16x1xf32>
    %219 = vector.broadcast %218 : vector<16x1xf32> to vector<16x32xf32>
    %220 = arith.subf %210, %219 : vector<16x32xf32>
    %221 = arith.mulf %220, %220 : vector<16x32xf32>
    %cst_109 = arith.constant dense<0.000000e+00> : vector<16xf32>
    %222 = vector.multi_reduction <add>, %221, %cst_109 [1] : vector<16x32xf32> to vector<16xf32>
    %223 = vector.shape_cast %222 : vector<16xf32> to vector<16x1xf32>
    %cst_110 = arith.constant 3.200000e+01 : f32
    %224 = vector.broadcast %cst_110 : f32 to vector<16x1xf32>
    %225 = arith.divf %223, %224 : vector<16x1xf32>
    %226 = vector.broadcast %218 : vector<16x1xf32> to vector<16x32xf32>
    %227 = arith.subf %210, %226 : vector<16x32xf32>
    %cst_111 = arith.constant 9.99999996E-13 : f32
    %228 = vector.broadcast %cst_111 : f32 to vector<16x1xf32>
    %229 = arith.addf %225, %228 : vector<16x1xf32>
    %230 = math.rsqrt %229 : vector<16x1xf32>
    %231 = vector.broadcast %230 : vector<16x1xf32> to vector<16x32xf32>
    %232 = arith.mulf %227, %231 : vector<16x32xf32>
    %233 = vector.broadcast %212 : vector<1x32xf32> to vector<16x32xf32>
    %234 = arith.mulf %232, %233 : vector<16x32xf32>
    %235 = vector.broadcast %214 : vector<1x32xf32> to vector<16x32xf32>
    %236 = arith.addf %234, %235 : vector<16x32xf32>
    %c1_112 = arith.constant 1 : index
    %c0_113 = arith.constant 0 : index
    %c0_114 = arith.constant 0 : index
    %237 = vector.load %arg11[%c1_112, %c0_113, %c0_114] : memref<2x32x64xf32, #tpu.memory_space<vmem>>, vector<1x32x64xf32>
    %238 = vector.shape_cast %237 : vector<1x32x64xf32> to vector<32x64xf32>
    %cst_115 = arith.constant dense<0.000000e+00> : vector<16x64xf32>
    %239 = tpu.matmul %236, %238, %cst_115 {dimension_numbers = #tpu.dot_dimension_numbers<[1], [0], [0], [1], [0, 0, 1, 1], [], []>} : vector<16x32xf32>, vector<32x64xf32>, vector<16x64xf32> -> vector<16x64xf32>
    %c1_116 = arith.constant 1 : index
    %c0_117 = arith.constant 0 : index
    %c0_118 = arith.constant 0 : index
    %240 = vector.load %arg12[%c1_116, %c0_117, %c0_118] : memref<2x1x64xf32, #tpu.memory_space<vmem>>, vector<1x1x64xf32>
    %241 = vector.shape_cast %240 : vector<1x1x64xf32> to vector<1x64xf32>
    %242 = vector.broadcast %241 : vector<1x64xf32> to vector<16x64xf32>
    %243 = arith.addf %239, %242 : vector<16x64xf32>
    %cst_119 = arith.constant 5.000000e-01 : f32
    %244 = vector.broadcast %cst_119 : f32 to vector<16x64xf32>
    %245 = arith.mulf %244, %243 : vector<16x64xf32>
    %cst_120 = arith.constant 0.707106769 : f32
    %246 = vector.broadcast %cst_120 : f32 to vector<16x64xf32>
    %247 = arith.mulf %243, %246 : vector<16x64xf32>
    %248 = math.erf %247 : vector<16x64xf32>
    %cst_121 = arith.constant 1.000000e+00 : f32
    %249 = vector.broadcast %cst_121 : f32 to vector<16x64xf32>
    %250 = arith.addf %249, %248 : vector<16x64xf32>
    %251 = arith.mulf %245, %250 : vector<16x64xf32>
    %c1_122 = arith.constant 1 : index
    %c0_123 = arith.constant 0 : index
    %c0_124 = arith.constant 0 : index
    %252 = vector.load %arg13[%c1_122, %c0_123, %c0_124] : memref<2x64x32xf32, #tpu.memory_space<vmem>>, vector<1x64x32xf32>
    %253 = vector.shape_cast %252 : vector<1x64x32xf32> to vector<64x32xf32>
    %cst_125 = arith.constant dense<0.000000e+00> : vector<16x32xf32>
    %254 = tpu.matmul %251, %253, %cst_125 {dimension_numbers = #tpu.dot_dimension_numbers<[1], [0], [0], [1], [0, 0, 1, 1], [], []>} : vector<16x64xf32>, vector<64x32xf32>, vector<16x32xf32> -> vector<16x32xf32>
    %c1_126 = arith.constant 1 : index
    %c0_127 = arith.constant 0 : index
    %c0_128 = arith.constant 0 : index
    %255 = vector.load %arg14[%c1_126, %c0_127, %c0_128] : memref<2x1x32xf32, #tpu.memory_space<vmem>>, vector<1x1x32xf32>
    %256 = vector.shape_cast %255 : vector<1x1x32xf32> to vector<1x32xf32>
    %257 = vector.broadcast %256 : vector<1x32xf32> to vector<16x32xf32>
    %258 = arith.addf %254, %257 : vector<16x32xf32>
    %259 = arith.addf %236, %258 : vector<16x32xf32>
    %c1_129 = arith.constant 1 : index
    %c0_130 = arith.constant 0 : index
    %c0_131 = arith.constant 0 : index
    %260 = vector.load %arg15[%c1_129, %c0_130, %c0_131] : memref<2x1x32xf32, #tpu.memory_space<vmem>>, vector<1x1x32xf32>
    %261 = vector.shape_cast %260 : vector<1x1x32xf32> to vector<1x32xf32>
    %c1_132 = arith.constant 1 : index
    %c0_133 = arith.constant 0 : index
    %c0_134 = arith.constant 0 : index
    %262 = vector.load %arg16[%c1_132, %c0_133, %c0_134] : memref<2x1x32xf32, #tpu.memory_space<vmem>>, vector<1x1x32xf32>
    %263 = vector.shape_cast %262 : vector<1x1x32xf32> to vector<1x32xf32>
    %cst_135 = arith.constant dense<0.000000e+00> : vector<16xf32>
    %264 = vector.multi_reduction <add>, %259, %cst_135 [1] : vector<16x32xf32> to vector<16xf32>
    %265 = vector.shape_cast %264 : vector<16xf32> to vector<16x1xf32>
    %cst_136 = arith.constant 3.200000e+01 : f32
    %266 = vector.broadcast %cst_136 : f32 to vector<16x1xf32>
    %267 = arith.divf %265, %266 : vector<16x1xf32>
    %268 = vector.broadcast %267 : vector<16x1xf32> to vector<16x32xf32>
    %269 = arith.subf %259, %268 : vector<16x32xf32>
    %270 = arith.mulf %269, %269 : vector<16x32xf32>
    %cst_137 = arith.constant dense<0.000000e+00> : vector<16xf32>
    %271 = vector.multi_reduction <add>, %270, %cst_137 [1] : vector<16x32xf32> to vector<16xf32>
    %272 = vector.shape_cast %271 : vector<16xf32> to vector<16x1xf32>
    %cst_138 = arith.constant 3.200000e+01 : f32
    %273 = vector.broadcast %cst_138 : f32 to vector<16x1xf32>
    %274 = arith.divf %272, %273 : vector<16x1xf32>
    %275 = vector.broadcast %267 : vector<16x1xf32> to vector<16x32xf32>
    %276 = arith.subf %259, %275 : vector<16x32xf32>
    %cst_139 = arith.constant 9.99999996E-13 : f32
    %277 = vector.broadcast %cst_139 : f32 to vector<16x1xf32>
    %278 = arith.addf %274, %277 : vector<16x1xf32>
    %279 = math.rsqrt %278 : vector<16x1xf32>
    %280 = vector.broadcast %279 : vector<16x1xf32> to vector<16x32xf32>
    %281 = arith.mulf %276, %280 : vector<16x32xf32>
    %282 = vector.broadcast %261 : vector<1x32xf32> to vector<16x32xf32>
    %283 = arith.mulf %281, %282 : vector<16x32xf32>
    %284 = vector.broadcast %263 : vector<1x32xf32> to vector<16x32xf32>
    %285 = arith.addf %283, %284 : vector<16x32xf32>
    %c0_140 = arith.constant 0 : index
    %c0_141 = arith.constant 0 : index
    %286 = vector.load %arg17[%c0_140, %c0_141] : memref<32x32xf32, #tpu.memory_space<vmem>>, vector<32x32xf32>
    %cst_142 = arith.constant dense<0.000000e+00> : vector<16x32xf32>
    %287 = tpu.matmul %285, %286, %cst_142 {dimension_numbers = #tpu.dot_dimension_numbers<[1], [0], [0], [1], [0, 0, 1, 1], [], []>} : vector<16x32xf32>, vector<32x32xf32>, vector<16x32xf32> -> vector<16x32xf32>
    %c0_143 = arith.constant 0 : index
    %c0_144 = arith.constant 0 : index
    %288 = vector.load %arg18[%c0_143, %c0_144] : memref<1x32xf32, #tpu.memory_space<vmem>>, vector<1x32xf32>
    %289 = vector.broadcast %288 : vector<1x32xf32> to vector<16x32xf32>
    %290 = arith.addf %287, %289 : vector<16x32xf32>
    %cst_145 = arith.constant 5.000000e-01 : f32
    %291 = vector.broadcast %cst_145 : f32 to vector<16x32xf32>
    %292 = arith.mulf %291, %290 : vector<16x32xf32>
    %cst_146 = arith.constant 0.707106769 : f32
    %293 = vector.broadcast %cst_146 : f32 to vector<16x32xf32>
    %294 = arith.mulf %290, %293 : vector<16x32xf32>
    %295 = math.erf %294 : vector<16x32xf32>
    %cst_147 = arith.constant 1.000000e+00 : f32
    %296 = vector.broadcast %cst_147 : f32 to vector<16x32xf32>
    %297 = arith.addf %296, %295 : vector<16x32xf32>
    %298 = arith.mulf %292, %297 : vector<16x32xf32>
    %c0_148 = arith.constant 0 : index
    %c0_149 = arith.constant 0 : index
    %299 = vector.load %arg19[%c0_148, %c0_149] : memref<1x32xf32, #tpu.memory_space<vmem>>, vector<1x32xf32>
    %c0_150 = arith.constant 0 : index
    %c0_151 = arith.constant 0 : index
    %300 = vector.load %arg20[%c0_150, %c0_151] : memref<1x32xf32, #tpu.memory_space<vmem>>, vector<1x32xf32>
    %cst_152 = arith.constant dense<0.000000e+00> : vector<16xf32>
    %301 = vector.multi_reduction <add>, %298, %cst_152 [1] : vector<16x32xf32> to vector<16xf32>
    %302 = vector.shape_cast %301 : vector<16xf32> to vector<16x1xf32>
    %cst_153 = arith.constant 3.200000e+01 : f32
    %303 = vector.broadcast %cst_153 : f32 to vector<16x1xf32>
    %304 = arith.divf %302, %303 : vector<16x1xf32>
    %305 = vector.broadcast %304 : vector<16x1xf32> to vector<16x32xf32>
    %306 = arith.subf %298, %305 : vector<16x32xf32>
    %307 = arith.mulf %306, %306 : vector<16x32xf32>
    %cst_154 = arith.constant dense<0.000000e+00> : vector<16xf32>
    %308 = vector.multi_reduction <add>, %307, %cst_154 [1] : vector<16x32xf32> to vector<16xf32>
    %309 = vector.shape_cast %308 : vector<16xf32> to vector<16x1xf32>
    %cst_155 = arith.constant 3.200000e+01 : f32
    %310 = vector.broadcast %cst_155 : f32 to vector<16x1xf32>
    %311 = arith.divf %309, %310 : vector<16x1xf32>
    %312 = vector.broadcast %304 : vector<16x1xf32> to vector<16x32xf32>
    %313 = arith.subf %298, %312 : vector<16x32xf32>
    %cst_156 = arith.constant 9.99999996E-13 : f32
    %314 = vector.broadcast %cst_156 : f32 to vector<16x1xf32>
    %315 = arith.addf %311, %314 : vector<16x1xf32>
    %316 = math.rsqrt %315 : vector<16x1xf32>
    %317 = vector.broadcast %316 : vector<16x1xf32> to vector<16x32xf32>
    %318 = arith.mulf %313, %317 : vector<16x32xf32>
    %319 = vector.broadcast %299 : vector<1x32xf32> to vector<16x32xf32>
    %320 = arith.mulf %318, %319 : vector<16x32xf32>
    %321 = vector.broadcast %300 : vector<1x32xf32> to vector<16x32xf32>
    %322 = arith.addf %320, %321 : vector<16x32xf32>
    %c0_157 = arith.constant 0 : index
    %c0_158 = arith.constant 0 : index
    %323 = vector.load %arg21[%c0_157, %c0_158] : memref<32x128xf32, #tpu.memory_space<vmem>>, vector<32x128xf32>
    %cst_159 = arith.constant dense<0.000000e+00> : vector<16x128xf32>
    %324 = tpu.matmul %322, %323, %cst_159 {dimension_numbers = #tpu.dot_dimension_numbers<[1], [0], [0], [1], [0, 0, 1, 1], [], []>} : vector<16x32xf32>, vector<32x128xf32>, vector<16x128xf32> -> vector<16x128xf32>
    %c0_160 = arith.constant 0 : index
    %c0_161 = arith.constant 0 : index
    %325 = vector.load %arg22[%c0_160, %c0_161] : memref<1x128xf32, #tpu.memory_space<vmem>>, vector<1x128xf32>
    %326 = vector.broadcast %325 : vector<1x128xf32> to vector<16x128xf32>
    %327 = arith.addf %324, %326 : vector<16x128xf32>
    %c0_162 = arith.constant 0 : index
    %c0_163 = arith.constant 0 : index
    %328 = vector.load %arg1[%c0_162, %c0_163] : memref<16x1xi32, #tpu.memory_space<vmem>>, vector<16x1xi32>
    %cst_164 = arith.constant dense<0xFF800000> : vector<16xf32>
    %329 = vector.multi_reduction <maximumf>, %327, %cst_164 [1] : vector<16x128xf32> to vector<16xf32>
    %330 = vector.shape_cast %329 : vector<16xf32> to vector<16x1xf32>
    %331 = vector.broadcast %330 : vector<16x1xf32> to vector<16x128xf32>
    %332 = arith.subf %327, %331 : vector<16x128xf32>
    %333 = math.exp %332 : vector<16x128xf32>
    %cst_165 = arith.constant dense<0.000000e+00> : vector<16xf32>
    %334 = vector.multi_reduction <add>, %333, %cst_165 [1] : vector<16x128xf32> to vector<16xf32>
    %335 = vector.shape_cast %334 : vector<16xf32> to vector<16x1xf32>
    %336 = math.log %335 : vector<16x1xf32>
    %337 = arith.addf %336, %330 : vector<16x1xf32>
    %338 = tpu.iota {dimensions = array<i32: 1>} : vector<16x128xi32>
    %339 = vector.broadcast %328 : vector<16x1xi32> to vector<16x128xi32>
    %340 = arith.cmpi eq, %338, %339 : vector<16x128xi32>
    %341 = arith.extui %340 : vector<16x128xi1> to vector<16x128xi32>
    %342 = arith.sitofp %341 : vector<16x128xi32> to vector<16x128xf32>
    %343 = arith.mulf %327, %342 : vector<16x128xf32>
    %cst_166 = arith.constant dense<0.000000e+00> : vector<16xf32>
    %344 = vector.multi_reduction <add>, %343, %cst_166 [1] : vector<16x128xf32> to vector<16xf32>
    %345 = vector.shape_cast %344 : vector<16xf32> to vector<16x1xf32>
    %c-100_i32 = arith.constant -100 : i32
    %346 = vector.broadcast %c-100_i32 : i32 to vector<16x1xi32>
    %347 = arith.cmpi ne, %328, %346 : vector<16x1xi32>
    %348 = arith.extui %347 : vector<16x1xi1> to vector<16x1xi32>
    %349 = arith.sitofp %348 : vector<16x1xi32> to vector<16x1xf32>
    %350 = arith.subf %337, %345 : vector<16x1xf32>
    %351 = arith.mulf %350, %349 : vector<16x1xf32>
    %cst_167 = arith.constant dense<0.000000e+00> : vector<1xf32>
    %352 = vector.multi_reduction <add>, %351, %cst_167 [0] : vector<16x1xf32> to vector<1xf32>
    %353 = vector.shape_cast %352 : vector<1xf32> to vector<1x1xf32>
    %c0_168 = arith.constant 0 : index
    %c0_169 = arith.constant 0 : index
    %354 = vector.load %arg23[%c0_168, %c0_169] : memref<1x1xf32, #tpu.memory_space<vmem>>, vector<1x1xf32>
    tpu.vector_store %arg23[%c0_168, %c0_169], %353 {strides = array<i32>} : memref<1x1xf32, #tpu.memory_space<vmem>>, vector<1x1xf32>,
    %cst_170 = arith.constant dense<0.000000e+00> : vector<1xf32>
    %355 = vector.multi_reduction <add>, %349, %cst_170 [0] : vector<16x1xf32> to vector<1xf32>
    %356 = vector.shape_cast %355 : vector<1xf32> to vector<1x1xf32>
    %c0_171 = arith.constant 0 : index
    %c0_172 = arith.constant 0 : index
    %357 = vector.load %arg24[%c0_171, %c0_172] : memref<1x1xf32, #tpu.memory_space<vmem>>, vector<1x1xf32>
    tpu.vector_store %arg24[%c0_171, %c0_172], %356 {strides = array<i32>} : memref<1x1xf32, #tpu.memory_space<vmem>>, vector<1x1xf32>,
    return
  }
}

</mosaic_0001>

<llo_original>
// kernel: bert_pretrain_forward.1
$region0: #{bert_pretrain_forward.1}
  #allocation0 [shape = 'u32[]', space=smem, size = 0x4, offset = 0x4, fixed_abs, tag = 'smem constant byte address 0x4 - core index']
  #allocation1 [shape = 'u32[144,128]{1,0:T(1,128)}', space=vmem, size = 0x12000, scoped, tag = 'internal scratch']
  %s0 = inlined_call_operand.vmem [shape: f32[16,32], index: 0, kind: input, shape index: {}]
  %s1 = inlined_call_operand.vmem [shape: s32[16,1], index: 1, kind: input, shape index: {}]
  %s2 = inlined_call_operand.vmem [shape: f32[16,16], index: 2, kind: input, shape index: {}]
  %s3 = inlined_call_operand.vmem [shape: f32[1,32], index: 3, kind: input, shape index: {}]
  %s4 = inlined_call_operand.vmem [shape: f32[1,32], index: 4, kind: input, shape index: {}]
  %s5 = inlined_call_operand.vmem [shape: f32[2,32,96], index: 5, kind: input, shape index: {}]
  %s6 = inlined_call_operand.vmem [shape: f32[2,1,96], index: 6, kind: input, shape index: {}]
  %s7 = inlined_call_operand.vmem [shape: f32[2,32,32], index: 7, kind: input, shape index: {}]
  %s8 = inlined_call_operand.vmem [shape: f32[2,1,32], index: 8, kind: input, shape index: {}]
  %s9 = inlined_call_operand.vmem [shape: f32[2,1,32], index: 9, kind: input, shape index: {}]
  %s10 = inlined_call_operand.vmem [shape: f32[2,1,32], index: 10, kind: input, shape index: {}]
  %s11 = inlined_call_operand.vmem [shape: f32[2,32,64], index: 11, kind: input, shape index: {}]
  %s12 = inlined_call_operand.vmem [shape: f32[2,1,64], index: 12, kind: input, shape index: {}]
  %s13 = inlined_call_operand.vmem [shape: f32[2,64,32], index: 13, kind: input, shape index: {}]
  %s14 = inlined_call_operand.vmem [shape: f32[2,1,32], index: 14, kind: input, shape index: {}]
  %s15 = inlined_call_operand.vmem [shape: f32[2,1,32], index: 15, kind: input, shape index: {}]
  %s16 = inlined_call_operand.vmem [shape: f32[2,1,32], index: 16, kind: input, shape index: {}]
  %s17 = inlined_call_operand.vmem [shape: f32[32,32], index: 17, kind: input, shape index: {}]
  %s18 = inlined_call_operand.vmem [shape: f32[1,32], index: 18, kind: input, shape index: {}]
  %s19 = inlined_call_operand.vmem [shape: f32[1,32], index: 19, kind: input, shape index: {}]
  %s20 = inlined_call_operand.vmem [shape: f32[1,32], index: 20, kind: input, shape index: {}]
  %s21 = inlined_call_operand.vmem [shape: f32[32,128], index: 21, kind: input, shape index: {}]
  %s22 = inlined_call_operand.vmem [shape: f32[1,128], index: 22, kind: input, shape index: {}]
  %s23 = inlined_call_operand.hbm [shape: f32[1,1], index: 23, kind: output, shape index: {0}]
  %s24 = inlined_call_operand.hbm [shape: f32[1,1], index: 24, kind: output, shape index: {1}]
  %25 = xla_tuple %s23, %s24
  %s26 = sld [smem:[#allocation0]]
  $region110: #{bert_pretrain_forward.1} parent=0
    _
  %s28 = ssub.s32 1, %s26
  %s29 = scalar_select 0, %s28, %s26
  $region1: #{bert_pretrain_forward.1} parent=0
    #allocation2 [shape = 'u8[512]{0}', space=vmem, size = 0x400, scoped, tag = 'output window, operand 0, single buffered']
    #allocation3 [shape = 's32[1]{0}', space=sflag, size = 0x4, scoped, tag = 'scoped memory for bert_pretrain_forward.1']
    #allocation4 [shape = 'u8[512]{0}', space=vmem, size = 0x400, scoped, tag = 'output window, operand 1, single buffered']
    #allocation5 [shape = 's32[1]{0}', space=sflag, size = 0x4, scoped, tag = 'scoped memory for bert_pretrain_forward.1']
    %30 = vsyncpa [#allocation3], 0
    %31 = vsyncpa [#allocation5], 0
    // Predicated region
    $region2: #{bert_pretrain_forward.1} parent=1 // pred_check
      _
    $region3: #{bert_pretrain_forward.1} parent=1 // pred_check_branch
      %33 = sbr.rel (0) target = $region5
    $region4: #{bert_pretrain_forward.1} parent=1 // pred_region
      _
    $region5: #{bert_pretrain_forward.1} parent=1 // pred_fallthru
      _
    // Predicated region
    $region6: #{bert_pretrain_forward.1} parent=1 // pred_check
      _
    $region7: #{bert_pretrain_forward.1} parent=1 // pred_check_branch
      %35 = sbr.rel (0) target = $region9
    $region8: #{bert_pretrain_forward.1} parent=1 // pred_region
      _
    $region9: #{bert_pretrain_forward.1} parent=1 // pred_fallthru
      _
    // Predicated region
    $region10: #{bert_pretrain_forward.1} parent=1 // pred_check
      _
    $region11: #{bert_pretrain_forward.1} parent=1 // pred_check_branch
      %37 = sbr.rel (0) target = $region13
    $region12: #{bert_pretrain_forward.1} parent=1 // pred_region
      _
    $region13: #{bert_pretrain_forward.1} parent=1 // pred_fallthru
      _
    // Predicated region
    $region14: #{bert_pretrain_forward.1} parent=1 // pred_check
      _
    $region15: #{bert_pretrain_forward.1} parent=1 // pred_check_branch
      %39 = sbr.rel (0) target = $region17
    $region16: #{bert_pretrain_forward.1} parent=1 // pred_region
      _
    $region17: #{bert_pretrain_forward.1} parent=1 // pred_fallthru
      _
    // Predicated region
    $region18: #{bert_pretrain_forward.1} parent=1 // pred_check
      _
    $region19: #{bert_pretrain_forward.1} parent=1 // pred_check_branch
      %41 = sbr.rel (0) target = $region21
    $region20: #{bert_pretrain_forward.1} parent=1 // pred_region
      _
    $region21: #{bert_pretrain_forward.1} parent=1 // pred_fallthru
      _
    // Predicated region
    $region22: #{bert_pretrain_forward.1} parent=1 // pred_check
      _
    $region23: #{bert_pretrain_forward.1} parent=1 // pred_check_branch
      %43 = sbr.rel (0) target = $region25
    $region24: #{bert_pretrain_forward.1} parent=1 // pred_region
      _
    $region25: #{bert_pretrain_forward.1} parent=1 // pred_fallthru
      _
    // Predicated region
    $region26: #{bert_pretrain_forward.1} parent=1 // pred_check
      _
    $region27: #{bert_pretrain_forward.1} parent=1 // pred_check_branch
      %45 = sbr.rel (0) target = $region29
    $region28: #{bert_pretrain_forward.1} parent=1 // pred_region
      _
    $region29: #{bert_pretrain_forward.1} parent=1 // pred_fallthru
      _
    // Predicated region
    $region30: #{bert_pretrain_forward.1} parent=1 // pred_check
      _
    $region31: #{bert_pretrain_forward.1} parent=1 // pred_check_branch
      %47 = sbr.rel (0) target = $region33
    $region32: #{bert_pretrain_forward.1} parent=1 // pred_region
      _
    $region33: #{bert_pretrain_forward.1} parent=1 // pred_fallthru
      _
    // Predicated region
    $region34: #{bert_pretrain_forward.1} parent=1 // pred_check
      _
    $region35: #{bert_pretrain_forward.1} parent=1 // pred_check_branch
      %49 = sbr.rel (0) target = $region37
    $region36: #{bert_pretrain_forward.1} parent=1 // pred_region
      _
    $region37: #{bert_pretrain_forward.1} parent=1 // pred_fallthru
      _
    // Predicated region
    $region38: #{bert_pretrain_forward.1} parent=1 // pred_check
      _
    $region39: #{bert_pretrain_forward.1} parent=1 // pred_check_branch
      %51 = sbr.rel (0) target = $region41
    $region40: #{bert_pretrain_forward.1} parent=1 // pred_region
      _
    $region41: #{bert_pretrain_forward.1} parent=1 // pred_fallthru
      _
    // Predicated region
    $region42: #{bert_pretrain_forward.1} parent=1 // pred_check
      _
    $region43: #{bert_pretrain_forward.1} parent=1 // pred_check_branch
      %53 = sbr.rel (0) target = $region45
    $region44: #{bert_pretrain_forward.1} parent=1 // pred_region
      _
    $region45: #{bert_pretrain_forward.1} parent=1 // pred_fallthru
      _
    // Predicated region
    $region46: #{bert_pretrain_forward.1} parent=1 // pred_check
      _
    $region47: #{bert_pretrain_forward.1} parent=1 // pred_check_branch
      %55 = sbr.rel (0) target = $region49
    $region48: #{bert_pretrain_forward.1} parent=1 // pred_region
      _
    $region49: #{bert_pretrain_forward.1} parent=1 // pred_fallthru
      _
    // Predicated region
    $region50: #{bert_pretrain_forward.1} parent=1 // pred_check
      _
    $region51: #{bert_pretrain_forward.1} parent=1 // pred_check_branch
      %57 = sbr.rel (0) target = $region53
    $region52: #{bert_pretrain_forward.1} parent=1 // pred_region
      _
    $region53: #{bert_pretrain_forward.1} parent=1 // pred_fallthru
      _
    // Predicated region
    $region54: #{bert_pretrain_forward.1} parent=1 // pred_check
      _
    $region55: #{bert_pretrain_forward.1} parent=1 // pred_check_branch
      %59 = sbr.rel (0) target = $region57
    $region56: #{bert_pretrain_forward.1} parent=1 // pred_region
      _
    $region57: #{bert_pretrain_forward.1} parent=1 // pred_fallthru
      _
    // Predicated region
    $region58: #{bert_pretrain_forward.1} parent=1 // pred_check
      _
    $region59: #{bert_pretrain_forward.1} parent=1 // pred_check_branch
      %61 = sbr.rel (0) target = $region61
    $region60: #{bert_pretrain_forward.1} parent=1 // pred_region
      _
    $region61: #{bert_pretrain_forward.1} parent=1 // pred_fallthru
      _
    // Predicated region
    $region62: #{bert_pretrain_forward.1} parent=1 // pred_check
      _
    $region63: #{bert_pretrain_forward.1} parent=1 // pred_check_branch
      %63 = sbr.rel (0) target = $region65
    $region64: #{bert_pretrain_forward.1} parent=1 // pred_region
      _
    $region65: #{bert_pretrain_forward.1} parent=1 // pred_fallthru
      _
    // Predicated region
    $region66: #{bert_pretrain_forward.1} parent=1 // pred_check
      _
    $region67: #{bert_pretrain_forward.1} parent=1 // pred_check_branch
      %65 = sbr.rel (0) target = $region69
    $region68: #{bert_pretrain_forward.1} parent=1 // pred_region
      _
    $region69: #{bert_pretrain_forward.1} parent=1 // pred_fallthru
      _
    // Predicated region
    $region70: #{bert_pretrain_forward.1} parent=1 // pred_check
      _
    $region71: #{bert_pretrain_forward.1} parent=1 // pred_check_branch
      %67 = sbr.rel (0) target = $region73
    $region72: #{bert_pretrain_forward.1} parent=1 // pred_region
      _
    $region73: #{bert_pretrain_forward.1} parent=1 // pred_fallthru
      _
    // Predicated region
    $region74: #{bert_pretrain_forward.1} parent=1 // pred_check
      _
    $region75: #{bert_pretrain_forward.1} parent=1 // pred_check_branch
      %69 = sbr.rel (0) target = $region77
    $region76: #{bert_pretrain_forward.1} parent=1 // pred_region
      _
    $region77: #{bert_pretrain_forward.1} parent=1 // pred_fallthru
      _
    // Predicated region
    $region78: #{bert_pretrain_forward.1} parent=1 // pred_check
      _
    $region79: #{bert_pretrain_forward.1} parent=1 // pred_check_branch
      %71 = sbr.rel (0) target = $region81
    $region80: #{bert_pretrain_forward.1} parent=1 // pred_region
      _
    $region81: #{bert_pretrain_forward.1} parent=1 // pred_fallthru
      _
    // Predicated region
    $region82: #{bert_pretrain_forward.1} parent=1 // pred_check
      _
    $region83: #{bert_pretrain_forward.1} parent=1 // pred_check_branch
      %73 = sbr.rel (0) target = $region85
    $region84: #{bert_pretrain_forward.1} parent=1 // pred_region
      _
    $region85: #{bert_pretrain_forward.1} parent=1 // pred_fallthru
      _
    // Predicated region
    $region86: #{bert_pretrain_forward.1} parent=1 // pred_check
      _
    $region87: #{bert_pretrain_forward.1} parent=1 // pred_check_branch
      %75 = sbr.rel (0) target = $region89
    $region88: #{bert_pretrain_forward.1} parent=1 // pred_region
      _
    $region89: #{bert_pretrain_forward.1} parent=1 // pred_fallthru
      _
    // Predicated region
    $region90: #{bert_pretrain_forward.1} parent=1 // pred_check
      _
    $region91: #{bert_pretrain_forward.1} parent=1 // pred_check_branch
      %77 = sbr.rel (0) target = $region93
    $region92: #{bert_pretrain_forward.1} parent=1 // pred_region
      _
    $region93: #{bert_pretrain_forward.1} parent=1 // pred_fallthru
      _
    %v78 = vld [vmem:[%s2] sm:$0xff]
    %v79 = vld [vmem:[%s2 + $0x8] sm:$0xff]
    %v80 = vld [vmem:[%s0] sm:$0xff]
    %v81 = vld [vmem:[%s0 + $0x8] sm:$0xff]
    %v82 = vld [vmem:[%s3] sm:$0x1]
    %v83 = vld [vmem:[%s4] sm:$0x1]
    %vm84 = vcmask 261120
    %v85 = vsel %vm84, %v80, 0.0
    %86 = vadd.xlane.f32.xlu0 %v85
    %v87 = vpop.xlane.xlu0 %86
    %v88 = vsel %vm84, %v81, 0.0
    %89 = vadd.xlane.f32.xlu0 %v88
    %v90 = vpop.xlane.xlu0 %89
    %v91 = vrcp.pop 32.0
    %v92 = vmul.f32 %v87, %v91
    %v93 = vmul.f32 %v90, %v91
    %v94 = vsub.f32 %v80, %v92
    %v95 = vsub.f32 %v81, %v93
    %v96 = vmul.f32 %v94, %v94
    %v97 = vmul.f32 %v95, %v95
    %v98 = vsel %vm84, %v96, 0.0
    %99 = vadd.xlane.f32.xlu0 %v98
    %v100 = vpop.xlane.xlu0 %99
    %v101 = vsel %vm84, %v97, 0.0
    %102 = vadd.xlane.f32.xlu0 %v101
    %v103 = vpop.xlane.xlu0 %102
    %v104 = vmul.f32 %v100, %v91
    %v105 = vmul.f32 %v103, %v91
    %v106 = vadd.f32 %v104, 1e-12
    %v107 = vadd.f32 %v105, 1e-12
    %v108 = vrsqrt.pop %v106
    %v109 = vrsqrt.pop %v107
    %v110 = vmul.f32 %v94, %v108
    %v111 = vmul.f32 %v95, %v109
    %v113 = vlaneseq
    %v114 = vshrl.u32 %v113, 7
    %v115 = vsub.s32 0, %v114
    %v116 = vrot.slane %v82, %v115
    %v118 = vmul.f32 %v110, %v116
    %v119 = vmul.f32 %v111, %v116
    %v121 = vlaneseq
    %v122 = vshrl.u32 %v121, 7
    %v123 = vsub.s32 0, %v122
    %v124 = vrot.slane %v83, %v123
    %v126 = vadd.f32 %v118, %v124
    %v127 = vadd.f32 %v119, %v124
    %v128 = vld [vmem:[%s5] sm:$0xff]
    %v129 = vld [vmem:[%s5 + $0x8] sm:$0xff]
    %v130 = vld [vmem:[%s5 + $0x10] sm:$0xff]
    %v131 = vld [vmem:[%s5 + $0x18] sm:$0xff]
    %v132 = vld [vmem:[%s6] sm:$0x1]
    %v134 = vlaneseq
    %v135 = vshrl.u32 %v134, 7
    %v136 = vsub.s32 0, %v135
    %v137 = vrot.slane %v132, %v136
    %v140 = vsel %vm84, %v126, 0
    %v143 = vsel %vm84, %v127, 0
    %145 = vmatprep.subr.mxu0 0.0
    %146 = vmatpush1.msra.mxu0 %v128
    %147 = vmatprep.subr.mxu0 0.0
    %148 = vmatpush1.msra.mxu0 %v129
    %149 = vmatprep.subr.mxu0 0.0
    %150 = vmatpush1.msra.mxu0 %v130
    %151 = vmatprep.subr.mxu0 0.0
    %152 = vmatpush1.msra.mxu0 %v131
    %153 = vmatprep.subr.mxu0 0.0
    %154 = vmatpush1.msra.mxu0 0.0
    %155 = vmatprep.subr.mxu0 0.0
    %156 = vmatpush1.msra.mxu0 0.0
    %157 = vmatprep.subr.mxu0 0.0
    %158 = vmatpush1.msra.mxu0 0.0
    %159 = vmatprep.subr.mxu0 0.0
    %160 = vmatpush1.msra.mxu0 0.0
    %161 = vmatprep.subr.mxu0 0.0
    %162 = vmatpush1.msra.mxu0 0.0
    %163 = vmatprep.subr.mxu0 0.0
    %164 = vmatpush1.msra.mxu0 0.0
    %165 = vmatprep.subr.mxu0 0.0
    %166 = vmatpush1.msra.mxu0 0.0
    %167 = vmatprep.subr.mxu0 0.0
    %168 = vmatpush1.msra.mxu0 0.0
    %169 = vmatprep.subr.mxu0 0.0
    %170 = vmatpush1.msra.mxu0 0.0
    %171 = vmatprep.subr.mxu0 0.0
    %172 = vmatpush1.msra.mxu0 0.0
    %173 = vmatprep.subr.mxu0 0.0
    %174 = vmatpush1.msra.mxu0 0.0
    %175 = vmatprep.subr.mxu0 0.0
    %176 = vmatpush1.msra.mxu0 0.0
    %177 = vmatprep.subr.mxu0 0.0
    %178 = vmatpush1.msra.mxu0 0.0
    %179 = vmatprep.subr.mxu0 0.0
    %180 = vmatpush1.msra.mxu0 0.0
    %181 = vmatprep.subr.mxu0 0.0
    %182 = vmatpush1.msra.mxu0 0.0
    %183 = vmatprep.subr.mxu0 0.0
    %184 = vmatpush1.msra.mxu0 0.0
    %185 = vmatprep.subr.mxu0 0.0
    %186 = vmatpush1.msra.mxu0 0.0
    %187 = vmatprep.subr.mxu0 0.0
    %188 = vmatpush1.msra.mxu0 0.0
    %189 = vmatprep.subr.mxu0 0.0
    %190 = vmatpush1.msra.mxu0 0.0
    %191 = vmatprep.subr.mxu0 0.0
    %192 = vmatpush1.msra.mxu0 0.0
    %193 = vmatprep.subr.mxu0 0.0
    %194 = vmatpush1.msra.mxu0 0.0
    %195 = vmatprep.subr.mxu0 0.0
    %196 = vmatpush1.msra.mxu0 0.0
    %197 = vmatprep.subr.mxu0 0.0
    %198 = vmatpush1.msra.mxu0 0.0
    %199 = vmatprep.subr.mxu0 0.0
    %200 = vmatpush1.msra.mxu0 0.0
    %201 = vmatprep.subr.mxu0 0.0
    %202 = vmatpush1.msra.mxu0 0.0
    %203 = vmatprep.subr.mxu0 0.0
    %204 = vmatpush1.msra.mxu0 0.0
    %205 = vmatprep.subr.mxu0 0.0
    %206 = vmatpush1.msra.mxu0 0.0
    %207 = vmatprep.subr.mxu0 0.0
    %208 = vmatpush1.msra.mxu0 0.0
    %209 = vmatprep.mubr.f32.mxu0 0.0
    %210 = vmatmul.mubr.f32.gmra.mrb[0].mxu0 %v140
    %v211 = vpop.f32.mrb[0].mxu0
    %v212 = vadd.f32 %v137, %v211
    %v213 = vpop.f32.mrb[0].mxu0
    %214 = vmatprep.mubr.f32.mxu0 0.0
    %215 = vmatmul.mubr.f32.gmra.mrb[0].mxu0 %v143
    %v216 = vpop.f32.mrb[0].mxu0
    %v217 = vadd.f32 %v137, %v216
    %v218 = vpop.f32.mrb[0].mxu0
    %219 = vdwg.mxu0
    %v220 = vld [vmem:[%s7] sm:$0xff]
    %v221 = vld [vmem:[%s7 + $0x8] sm:$0xff]
    %v222 = vld [vmem:[%s7 + $0x10] sm:$0xff]
    %v223 = vld [vmem:[%s7 + $0x18] sm:$0xff]
    %226 = vrot.lane.b32.xlu0 %v212, 96
    %v227 = vpop.permute.xlu0 %226
    %228 = vrot.lane.b32.xlu0 %v217, 96
    %v229 = vpop.permute.xlu0 %228
    %vm230 = vcmask 130048
    %v231 = vsel %vm230, %v212, 0
    %v233 = vsel %vm230, %v217, 0
    %v235 = vsel %vm230, %v227, 0
    %v237 = vsel %vm230, %v229, 0
    %239 = vmatprep.subr.mxu0 0.0
    %240 = vmatpush1.xpose.msra.mxu0 %v235
    %241 = vmatprep.subr.mxu0 0.0
    %242 = vmatpush1.xpose.msra.mxu0 %v237
    %243 = vmatprep.subr.mxu0 0.0
    %244 = vmatpush1.xpose.msra.mxu0 0.0
    %245 = vmatprep.subr.mxu0 0.0
    %246 = vmatpush1.xpose.msra.mxu0 0.0
    %247 = vmatprep.subr.mxu0 0.0
    %248 = vmatpush1.xpose.msra.mxu0 0.0
    %249 = vmatprep.subr.mxu0 0.0
    %250 = vmatpush1.xpose.msra.mxu0 0.0
    %251 = vmatprep.subr.mxu0 0.0
    %252 = vmatpush1.xpose.msra.mxu0 0.0
    %253 = vmatprep.subr.mxu0 0.0
    %254 = vmatpush1.xpose.msra.mxu0 0.0
    %255 = vmatprep.subr.mxu0 0.0
    %256 = vmatpush1.xpose.msra.mxu0 0.0
    %257 = vmatprep.subr.mxu0 0.0
    %258 = vmatpush1.xpose.msra.mxu0 0.0
    %259 = vmatprep.subr.mxu0 0.0
    %260 = vmatpush1.xpose.msra.mxu0 0.0
    %261 = vmatprep.subr.mxu0 0.0
    %262 = vmatpush1.xpose.msra.mxu0 0.0
    %263 = vmatprep.subr.mxu0 0.0
    %264 = vmatpush1.xpose.msra.mxu0 0.0
    %265 = vmatprep.subr.mxu0 0.0
    %266 = vmatpush1.xpose.msra.mxu0 0.0
    %267 = vmatprep.subr.mxu0 0.0
    %268 = vmatpush1.xpose.msra.mxu0 0.0
    %269 = vmatprep.subr.mxu0 0.0
    %270 = vmatpush1.xpose.msra.mxu0 0.0
    %271 = vmatprep.subr.mxu0 0.0
    %272 = vmatpush1.xpose.msra.mxu0 0.0
    %273 = vmatprep.subr.mxu0 0.0
    %274 = vmatpush1.xpose.msra.mxu0 0.0
    %275 = vmatprep.subr.mxu0 0.0
    %276 = vmatpush1.xpose.msra.mxu0 0.0
    %277 = vmatprep.subr.mxu0 0.0
    %278 = vmatpush1.xpose.msra.mxu0 0.0
    %279 = vmatprep.subr.mxu0 0.0
    %280 = vmatpush1.xpose.msra.mxu0 0.0
    %281 = vmatprep.subr.mxu0 0.0
    %282 = vmatpush1.xpose.msra.mxu0 0.0
    %283 = vmatprep.subr.mxu0 0.0
    %284 = vmatpush1.xpose.msra.mxu0 0.0
    %285 = vmatprep.subr.mxu0 0.0
    %286 = vmatpush1.xpose.msra.mxu0 0.0
    %287 = vmatprep.subr.mxu0 0.0
    %288 = vmatpush1.xpose.msra.mxu0 0.0
    %289 = vmatprep.subr.mxu0 0.0
    %290 = vmatpush1.xpose.msra.mxu0 0.0
    %291 = vmatprep.subr.mxu0 0.0
    %292 = vmatpush1.xpose.msra.mxu0 0.0
    %293 = vmatprep.subr.mxu0 0.0
    %294 = vmatpush1.xpose.msra.mxu0 0.0
    %295 = vmatprep.subr.mxu0 0.0
    %296 = vmatpush1.xpose.msra.mxu0 0.0
    %297 = vmatprep.subr.mxu0 0.0
    %298 = vmatpush1.xpose.msra.mxu0 0.0
    %299 = vmatprep.subr.mxu0 0.0
    %300 = vmatpush1.xpose.msra.mxu0 0.0
    %301 = vmatprep.subr.mxu0 0.0
    %302 = vmatpush1.xpose.msra.mxu0 0.0
    %303 = vmatprep.mubr.f32.mxu0 0.0
    %304 = vmatmul.mubr.f32.gmra.mrb[0].mxu0 %v231
    %v305 = vpop.f32.mrb[0].mxu0
    %v306 = vadd.f32 0.0, %v305
    %v307 = vpop.f32.mrb[0].mxu0
    %308 = vmatprep.mubr.f32.mxu0 0.0
    %309 = vmatmul.mubr.f32.gmra.mrb[0].mxu0 %v233
    %v310 = vpop.f32.mrb[0].mxu0
    %v311 = vadd.f32 0.0, %v310
    %v312 = vpop.f32.mrb[0].mxu0
    %313 = vdwg.mxu0
    %v314 = vmul.f32 %v306, 0.25
    %v315 = vmul.f32 %v311, 0.25
    %v316 = vadd.f32 %v314, %v78
    %v317 = vadd.f32 %v315, %v79
    %v318 = vsel %vm230, %v316, -inf
    %319 = vmax.xlane.f32.xlu0 %v318
    %v320 = vpop.xlane.xlu0 %319
    %v321 = vsel %vm230, %v317, -inf
    %322 = vmax.xlane.f32.xlu0 %v321
    %v323 = vpop.xlane.xlu0 %322
    %v324 = vsub.f32 %v316, %v320
    %v325 = vsub.f32 %v317, %v323
    %v326 = vmul.f32 %v324, 1.442695
    %v327 = vpow.pop %v326
    %v328 = vmul.f32 %v325, 1.442695
    %v329 = vpow.pop %v328
    %v330 = vsel %vm230, %v327, 0.0
    %331 = vadd.xlane.f32.xlu0 %v330
    %v332 = vpop.xlane.xlu0 %331
    %v333 = vsel %vm230, %v329, 0.0
    %334 = vadd.xlane.f32.xlu0 %v333
    %v335 = vpop.xlane.xlu0 %334
    %v336 = vrcp.pop %v332
    %v337 = vmul.f32 %v327, %v336
    %v338 = vrcp.pop %v335
    %v339 = vmul.f32 %v329, %v338
    %340 = vrot.lane.b32.xlu0 %v212, 64
    %v341 = vpop.permute.xlu0 %340
    %342 = vrot.lane.b32.xlu0 %v217, 64
    %v343 = vpop.permute.xlu0 %342
    %v347 = vsel %vm230, %v337, 0
    %v350 = vsel %vm230, %v339, 0
    %352 = vmatprep.subr.mxu0 0.0
    %353 = vmatpush1.msra.mxu0 %v341
    %354 = vmatprep.subr.mxu0 0.0
    %355 = vmatpush1.msra.mxu0 %v343
    %356 = vmatprep.subr.mxu0 0.0
    %357 = vmatpush1.msra.mxu0 0.0
    %358 = vmatprep.subr.mxu0 0.0
    %359 = vmatpush1.msra.mxu0 0.0
    %360 = vmatprep.subr.mxu0 0.0
    %361 = vmatpush1.msra.mxu0 0.0
    %362 = vmatprep.subr.mxu0 0.0
    %363 = vmatpush1.msra.mxu0 0.0
    %364 = vmatprep.subr.mxu0 0.0
    %365 = vmatpush1.msra.mxu0 0.0
    %366 = vmatprep.subr.mxu0 0.0
    %367 = vmatpush1.msra.mxu0 0.0
    %368 = vmatprep.subr.mxu0 0.0
    %369 = vmatpush1.msra.mxu0 0.0
    %370 = vmatprep.subr.mxu0 0.0
    %371 = vmatpush1.msra.mxu0 0.0
    %372 = vmatprep.subr.mxu0 0.0
    %373 = vmatpush1.msra.mxu0 0.0
    %374 = vmatprep.subr.mxu0 0.0
    %375 = vmatpush1.msra.mxu0 0.0
    %376 = vmatprep.subr.mxu0 0.0
    %377 = vmatpush1.msra.mxu0 0.0
    %378 = vmatprep.subr.mxu0 0.0
    %379 = vmatpush1.msra.mxu0 0.0
    %380 = vmatprep.subr.mxu0 0.0
    %381 = vmatpush1.msra.mxu0 0.0
    %382 = vmatprep.subr.mxu0 0.0
    %383 = vmatpush1.msra.mxu0 0.0
    %384 = vmatprep.subr.mxu0 0.0
    %385 = vmatpush1.msra.mxu0 0.0
    %386 = vmatprep.subr.mxu0 0.0
    %387 = vmatpush1.msra.mxu0 0.0
    %388 = vmatprep.subr.mxu0 0.0
    %389 = vmatpush1.msra.mxu0 0.0
    %390 = vmatprep.subr.mxu0 0.0
    %391 = vmatpush1.msra.mxu0 0.0
    %392 = vmatprep.subr.mxu0 0.0
    %393 = vmatpush1.msra.mxu0 0.0
    %394 = vmatprep.subr.mxu0 0.0
    %395 = vmatpush1.msra.mxu0 0.0
    %396 = vmatprep.subr.mxu0 0.0
    %397 = vmatpush1.msra.mxu0 0.0
    %398 = vmatprep.subr.mxu0 0.0
    %399 = vmatpush1.msra.mxu0 0.0
    %400 = vmatprep.subr.mxu0 0.0
    %401 = vmatpush1.msra.mxu0 0.0
    %402 = vmatprep.subr.mxu0 0.0
    %403 = vmatpush1.msra.mxu0 0.0
    %404 = vmatprep.subr.mxu0 0.0
    %405 = vmatpush1.msra.mxu0 0.0
    %406 = vmatprep.subr.mxu0 0.0
    %407 = vmatpush1.msra.mxu0 0.0
    %408 = vmatprep.subr.mxu0 0.0
    %409 = vmatpush1.msra.mxu0 0.0
    %410 = vmatprep.subr.mxu0 0.0
    %411 = vmatpush1.msra.mxu0 0.0
    %412 = vmatprep.subr.mxu0 0.0
    %413 = vmatpush1.msra.mxu0 0.0
    %414 = vmatprep.subr.mxu0 0.0
    %415 = vmatpush1.msra.mxu0 0.0
    %416 = vmatprep.mubr.f32.mxu0 0.0
    %417 = vmatmul.mubr.f32.gmra.mrb[0].mxu0 %v347
    %v418 = vpop.f32.mrb[0].mxu0
    %v419 = vadd.f32 0.0, %v418
    %v420 = vpop.f32.mrb[0].mxu0
    %421 = vmatprep.mubr.f32.mxu0 0.0
    %422 = vmatmul.mubr.f32.gmra.mrb[0].mxu0 %v350
    %v423 = vpop.f32.mrb[0].mxu0
    %v424 = vadd.f32 0.0, %v423
    %v425 = vpop.f32.mrb[0].mxu0
    %426 = vdwg.mxu0
    %427 = vrot.lane.b32.xlu0 %v212, 112
    %v428 = vpop.permute.xlu0 %427
    %429 = vrot.lane.b32.xlu0 %v217, 112
    %v430 = vpop.permute.xlu0 %429
    %431 = vrot.lane.b32.xlu0 %v212, 80
    %v432 = vpop.permute.xlu0 %431
    %433 = vrot.lane.b32.xlu0 %v217, 80
    %v434 = vpop.permute.xlu0 %433
    %v435 = vsel %vm230, %v428, 0
    %v437 = vsel %vm230, %v430, 0
    %v439 = vsel %vm230, %v432, 0
    %v441 = vsel %vm230, %v434, 0
    %443 = vmatprep.subr.mxu0 0.0
    %444 = vmatpush1.xpose.msra.mxu0 %v439
    %445 = vmatprep.subr.mxu0 0.0
    %446 = vmatpush1.xpose.msra.mxu0 %v441
    %447 = vmatprep.subr.mxu0 0.0
    %448 = vmatpush1.xpose.msra.mxu0 0.0
    %449 = vmatprep.subr.mxu0 0.0
    %450 = vmatpush1.xpose.msra.mxu0 0.0
    %451 = vmatprep.subr.mxu0 0.0
    %452 = vmatpush1.xpose.msra.mxu0 0.0
    %453 = vmatprep.subr.mxu0 0.0
    %454 = vmatpush1.xpose.msra.mxu0 0.0
    %455 = vmatprep.subr.mxu0 0.0
    %456 = vmatpush1.xpose.msra.mxu0 0.0
    %457 = vmatprep.subr.mxu0 0.0
    %458 = vmatpush1.xpose.msra.mxu0 0.0
    %459 = vmatprep.subr.mxu0 0.0
    %460 = vmatpush1.xpose.msra.mxu0 0.0
    %461 = vmatprep.subr.mxu0 0.0
    %462 = vmatpush1.xpose.msra.mxu0 0.0
    %463 = vmatprep.subr.mxu0 0.0
    %464 = vmatpush1.xpose.msra.mxu0 0.0
    %465 = vmatprep.subr.mxu0 0.0
    %466 = vmatpush1.xpose.msra.mxu0 0.0
    %467 = vmatprep.subr.mxu0 0.0
    %468 = vmatpush1.xpose.msra.mxu0 0.0
    %469 = vmatprep.subr.mxu0 0.0
    %470 = vmatpush1.xpose.msra.mxu0 0.0
    %471 = vmatprep.subr.mxu0 0.0
    %472 = vmatpush1.xpose.msra.mxu0 0.0
    %473 = vmatprep.subr.mxu0 0.0
    %474 = vmatpush1.xpose.msra.mxu0 0.0
    %475 = vmatprep.subr.mxu0 0.0
    %476 = vmatpush1.xpose.msra.mxu0 0.0
    %477 = vmatprep.subr.mxu0 0.0
    %478 = vmatpush1.xpose.msra.mxu0 0.0
    %479 = vmatprep.subr.mxu0 0.0
    %480 = vmatpush1.xpose.msra.mxu0 0.0
    %481 = vmatprep.subr.mxu0 0.0
    %482 = vmatpush1.xpose.msra.mxu0 0.0
    %483 = vmatprep.subr.mxu0 0.0
    %484 = vmatpush1.xpose.msra.mxu0 0.0
    %485 = vmatprep.subr.mxu0 0.0
    %486 = vmatpush1.xpose.msra.mxu0 0.0
    %487 = vmatprep.subr.mxu0 0.0
    %488 = vmatpush1.xpose.msra.mxu0 0.0
    %489 = vmatprep.subr.mxu0 0.0
    %490 = vmatpush1.xpose.msra.mxu0 0.0
    %491 = vmatprep.subr.mxu0 0.0
    %492 = vmatpush1.xpose.msra.mxu0 0.0
    %493 = vmatprep.subr.mxu0 0.0
    %494 = vmatpush1.xpose.msra.mxu0 0.0
    %495 = vmatprep.subr.mxu0 0.0
    %496 = vmatpush1.xpose.msra.mxu0 0.0
    %497 = vmatprep.subr.mxu0 0.0
    %498 = vmatpush1.xpose.msra.mxu0 0.0
    %499 = vmatprep.subr.mxu0 0.0
    %500 = vmatpush1.xpose.msra.mxu0 0.0
    %501 = vmatprep.subr.mxu0 0.0
    %502 = vmatpush1.xpose.msra.mxu0 0.0
    %503 = vmatprep.subr.mxu0 0.0
    %504 = vmatpush1.xpose.msra.mxu0 0.0
    %505 = vmatprep.subr.mxu0 0.0
    %506 = vmatpush1.xpose.msra.mxu0 0.0
    %507 = vmatprep.mubr.f32.mxu0 0.0
    %508 = vmatmul.mubr.f32.gmra.mrb[0].mxu0 %v435
    %v509 = vpop.f32.mrb[0].mxu0
    %v510 = vadd.f32 0.0, %v509
    %v511 = vpop.f32.mrb[0].mxu0
    %512 = vmatprep.mubr.f32.mxu0 0.0
    %513 = vmatmul.mubr.f32.gmra.mrb[0].mxu0 %v437
    %v514 = vpop.f32.mrb[0].mxu0
    %v515 = vadd.f32 0.0, %v514
    %v516 = vpop.f32.mrb[0].mxu0
    %517 = vdwg.mxu0
    %v518 = vmul.f32 %v510, 0.25
    %v519 = vmul.f32 %v515, 0.25
    %v520 = vadd.f32 %v518, %v78
    %v521 = vadd.f32 %v519, %v79
    %v522 = vsel %vm230, %v520, -inf
    %523 = vmax.xlane.f32.xlu0 %v522
    %v524 = vpop.xlane.xlu0 %523
    %v525 = vsel %vm230, %v521, -inf
    %526 = vmax.xlane.f32.xlu0 %v525
    %v527 = vpop.xlane.xlu0 %526
    %v528 = vsub.f32 %v520, %v524
    %v529 = vsub.f32 %v521, %v527
    %v530 = vmul.f32 %v528, 1.442695
    %v531 = vpow.pop %v530
    %v532 = vmul.f32 %v529, 1.442695
    %v533 = vpow.pop %v532
    %v534 = vsel %vm230, %v531, 0.0
    %535 = vadd.xlane.f32.xlu0 %v534
    %v536 = vpop.xlane.xlu0 %535
    %v537 = vsel %vm230, %v533, 0.0
    %538 = vadd.xlane.f32.xlu0 %v537
    %v539 = vpop.xlane.xlu0 %538
    %v540 = vrcp.pop %v536
    %v541 = vmul.f32 %v531, %v540
    %v542 = vrcp.pop %v539
    %v543 = vmul.f32 %v533, %v542
    %544 = vrot.lane.b32.xlu0 %v212, 48
    %v545 = vpop.permute.xlu0 %544
    %546 = vrot.lane.b32.xlu0 %v217, 48
    %v547 = vpop.permute.xlu0 %546
    %v551 = vsel %vm230, %v541, 0
    %v554 = vsel %vm230, %v543, 0
    %556 = vmatprep.subr.mxu0 0.0
    %557 = vmatpush1.msra.mxu0 %v545
    %558 = vmatprep.subr.mxu0 0.0
    %559 = vmatpush1.msra.mxu0 %v547
    %560 = vmatprep.subr.mxu0 0.0
    %561 = vmatpush1.msra.mxu0 0.0
    %562 = vmatprep.subr.mxu0 0.0
    %563 = vmatpush1.msra.mxu0 0.0
    %564 = vmatprep.subr.mxu0 0.0
    %565 = vmatpush1.msra.mxu0 0.0
    %566 = vmatprep.subr.mxu0 0.0
    %567 = vmatpush1.msra.mxu0 0.0
    %568 = vmatprep.subr.mxu0 0.0
    %569 = vmatpush1.msra.mxu0 0.0
    %570 = vmatprep.subr.mxu0 0.0
    %571 = vmatpush1.msra.mxu0 0.0
    %572 = vmatprep.subr.mxu0 0.0
    %573 = vmatpush1.msra.mxu0 0.0
    %574 = vmatprep.subr.mxu0 0.0
    %575 = vmatpush1.msra.mxu0 0.0
    %576 = vmatprep.subr.mxu0 0.0
    %577 = vmatpush1.msra.mxu0 0.0
    %578 = vmatprep.subr.mxu0 0.0
    %579 = vmatpush1.msra.mxu0 0.0
    %580 = vmatprep.subr.mxu0 0.0
    %581 = vmatpush1.msra.mxu0 0.0
    %582 = vmatprep.subr.mxu0 0.0
    %583 = vmatpush1.msra.mxu0 0.0
    %584 = vmatprep.subr.mxu0 0.0
    %585 = vmatpush1.msra.mxu0 0.0
    %586 = vmatprep.subr.mxu0 0.0
    %587 = vmatpush1.msra.mxu0 0.0
    %588 = vmatprep.subr.mxu0 0.0
    %589 = vmatpush1.msra.mxu0 0.0
    %590 = vmatprep.subr.mxu0 0.0
    %591 = vmatpush1.msra.mxu0 0.0
    %592 = vmatprep.subr.mxu0 0.0
    %593 = vmatpush1.msra.mxu0 0.0
    %594 = vmatprep.subr.mxu0 0.0
    %595 = vmatpush1.msra.mxu0 0.0
    %596 = vmatprep.subr.mxu0 0.0
    %597 = vmatpush1.msra.mxu0 0.0
    %598 = vmatprep.subr.mxu0 0.0
    %599 = vmatpush1.msra.mxu0 0.0
    %600 = vmatprep.subr.mxu0 0.0
    %601 = vmatpush1.msra.mxu0 0.0
    %602 = vmatprep.subr.mxu0 0.0
    %603 = vmatpush1.msra.mxu0 0.0
    %604 = vmatprep.subr.mxu0 0.0
    %605 = vmatpush1.msra.mxu0 0.0
    %606 = vmatprep.subr.mxu0 0.0
    %607 = vmatpush1.msra.mxu0 0.0
    %608 = vmatprep.subr.mxu0 0.0
    %609 = vmatpush1.msra.mxu0 0.0
    %610 = vmatprep.subr.mxu0 0.0
    %611 = vmatpush1.msra.mxu0 0.0
    %612 = vmatprep.subr.mxu0 0.0
    %613 = vmatpush1.msra.mxu0 0.0
    %614 = vmatprep.subr.mxu0 0.0
    %615 = vmatpush1.msra.mxu0 0.0
    %616 = vmatprep.subr.mxu0 0.0
    %617 = vmatpush1.msra.mxu0 0.0
    %618 = vmatprep.subr.mxu0 0.0
    %619 = vmatpush1.msra.mxu0 0.0
    %620 = vmatprep.mubr.f32.mxu0 0.0
    %621 = vmatmul.mubr.f32.gmra.mrb[0].mxu0 %v551
    %v622 = vpop.f32.mrb[0].mxu0
    %v623 = vadd.f32 0.0, %v622
    %v624 = vpop.f32.mrb[0].mxu0
    %625 = vmatprep.mubr.f32.mxu0 0.0
    %626 = vmatmul.mubr.f32.gmra.mrb[0].mxu0 %v554
    %v627 = vpop.f32.mrb[0].mxu0
    %v628 = vadd.f32 0.0, %v627
    %v629 = vpop.f32.mrb[0].mxu0
    %630 = vdwg.mxu0
    %v632 = vsel %vm230, %v623, 0
    %v635 = vsel %vm230, %v628, 0
    %637 = vmatprep.subr.mxu0 0.0
    %638 = vmatpush1.msra.mxu0 %v222
    %639 = vmatprep.subr.mxu0 0.0
    %640 = vmatpush1.msra.mxu0 %v223
    %641 = vmatprep.subr.mxu0 0.0
    %642 = vmatpush1.msra.mxu0 0.0
    %643 = vmatprep.subr.mxu0 0.0
    %644 = vmatpush1.msra.mxu0 0.0
    %645 = vmatprep.subr.mxu0 0.0
    %646 = vmatpush1.msra.mxu0 0.0
    %647 = vmatprep.subr.mxu0 0.0
    %648 = vmatpush1.msra.mxu0 0.0
    %649 = vmatprep.subr.mxu0 0.0
    %650 = vmatpush1.msra.mxu0 0.0
    %651 = vmatprep.subr.mxu0 0.0
    %652 = vmatpush1.msra.mxu0 0.0
    %653 = vmatprep.subr.mxu0 0.0
    %654 = vmatpush1.msra.mxu0 0.0
    %655 = vmatprep.subr.mxu0 0.0
    %656 = vmatpush1.msra.mxu0 0.0
    %657 = vmatprep.subr.mxu0 0.0
    %658 = vmatpush1.msra.mxu0 0.0
    %659 = vmatprep.subr.mxu0 0.0
    %660 = vmatpush1.msra.mxu0 0.0
    %661 = vmatprep.subr.mxu0 0.0
    %662 = vmatpush1.msra.mxu0 0.0
    %663 = vmatprep.subr.mxu0 0.0
    %664 = vmatpush1.msra.mxu0 0.0
    %665 = vmatprep.subr.mxu0 0.0
    %666 = vmatpush1.msra.mxu0 0.0
    %667 = vmatprep.subr.mxu0 0.0
    %668 = vmatpush1.msra.mxu0 0.0
    %669 = vmatprep.subr.mxu0 0.0
    %670 = vmatpush1.msra.mxu0 0.0
    %671 = vmatprep.subr.mxu0 0.0
    %672 = vmatpush1.msra.mxu0 0.0
    %673 = vmatprep.subr.mxu0 0.0
    %674 = vmatpush1.msra.mxu0 0.0
    %675 = vmatprep.subr.mxu0 0.0
    %676 = vmatpush1.msra.mxu0 0.0
    %677 = vmatprep.subr.mxu0 0.0
    %678 = vmatpush1.msra.mxu0 0.0
    %679 = vmatprep.subr.mxu0 0.0
    %680 = vmatpush1.msra.mxu0 0.0
    %681 = vmatprep.subr.mxu0 0.0
    %682 = vmatpush1.msra.mxu0 0.0
    %683 = vmatprep.subr.mxu0 0.0
    %684 = vmatpush1.msra.mxu0 0.0
    %685 = vmatprep.subr.mxu0 0.0
    %686 = vmatpush1.msra.mxu0 0.0
    %687 = vmatprep.subr.mxu0 0.0
    %688 = vmatpush1.msra.mxu0 0.0
    %689 = vmatprep.subr.mxu0 0.0
    %690 = vmatpush1.msra.mxu0 0.0
    %691 = vmatprep.subr.mxu0 0.0
    %692 = vmatpush1.msra.mxu0 0.0
    %693 = vmatprep.subr.mxu0 0.0
    %694 = vmatpush1.msra.mxu0 0.0
    %695 = vmatprep.subr.mxu0 0.0
    %696 = vmatpush1.msra.mxu0 0.0
    %697 = vmatprep.subr.mxu0 0.0
    %698 = vmatpush1.msra.mxu0 0.0
    %699 = vmatprep.subr.mxu0 0.0
    %700 = vmatpush1.msra.mxu0 0.0
    %701 = vmatprep.mubr.f32.mxu0 0.0
    %702 = vmatmul.mubr.f32.gmra.mrb[0].mxu0 %v632
    %v703 = vpop.f32.mrb[0].mxu0
    %v704 = vadd.f32 0.0, %v703
    %v705 = vpop.f32.mrb[0].mxu0
    %706 = vmatprep.mubr.f32.mxu0 0.0
    %707 = vmatmul.mubr.f32.gmra.mrb[0].mxu0 %v635
    %v708 = vpop.f32.mrb[0].mxu0
    %v709 = vadd.f32 0.0, %v708
    %v710 = vpop.f32.mrb[0].mxu0
    %711 = vdwg.mxu0
    %v713 = vsel %vm230, %v419, 0
    %v716 = vsel %vm230, %v424, 0
    %718 = vmatprep.subr.mxu0 0.0
    %719 = vmatpush1.msra.mxu0 %v220
    %720 = vmatprep.subr.mxu0 0.0
    %721 = vmatpush1.msra.mxu0 %v221
    %722 = vmatprep.subr.mxu0 0.0
    %723 = vmatpush1.msra.mxu0 0.0
    %724 = vmatprep.subr.mxu0 0.0
    %725 = vmatpush1.msra.mxu0 0.0
    %726 = vmatprep.subr.mxu0 0.0
    %727 = vmatpush1.msra.mxu0 0.0
    %728 = vmatprep.subr.mxu0 0.0
    %729 = vmatpush1.msra.mxu0 0.0
    %730 = vmatprep.subr.mxu0 0.0
    %731 = vmatpush1.msra.mxu0 0.0
    %732 = vmatprep.subr.mxu0 0.0
    %733 = vmatpush1.msra.mxu0 0.0
    %734 = vmatprep.subr.mxu0 0.0
    %735 = vmatpush1.msra.mxu0 0.0
    %736 = vmatprep.subr.mxu0 0.0
    %737 = vmatpush1.msra.mxu0 0.0
    %738 = vmatprep.subr.mxu0 0.0
    %739 = vmatpush1.msra.mxu0 0.0
    %740 = vmatprep.subr.mxu0 0.0
    %741 = vmatpush1.msra.mxu0 0.0
    %742 = vmatprep.subr.mxu0 0.0
    %743 = vmatpush1.msra.mxu0 0.0
    %744 = vmatprep.subr.mxu0 0.0
    %745 = vmatpush1.msra.mxu0 0.0
    %746 = vmatprep.subr.mxu0 0.0
    %747 = vmatpush1.msra.mxu0 0.0
    %748 = vmatprep.subr.mxu0 0.0
    %749 = vmatpush1.msra.mxu0 0.0
    %750 = vmatprep.subr.mxu0 0.0
    %751 = vmatpush1.msra.mxu0 0.0
    %752 = vmatprep.subr.mxu0 0.0
    %753 = vmatpush1.msra.mxu0 0.0
    %754 = vmatprep.subr.mxu0 0.0
    %755 = vmatpush1.msra.mxu0 0.0
    %756 = vmatprep.subr.mxu0 0.0
    %757 = vmatpush1.msra.mxu0 0.0
    %758 = vmatprep.subr.mxu0 0.0
    %759 = vmatpush1.msra.mxu0 0.0
    %760 = vmatprep.subr.mxu0 0.0
    %761 = vmatpush1.msra.mxu0 0.0
    %762 = vmatprep.subr.mxu0 0.0
    %763 = vmatpush1.msra.mxu0 0.0
    %764 = vmatprep.subr.mxu0 0.0
    %765 = vmatpush1.msra.mxu0 0.0
    %766 = vmatprep.subr.mxu0 0.0
    %767 = vmatpush1.msra.mxu0 0.0
    %768 = vmatprep.subr.mxu0 0.0
    %769 = vmatpush1.msra.mxu0 0.0
    %770 = vmatprep.subr.mxu0 0.0
    %771 = vmatpush1.msra.mxu0 0.0
    %772 = vmatprep.subr.mxu0 0.0
    %773 = vmatpush1.msra.mxu0 0.0
    %774 = vmatprep.subr.mxu0 0.0
    %775 = vmatpush1.msra.mxu0 0.0
    %776 = vmatprep.subr.mxu0 0.0
    %777 = vmatpush1.msra.mxu0 0.0
    %778 = vmatprep.subr.mxu0 0.0
    %779 = vmatpush1.msra.mxu0 0.0
    %780 = vmatprep.subr.mxu0 0.0
    %781 = vmatpush1.msra.mxu0 0.0
    %782 = vmatprep.mubr.f32.mxu0 0.0
    %783 = vmatmul.mubr.f32.gmra.mrb[0].mxu0 %v713
    %v784 = vpop.f32.mrb[0].mxu0
    %v785 = vadd.f32 %v704, %v784
    %v786 = vpop.f32.mrb[0].mxu0
    %787 = vmatprep.mubr.f32.mxu0 0.0
    %788 = vmatmul.mubr.f32.gmra.mrb[0].mxu0 %v716
    %v789 = vpop.f32.mrb[0].mxu0
    %v790 = vadd.f32 %v709, %v789
    %v791 = vpop.f32.mrb[0].mxu0
    %792 = vdwg.mxu0
    %v793 = vld [vmem:[%s8] sm:$0x1]
    %v795 = vlaneseq
    %v796 = vshrl.u32 %v795, 7
    %v797 = vsub.s32 0, %v796
    %v798 = vrot.slane %v793, %v797
    %v800 = vadd.f32 %v785, %v798
    %v801 = vadd.f32 %v790, %v798
    %v802 = vadd.f32 %v126, %v800
    %v803 = vadd.f32 %v127, %v801
    %v804 = vld [vmem:[%s9] sm:$0x1]
    %v805 = vld [vmem:[%s10] sm:$0x1]
    %v806 = vsel %vm84, %v802, 0.0
    %807 = vadd.xlane.f32.xlu0 %v806
    %v808 = vpop.xlane.xlu0 %807
    %v809 = vsel %vm84, %v803, 0.0
    %810 = vadd.xlane.f32.xlu0 %v809
    %v811 = vpop.xlane.xlu0 %810
    %v812 = vmul.f32 %v808, %v91
    %v813 = vmul.f32 %v811, %v91
    %v814 = vsub.f32 %v802, %v812
    %v815 = vsub.f32 %v803, %v813
    %v816 = vmul.f32 %v814, %v814
    %v817 = vmul.f32 %v815, %v815
    %v818 = vsel %vm84, %v816, 0.0
    %819 = vadd.xlane.f32.xlu0 %v818
    %v820 = vpop.xlane.xlu0 %819
    %v821 = vsel %vm84, %v817, 0.0
    %822 = vadd.xlane.f32.xlu0 %v821
    %v823 = vpop.xlane.xlu0 %822
    %v824 = vmul.f32 %v820, %v91
    %v825 = vmul.f32 %v823, %v91
    %v826 = vadd.f32 %v824, 1e-12
    %v827 = vadd.f32 %v825, 1e-12
    %v828 = vrsqrt.pop %v826
    %v829 = vrsqrt.pop %v827
    %v830 = vmul.f32 %v814, %v828
    %v831 = vmul.f32 %v815, %v829
    %v833 = vlaneseq
    %v834 = vshrl.u32 %v833, 7
    %v835 = vsub.s32 0, %v834
    %v836 = vrot.slane %v804, %v835
    %v838 = vmul.f32 %v830, %v836
    %v839 = vmul.f32 %v831, %v836
    %v841 = vlaneseq
    %v842 = vshrl.u32 %v841, 7
    %v843 = vsub.s32 0, %v842
    %v844 = vrot.slane %v805, %v843
    %v846 = vadd.f32 %v838, %v844
    %v847 = vadd.f32 %v839, %v844
    %v848 = vld [vmem:[%s11] sm:$0xff]
    %v849 = vld [vmem:[%s11 + $0x8] sm:$0xff]
    %v850 = vld [vmem:[%s11 + $0x10] sm:$0xff]
    %v851 = vld [vmem:[%s11 + $0x18] sm:$0xff]
    %v852 = vld [vmem:[%s12] sm:$0x1]
    %v854 = vlaneseq
    %v855 = vshrl.u32 %v854, 7
    %v856 = vsub.s32 0, %v855
    %v857 = vrot.slane %v852, %v856
    %v860 = vsel %vm84, %v846, 0
    %v863 = vsel %vm84, %v847, 0
    %865 = vmatprep.subr.mxu0 0.0
    %866 = vmatpush1.msra.mxu0 %v848
    %867 = vmatprep.subr.mxu0 0.0
    %868 = vmatpush1.msra.mxu0 %v849
    %869 = vmatprep.subr.mxu0 0.0
    %870 = vmatpush1.msra.mxu0 %v850
    %871 = vmatprep.subr.mxu0 0.0
    %872 = vmatpush1.msra.mxu0 %v851
    %873 = vmatprep.subr.mxu0 0.0
    %874 = vmatpush1.msra.mxu0 0.0
    %875 = vmatprep.subr.mxu0 0.0
    %876 = vmatpush1.msra.mxu0 0.0
    %877 = vmatprep.subr.mxu0 0.0
    %878 = vmatpush1.msra.mxu0 0.0
    %879 = vmatprep.subr.mxu0 0.0
    %880 = vmatpush1.msra.mxu0 0.0
    %881 = vmatprep.subr.mxu0 0.0
    %882 = vmatpush1.msra.mxu0 0.0
    %883 = vmatprep.subr.mxu0 0.0
    %884 = vmatpush1.msra.mxu0 0.0
    %885 = vmatprep.subr.mxu0 0.0
    %886 = vmatpush1.msra.mxu0 0.0
    %887 = vmatprep.subr.mxu0 0.0
    %888 = vmatpush1.msra.mxu0 0.0
    %889 = vmatprep.subr.mxu0 0.0
    %890 = vmatpush1.msra.mxu0 0.0
    %891 = vmatprep.subr.mxu0 0.0
    %892 = vmatpush1.msra.mxu0 0.0
    %893 = vmatprep.subr.mxu0 0.0
    %894 = vmatpush1.msra.mxu0 0.0
    %895 = vmatprep.subr.mxu0 0.0
    %896 = vmatpush1.msra.mxu0 0.0
    %897 = vmatprep.subr.mxu0 0.0
    %898 = vmatpush1.msra.mxu0 0.0
    %899 = vmatprep.subr.mxu0 0.0
    %900 = vmatpush1.msra.mxu0 0.0
    %901 = vmatprep.subr.mxu0 0.0
    %902 = vmatpush1.msra.mxu0 0.0
    %903 = vmatprep.subr.mxu0 0.0
    %904 = vmatpush1.msra.mxu0 0.0
    %905 = vmatprep.subr.mxu0 0.0
    %906 = vmatpush1.msra.mxu0 0.0
    %907 = vmatprep.subr.mxu0 0.0
    %908 = vmatpush1.msra.mxu0 0.0
    %909 = vmatprep.subr.mxu0 0.0
    %910 = vmatpush1.msra.mxu0 0.0
    %911 = vmatprep.subr.mxu0 0.0
    %912 = vmatpush1.msra.mxu0 0.0
    %913 = vmatprep.subr.mxu0 0.0
    %914 = vmatpush1.msra.mxu0 0.0
    %915 = vmatprep.subr.mxu0 0.0
    %916 = vmatpush1.msra.mxu0 0.0
    %917 = vmatprep.subr.mxu0 0.0
    %918 = vmatpush1.msra.mxu0 0.0
    %919 = vmatprep.subr.mxu0 0.0
    %920 = vmatpush1.msra.mxu0 0.0
    %921 = vmatprep.subr.mxu0 0.0
    %922 = vmatpush1.msra.mxu0 0.0
    %923 = vmatprep.subr.mxu0 0.0
    %924 = vmatpush1.msra.mxu0 0.0
    %925 = vmatprep.subr.mxu0 0.0
    %926 = vmatpush1.msra.mxu0 0.0
    %927 = vmatprep.subr.mxu0 0.0
    %928 = vmatpush1.msra.mxu0 0.0
    %929 = vmatprep.mubr.f32.mxu0 0.0
    %930 = vmatmul.mubr.f32.gmra.mrb[0].mxu0 %v860
    %v931 = vpop.f32.mrb[0].mxu0
    %v932 = vadd.f32 %v857, %v931
    %v933 = vpop.f32.mrb[0].mxu0
    %934 = vmatprep.mubr.f32.mxu0 0.0
    %935 = vmatmul.mubr.f32.gmra.mrb[0].mxu0 %v863
    %v936 = vpop.f32.mrb[0].mxu0
    %v937 = vadd.f32 %v857, %v936
    %v938 = vpop.f32.mrb[0].mxu0
    %939 = vdwg.mxu0
    %v940 = vmul.f32 %v932, 0.5
    %v941 = vmul.f32 %v937, 0.5
    %v942 = vmul.f32 %v932, 0.70710677
    %v943 = vmul.f32 %v937, 0.70710677
    %v944 = verf.f32.pop %v942
    %v945 = verf.f32.pop %v943
    %v946 = vadd.f32 %v944, 1.0
    %v947 = vadd.f32 %v945, 1.0
    %v948 = vmul.f32 %v940, %v946
    %v949 = vmul.f32 %v941, %v947
    %v950 = vld [vmem:[%s13] sm:$0xff]
    %v951 = vld [vmem:[%s13 + $0x8] sm:$0xff]
    %v952 = vld [vmem:[%s13 + $0x10] sm:$0xff]
    %v953 = vld [vmem:[%s13 + $0x18] sm:$0xff]
    %v954 = vld [vmem:[%s13 + $0x20] sm:$0xff]
    %v955 = vld [vmem:[%s13 + $0x28] sm:$0xff]
    %v956 = vld [vmem:[%s13 + $0x30] sm:$0xff]
    %v957 = vld [vmem:[%s13 + $0x38] sm:$0xff]
    %v958 = vld [vmem:[%s14] sm:$0x1]
    %v960 = vlaneseq
    %v961 = vshrl.u32 %v960, 7
    %v962 = vsub.s32 0, %v961
    %v963 = vrot.slane %v958, %v962
    %vm965 = vcmask 523264
    %v967 = vsel %vm965, %v948, 0
    %v970 = vsel %vm965, %v949, 0
    %972 = vmatprep.subr.mxu0 0.0
    %973 = vmatpush1.msra.mxu0 %v950
    %974 = vmatprep.subr.mxu0 0.0
    %975 = vmatpush1.msra.mxu0 %v951
    %976 = vmatprep.subr.mxu0 0.0
    %977 = vmatpush1.msra.mxu0 %v952
    %978 = vmatprep.subr.mxu0 0.0
    %979 = vmatpush1.msra.mxu0 %v953
    %980 = vmatprep.subr.mxu0 0.0
    %981 = vmatpush1.msra.mxu0 %v954
    %982 = vmatprep.subr.mxu0 0.0
    %983 = vmatpush1.msra.mxu0 %v955
    %984 = vmatprep.subr.mxu0 0.0
    %985 = vmatpush1.msra.mxu0 %v956
    %986 = vmatprep.subr.mxu0 0.0
    %987 = vmatpush1.msra.mxu0 %v957
    %988 = vmatprep.subr.mxu0 0.0
    %989 = vmatpush1.msra.mxu0 0.0
    %990 = vmatprep.subr.mxu0 0.0
    %991 = vmatpush1.msra.mxu0 0.0
    %992 = vmatprep.subr.mxu0 0.0
    %993 = vmatpush1.msra.mxu0 0.0
    %994 = vmatprep.subr.mxu0 0.0
    %995 = vmatpush1.msra.mxu0 0.0
    %996 = vmatprep.subr.mxu0 0.0
    %997 = vmatpush1.msra.mxu0 0.0
    %998 = vmatprep.subr.mxu0 0.0
    %999 = vmatpush1.msra.mxu0 0.0
    %1000 = vmatprep.subr.mxu0 0.0
    %1001 = vmatpush1.msra.mxu0 0.0
    %1002 = vmatprep.subr.mxu0 0.0
    %1003 = vmatpush1.msra.mxu0 0.0
    %1004 = vmatprep.subr.mxu0 0.0
    %1005 = vmatpush1.msra.mxu0 0.0
    %1006 = vmatprep.subr.mxu0 0.0
    %1007 = vmatpush1.msra.mxu0 0.0
    %1008 = vmatprep.subr.mxu0 0.0
    %1009 = vmatpush1.msra.mxu0 0.0
    %1010 = vmatprep.subr.mxu0 0.0
    %1011 = vmatpush1.msra.mxu0 0.0
    %1012 = vmatprep.subr.mxu0 0.0
    %1013 = vmatpush1.msra.mxu0 0.0
    %1014 = vmatprep.subr.mxu0 0.0
    %1015 = vmatpush1.msra.mxu0 0.0
    %1016 = vmatprep.subr.mxu0 0.0
    %1017 = vmatpush1.msra.mxu0 0.0
    %1018 = vmatprep.subr.mxu0 0.0
    %1019 = vmatpush1.msra.mxu0 0.0
    %1020 = vmatprep.subr.mxu0 0.0
    %1021 = vmatpush1.msra.mxu0 0.0
    %1022 = vmatprep.subr.mxu0 0.0
    %1023 = vmatpush1.msra.mxu0 0.0
    %1024 = vmatprep.subr.mxu0 0.0
    %1025 = vmatpush1.msra.mxu0 0.0
    %1026 = vmatprep.subr.mxu0 0.0
    %1027 = vmatpush1.msra.mxu0 0.0
    %1028 = vmatprep.subr.mxu0 0.0
    %1029 = vmatpush1.msra.mxu0 0.0
    %1030 = vmatprep.subr.mxu0 0.0
    %1031 = vmatpush1.msra.mxu0 0.0
    %1032 = vmatprep.subr.mxu0 0.0
    %1033 = vmatpush1.msra.mxu0 0.0
    %1034 = vmatprep.subr.mxu0 0.0
    %1035 = vmatpush1.msra.mxu0 0.0
    %1036 = vmatprep.mubr.f32.mxu0 0.0
    %1037 = vmatmul.mubr.f32.gmra.mrb[0].mxu0 %v967
    %v1038 = vpop.f32.mrb[0].mxu0
    %v1039 = vadd.f32 %v963, %v1038
    %v1040 = vpop.f32.mrb[0].mxu0
    %1041 = vmatprep.mubr.f32.mxu0 0.0
    %1042 = vmatmul.mubr.f32.gmra.mrb[0].mxu0 %v970
    %v1043 = vpop.f32.mrb[0].mxu0
    %v1044 = vadd.f32 %v963, %v1043
    %v1045 = vpop.f32.mrb[0].mxu0
    %1046 = vdwg.mxu0
    %v1047 = vadd.f32 %v846, %v1039
    %v1048 = vadd.f32 %v847, %v1044
    %v1049 = vld [vmem:[%s15] sm:$0x1]
    %v1050 = vld [vmem:[%s16] sm:$0x1]
    %v1051 = vsel %vm84, %v1047, 0.0
    %1052 = vadd.xlane.f32.xlu0 %v1051
    %v1053 = vpop.xlane.xlu0 %1052
    %v1054 = vsel %vm84, %v1048, 0.0
    %1055 = vadd.xlane.f32.xlu0 %v1054
    %v1056 = vpop.xlane.xlu0 %1055
    %v1057 = vmul.f32 %v1053, %v91
    %v1058 = vmul.f32 %v1056, %v91
    %v1059 = vsub.f32 %v1047, %v1057
    %v1060 = vsub.f32 %v1048, %v1058
    %v1061 = vmul.f32 %v1059, %v1059
    %v1062 = vmul.f32 %v1060, %v1060
    %v1063 = vsel %vm84, %v1061, 0.0
    %1064 = vadd.xlane.f32.xlu0 %v1063
    %v1065 = vpop.xlane.xlu0 %1064
    %v1066 = vsel %vm84, %v1062, 0.0
    %1067 = vadd.xlane.f32.xlu0 %v1066
    %v1068 = vpop.xlane.xlu0 %1067
    %v1069 = vmul.f32 %v1065, %v91
    %v1070 = vmul.f32 %v1068, %v91
    %v1071 = vadd.f32 %v1069, 1e-12
    %v1072 = vadd.f32 %v1070, 1e-12
    %v1073 = vrsqrt.pop %v1071
    %v1074 = vrsqrt.pop %v1072
    %v1075 = vmul.f32 %v1059, %v1073
    %v1076 = vmul.f32 %v1060, %v1074
    %v1078 = vlaneseq
    %v1079 = vshrl.u32 %v1078, 7
    %v1080 = vsub.s32 0, %v1079
    %v1081 = vrot.slane %v1049, %v1080
    %v1083 = vmul.f32 %v1075, %v1081
    %v1084 = vmul.f32 %v1076, %v1081
    %v1086 = vlaneseq
    %v1087 = vshrl.u32 %v1086, 7
    %v1088 = vsub.s32 0, %v1087
    %v1089 = vrot.slane %v1050, %v1088
    %v1091 = vadd.f32 %v1083, %v1089
    %v1092 = vadd.f32 %v1084, %v1089
    %s1093 = scalar_lea.vmem %s5, 32
    %v1094 = vld [vmem:[%s1093] sm:$0xff]
    %v1095 = vld [vmem:[%s1093 + $0x8] sm:$0xff]
    %v1096 = vld [vmem:[%s1093 + $0x10] sm:$0xff]
    %v1097 = vld [vmem:[%s1093 + $0x18] sm:$0xff]
    %s1098 = scalar_lea.vmem %s6, 1
    %v1099 = vld [vmem:[%s1098] sm:$0x1]
    %v1101 = vlaneseq
    %v1102 = vshrl.u32 %v1101, 7
    %v1103 = vsub.s32 0, %v1102
    %v1104 = vrot.slane %v1099, %v1103
    %v1107 = vsel %vm84, %v1091, 0
    %v1110 = vsel %vm84, %v1092, 0
    %1112 = vmatprep.subr.mxu0 0.0
    %1113 = vmatpush1.msra.mxu0 %v1094
    %1114 = vmatprep.subr.mxu0 0.0
    %1115 = vmatpush1.msra.mxu0 %v1095
    %1116 = vmatprep.subr.mxu0 0.0
    %1117 = vmatpush1.msra.mxu0 %v1096
    %1118 = vmatprep.subr.mxu0 0.0
    %1119 = vmatpush1.msra.mxu0 %v1097
    %1120 = vmatprep.subr.mxu0 0.0
    %1121 = vmatpush1.msra.mxu0 0.0
    %1122 = vmatprep.subr.mxu0 0.0
    %1123 = vmatpush1.msra.mxu0 0.0
    %1124 = vmatprep.subr.mxu0 0.0
    %1125 = vmatpush1.msra.mxu0 0.0
    %1126 = vmatprep.subr.mxu0 0.0
    %1127 = vmatpush1.msra.mxu0 0.0
    %1128 = vmatprep.subr.mxu0 0.0
    %1129 = vmatpush1.msra.mxu0 0.0
    %1130 = vmatprep.subr.mxu0 0.0
    %1131 = vmatpush1.msra.mxu0 0.0
    %1132 = vmatprep.subr.mxu0 0.0
    %1133 = vmatpush1.msra.mxu0 0.0
    %1134 = vmatprep.subr.mxu0 0.0
    %1135 = vmatpush1.msra.mxu0 0.0
    %1136 = vmatprep.subr.mxu0 0.0
    %1137 = vmatpush1.msra.mxu0 0.0
    %1138 = vmatprep.subr.mxu0 0.0
    %1139 = vmatpush1.msra.mxu0 0.0
    %1140 = vmatprep.subr.mxu0 0.0
    %1141 = vmatpush1.msra.mxu0 0.0
    %1142 = vmatprep.subr.mxu0 0.0
    %1143 = vmatpush1.msra.mxu0 0.0
    %1144 = vmatprep.subr.mxu0 0.0
    %1145 = vmatpush1.msra.mxu0 0.0
    %1146 = vmatprep.subr.mxu0 0.0
    %1147 = vmatpush1.msra.mxu0 0.0
    %1148 = vmatprep.subr.mxu0 0.0
    %1149 = vmatpush1.msra.mxu0 0.0
    %1150 = vmatprep.subr.mxu0 0.0
    %1151 = vmatpush1.msra.mxu0 0.0
    %1152 = vmatprep.subr.mxu0 0.0
    %1153 = vmatpush1.msra.mxu0 0.0
    %1154 = vmatprep.subr.mxu0 0.0
    %1155 = vmatpush1.msra.mxu0 0.0
    %1156 = vmatprep.subr.mxu0 0.0
    %1157 = vmatpush1.msra.mxu0 0.0
    %1158 = vmatprep.subr.mxu0 0.0
    %1159 = vmatpush1.msra.mxu0 0.0
    %1160 = vmatprep.subr.mxu0 0.0
    %1161 = vmatpush1.msra.mxu0 0.0
    %1162 = vmatprep.subr.mxu0 0.0
    %1163 = vmatpush1.msra.mxu0 0.0
    %1164 = vmatprep.subr.mxu0 0.0
    %1165 = vmatpush1.msra.mxu0 0.0
    %1166 = vmatprep.subr.mxu0 0.0
    %1167 = vmatpush1.msra.mxu0 0.0
    %1168 = vmatprep.subr.mxu0 0.0
    %1169 = vmatpush1.msra.mxu0 0.0
    %1170 = vmatprep.subr.mxu0 0.0
    %1171 = vmatpush1.msra.mxu0 0.0
    %1172 = vmatprep.subr.mxu0 0.0
    %1173 = vmatpush1.msra.mxu0 0.0
    %1174 = vmatprep.subr.mxu0 0.0
    %1175 = vmatpush1.msra.mxu0 0.0
    %1176 = vmatprep.mubr.f32.mxu0 0.0
    %1177 = vmatmul.mubr.f32.gmra.mrb[0].mxu0 %v1107
    %v1178 = vpop.f32.mrb[0].mxu0
    %v1179 = vadd.f32 %v1104, %v1178
    %v1180 = vpop.f32.mrb[0].mxu0
    %1181 = vmatprep.mubr.f32.mxu0 0.0
    %1182 = vmatmul.mubr.f32.gmra.mrb[0].mxu0 %v1110
    %v1183 = vpop.f32.mrb[0].mxu0
    %v1184 = vadd.f32 %v1104, %v1183
    %v1185 = vpop.f32.mrb[0].mxu0
    %1186 = vdwg.mxu0
    %s1187 = scalar_lea.vmem %s7, 32
    %v1188 = vld [vmem:[%s1187] sm:$0xff]
    %v1189 = vld [vmem:[%s1187 + $0x8] sm:$0xff]
    %v1190 = vld [vmem:[%s1187 + $0x10] sm:$0xff]
    %v1191 = vld [vmem:[%s1187 + $0x18] sm:$0xff]
    %1194 = vrot.lane.b32.xlu0 %v1179, 96
    %v1195 = vpop.permute.xlu0 %1194
    %1196 = vrot.lane.b32.xlu0 %v1184, 96
    %v1197 = vpop.permute.xlu0 %1196
    %v1198 = vsel %vm230, %v1179, 0
    %v1200 = vsel %vm230, %v1184, 0
    %v1202 = vsel %vm230, %v1195, 0
    %v1204 = vsel %vm230, %v1197, 0
    %1206 = vmatprep.subr.mxu0 0.0
    %1207 = vmatpush1.xpose.msra.mxu0 %v1202
    %1208 = vmatprep.subr.mxu0 0.0
    %1209 = vmatpush1.xpose.msra.mxu0 %v1204
    %1210 = vmatprep.subr.mxu0 0.0
    %1211 = vmatpush1.xpose.msra.mxu0 0.0
    %1212 = vmatprep.subr.mxu0 0.0
    %1213 = vmatpush1.xpose.msra.mxu0 0.0
    %1214 = vmatprep.subr.mxu0 0.0
    %1215 = vmatpush1.xpose.msra.mxu0 0.0
    %1216 = vmatprep.subr.mxu0 0.0
    %1217 = vmatpush1.xpose.msra.mxu0 0.0
    %1218 = vmatprep.subr.mxu0 0.0
    %1219 = vmatpush1.xpose.msra.mxu0 0.0
    %1220 = vmatprep.subr.mxu0 0.0
    %1221 = vmatpush1.xpose.msra.mxu0 0.0
    %1222 = vmatprep.subr.mxu0 0.0
    %1223 = vmatpush1.xpose.msra.mxu0 0.0
    %1224 = vmatprep.subr.mxu0 0.0
    %1225 = vmatpush1.xpose.msra.mxu0 0.0
    %1226 = vmatprep.subr.mxu0 0.0
    %1227 = vmatpush1.xpose.msra.mxu0 0.0
    %1228 = vmatprep.subr.mxu0 0.0
    %1229 = vmatpush1.xpose.msra.mxu0 0.0
    %1230 = vmatprep.subr.mxu0 0.0
    %1231 = vmatpush1.xpose.msra.mxu0 0.0
    %1232 = vmatprep.subr.mxu0 0.0
    %1233 = vmatpush1.xpose.msra.mxu0 0.0
    %1234 = vmatprep.subr.mxu0 0.0
    %1235 = vmatpush1.xpose.msra.mxu0 0.0
    %1236 = vmatprep.subr.mxu0 0.0
    %1237 = vmatpush1.xpose.msra.mxu0 0.0
    %1238 = vmatprep.subr.mxu0 0.0
    %1239 = vmatpush1.xpose.msra.mxu0 0.0
    %1240 = vmatprep.subr.mxu0 0.0
    %1241 = vmatpush1.xpose.msra.mxu0 0.0
    %1242 = vmatprep.subr.mxu0 0.0
    %1243 = vmatpush1.xpose.msra.mxu0 0.0
    %1244 = vmatprep.subr.mxu0 0.0
    %1245 = vmatpush1.xpose.msra.mxu0 0.0
    %1246 = vmatprep.subr.mxu0 0.0
    %1247 = vmatpush1.xpose.msra.mxu0 0.0
    %1248 = vmatprep.subr.mxu0 0.0
    %1249 = vmatpush1.xpose.msra.mxu0 0.0
    %1250 = vmatprep.subr.mxu0 0.0
    %1251 = vmatpush1.xpose.msra.mxu0 0.0
    %1252 = vmatprep.subr.mxu0 0.0
    %1253 = vmatpush1.xpose.msra.mxu0 0.0
    %1254 = vmatprep.subr.mxu0 0.0
    %1255 = vmatpush1.xpose.msra.mxu0 0.0
    %1256 = vmatprep.subr.mxu0 0.0
    %1257 = vmatpush1.xpose.msra.mxu0 0.0
    %1258 = vmatprep.subr.mxu0 0.0
    %1259 = vmatpush1.xpose.msra.mxu0 0.0
    %1260 = vmatprep.subr.mxu0 0.0
    %1261 = vmatpush1.xpose.msra.mxu0 0.0
    %1262 = vmatprep.subr.mxu0 0.0
    %1263 = vmatpush1.xpose.msra.mxu0 0.0
    %1264 = vmatprep.subr.mxu0 0.0
    %1265 = vmatpush1.xpose.msra.mxu0 0.0
    %1266 = vmatprep.subr.mxu0 0.0
    %1267 = vmatpush1.xpose.msra.mxu0 0.0
    %1268 = vmatprep.subr.mxu0 0.0
    %1269 = vmatpush1.xpose.msra.mxu0 0.0
    %1270 = vmatprep.mubr.f32.mxu0 0.0
    %1271 = vmatmul.mubr.f32.gmra.mrb[0].mxu0 %v1198
    %v1272 = vpop.f32.mrb[0].mxu0
    %v1273 = vadd.f32 0.0, %v1272
    %v1274 = vpop.f32.mrb[0].mxu0
    %1275 = vmatprep.mubr.f32.mxu0 0.0
    %1276 = vmatmul.mubr.f32.gmra.mrb[0].mxu0 %v1200
    %v1277 = vpop.f32.mrb[0].mxu0
    %v1278 = vadd.f32 0.0, %v1277
    %v1279 = vpop.f32.mrb[0].mxu0
    %1280 = vdwg.mxu0
    %v1281 = vmul.f32 %v1273, 0.25
    %v1282 = vmul.f32 %v1278, 0.25
    %v1283 = vadd.f32 %v1281, %v78
    %v1284 = vadd.f32 %v1282, %v79
    %v1285 = vsel %vm230, %v1283, -inf
    %1286 = vmax.xlane.f32.xlu0 %v1285
    %v1287 = vpop.xlane.xlu0 %1286
    %v1288 = vsel %vm230, %v1284, -inf
    %1289 = vmax.xlane.f32.xlu0 %v1288
    %v1290 = vpop.xlane.xlu0 %1289
    %v1291 = vsub.f32 %v1283, %v1287
    %v1292 = vsub.f32 %v1284, %v1290
    %v1293 = vmul.f32 %v1291, 1.442695
    %v1294 = vpow.pop %v1293
    %v1295 = vmul.f32 %v1292, 1.442695
    %v1296 = vpow.pop %v1295
    %v1297 = vsel %vm230, %v1294, 0.0
    %1298 = vadd.xlane.f32.xlu0 %v1297
    %v1299 = vpop.xlane.xlu0 %1298
    %v1300 = vsel %vm230, %v1296, 0.0
    %1301 = vadd.xlane.f32.xlu0 %v1300
    %v1302 = vpop.xlane.xlu0 %1301
    %v1303 = vrcp.pop %v1299
    %v1304 = vmul.f32 %v1294, %v1303
    %v1305 = vrcp.pop %v1302
    %v1306 = vmul.f32 %v1296, %v1305
    %1307 = vrot.lane.b32.xlu0 %v1179, 64
    %v1308 = vpop.permute.xlu0 %1307
    %1309 = vrot.lane.b32.xlu0 %v1184, 64
    %v1310 = vpop.permute.xlu0 %1309
    %v1314 = vsel %vm230, %v1304, 0
    %v1317 = vsel %vm230, %v1306, 0
    %1319 = vmatprep.subr.mxu0 0.0
    %1320 = vmatpush1.msra.mxu0 %v1308
    %1321 = vmatprep.subr.mxu0 0.0
    %1322 = vmatpush1.msra.mxu0 %v1310
    %1323 = vmatprep.subr.mxu0 0.0
    %1324 = vmatpush1.msra.mxu0 0.0
    %1325 = vmatprep.subr.mxu0 0.0
    %1326 = vmatpush1.msra.mxu0 0.0
    %1327 = vmatprep.subr.mxu0 0.0
    %1328 = vmatpush1.msra.mxu0 0.0
    %1329 = vmatprep.subr.mxu0 0.0
    %1330 = vmatpush1.msra.mxu0 0.0
    %1331 = vmatprep.subr.mxu0 0.0
    %1332 = vmatpush1.msra.mxu0 0.0
    %1333 = vmatprep.subr.mxu0 0.0
    %1334 = vmatpush1.msra.mxu0 0.0
    %1335 = vmatprep.subr.mxu0 0.0
    %1336 = vmatpush1.msra.mxu0 0.0
    %1337 = vmatprep.subr.mxu0 0.0
    %1338 = vmatpush1.msra.mxu0 0.0
    %1339 = vmatprep.subr.mxu0 0.0
    %1340 = vmatpush1.msra.mxu0 0.0
    %1341 = vmatprep.subr.mxu0 0.0
    %1342 = vmatpush1.msra.mxu0 0.0
    %1343 = vmatprep.subr.mxu0 0.0
    %1344 = vmatpush1.msra.mxu0 0.0
    %1345 = vmatprep.subr.mxu0 0.0
    %1346 = vmatpush1.msra.mxu0 0.0
    %1347 = vmatprep.subr.mxu0 0.0
    %1348 = vmatpush1.msra.mxu0 0.0
    %1349 = vmatprep.subr.mxu0 0.0
    %1350 = vmatpush1.msra.mxu0 0.0
    %1351 = vmatprep.subr.mxu0 0.0
    %1352 = vmatpush1.msra.mxu0 0.0
    %1353 = vmatprep.subr.mxu0 0.0
    %1354 = vmatpush1.msra.mxu0 0.0
    %1355 = vmatprep.subr.mxu0 0.0
    %1356 = vmatpush1.msra.mxu0 0.0
    %1357 = vmatprep.subr.mxu0 0.0
    %1358 = vmatpush1.msra.mxu0 0.0
    %1359 = vmatprep.subr.mxu0 0.0
    %1360 = vmatpush1.msra.mxu0 0.0
    %1361 = vmatprep.subr.mxu0 0.0
    %1362 = vmatpush1.msra.mxu0 0.0
    %1363 = vmatprep.subr.mxu0 0.0
    %1364 = vmatpush1.msra.mxu0 0.0
    %1365 = vmatprep.subr.mxu0 0.0
    %1366 = vmatpush1.msra.mxu0 0.0
    %1367 = vmatprep.subr.mxu0 0.0
    %1368 = vmatpush1.msra.mxu0 0.0
    %1369 = vmatprep.subr.mxu0 0.0
    %1370 = vmatpush1.msra.mxu0 0.0
    %1371 = vmatprep.subr.mxu0 0.0
    %1372 = vmatpush1.msra.mxu0 0.0
    %1373 = vmatprep.subr.mxu0 0.0
    %1374 = vmatpush1.msra.mxu0 0.0
    %1375 = vmatprep.subr.mxu0 0.0
    %1376 = vmatpush1.msra.mxu0 0.0
    %1377 = vmatprep.subr.mxu0 0.0
    %1378 = vmatpush1.msra.mxu0 0.0
    %1379 = vmatprep.subr.mxu0 0.0
    %1380 = vmatpush1.msra.mxu0 0.0
    %1381 = vmatprep.subr.mxu0 0.0
    %1382 = vmatpush1.msra.mxu0 0.0
    %1383 = vmatprep.mubr.f32.mxu0 0.0
    %1384 = vmatmul.mubr.f32.gmra.mrb[0].mxu0 %v1314
    %v1385 = vpop.f32.mrb[0].mxu0
    %v1386 = vadd.f32 0.0, %v1385
    %v1387 = vpop.f32.mrb[0].mxu0
    %1388 = vmatprep.mubr.f32.mxu0 0.0
    %1389 = vmatmul.mubr.f32.gmra.mrb[0].mxu0 %v1317
    %v1390 = vpop.f32.mrb[0].mxu0
    %v1391 = vadd.f32 0.0, %v1390
    %v1392 = vpop.f32.mrb[0].mxu0
    %1393 = vdwg.mxu0
    %1394 = vrot.lane.b32.xlu0 %v1179, 112
    %v1395 = vpop.permute.xlu0 %1394
    %1396 = vrot.lane.b32.xlu0 %v1184, 112
    %v1397 = vpop.permute.xlu0 %1396
    %1398 = vrot.lane.b32.xlu0 %v1179, 80
    %v1399 = vpop.permute.xlu0 %1398
    %1400 = vrot.lane.b32.xlu0 %v1184, 80
    %v1401 = vpop.permute.xlu0 %1400
    %v1402 = vsel %vm230, %v1395, 0
    %v1404 = vsel %vm230, %v1397, 0
    %v1406 = vsel %vm230, %v1399, 0
    %v1408 = vsel %vm230, %v1401, 0
    %1410 = vmatprep.subr.mxu0 0.0
    %1411 = vmatpush1.xpose.msra.mxu0 %v1406
    %1412 = vmatprep.subr.mxu0 0.0
    %1413 = vmatpush1.xpose.msra.mxu0 %v1408
    %1414 = vmatprep.subr.mxu0 0.0
    %1415 = vmatpush1.xpose.msra.mxu0 0.0
    %1416 = vmatprep.subr.mxu0 0.0
    %1417 = vmatpush1.xpose.msra.mxu0 0.0
    %1418 = vmatprep.subr.mxu0 0.0
    %1419 = vmatpush1.xpose.msra.mxu0 0.0
    %1420 = vmatprep.subr.mxu0 0.0
    %1421 = vmatpush1.xpose.msra.mxu0 0.0
    %1422 = vmatprep.subr.mxu0 0.0
    %1423 = vmatpush1.xpose.msra.mxu0 0.0
    %1424 = vmatprep.subr.mxu0 0.0
    %1425 = vmatpush1.xpose.msra.mxu0 0.0
    %1426 = vmatprep.subr.mxu0 0.0
    %1427 = vmatpush1.xpose.msra.mxu0 0.0
    %1428 = vmatprep.subr.mxu0 0.0
    %1429 = vmatpush1.xpose.msra.mxu0 0.0
    %1430 = vmatprep.subr.mxu0 0.0
    %1431 = vmatpush1.xpose.msra.mxu0 0.0
    %1432 = vmatprep.subr.mxu0 0.0
    %1433 = vmatpush1.xpose.msra.mxu0 0.0
    %1434 = vmatprep.subr.mxu0 0.0
    %1435 = vmatpush1.xpose.msra.mxu0 0.0
    %1436 = vmatprep.subr.mxu0 0.0
    %1437 = vmatpush1.xpose.msra.mxu0 0.0
    %1438 = vmatprep.subr.mxu0 0.0
    %1439 = vmatpush1.xpose.msra.mxu0 0.0
    %1440 = vmatprep.subr.mxu0 0.0
    %1441 = vmatpush1.xpose.msra.mxu0 0.0
    %1442 = vmatprep.subr.mxu0 0.0
    %1443 = vmatpush1.xpose.msra.mxu0 0.0
    %1444 = vmatprep.subr.mxu0 0.0
    %1445 = vmatpush1.xpose.msra.mxu0 0.0
    %1446 = vmatprep.subr.mxu0 0.0
    %1447 = vmatpush1.xpose.msra.mxu0 0.0
    %1448 = vmatprep.subr.mxu0 0.0
    %1449 = vmatpush1.xpose.msra.mxu0 0.0
    %1450 = vmatprep.subr.mxu0 0.0
    %1451 = vmatpush1.xpose.msra.mxu0 0.0
    %1452 = vmatprep.subr.mxu0 0.0
    %1453 = vmatpush1.xpose.msra.mxu0 0.0
    %1454 = vmatprep.subr.mxu0 0.0
    %1455 = vmatpush1.xpose.msra.mxu0 0.0
    %1456 = vmatprep.subr.mxu0 0.0
    %1457 = vmatpush1.xpose.msra.mxu0 0.0
    %1458 = vmatprep.subr.mxu0 0.0
    %1459 = vmatpush1.xpose.msra.mxu0 0.0
    %1460 = vmatprep.subr.mxu0 0.0
    %1461 = vmatpush1.xpose.msra.mxu0 0.0
    %1462 = vmatprep.subr.mxu0 0.0
    %1463 = vmatpush1.xpose.msra.mxu0 0.0
    %1464 = vmatprep.subr.mxu0 0.0
    %1465 = vmatpush1.xpose.msra.mxu0 0.0
    %1466 = vmatprep.subr.mxu0 0.0
    %1467 = vmatpush1.xpose.msra.mxu0 0.0
    %1468 = vmatprep.subr.mxu0 0.0
    %1469 = vmatpush1.xpose.msra.mxu0 0.0
    %1470 = vmatprep.subr.mxu0 0.0
    %1471 = vmatpush1.xpose.msra.mxu0 0.0
    %1472 = vmatprep.subr.mxu0 0.0
    %1473 = vmatpush1.xpose.msra.mxu0 0.0
    %1474 = vmatprep.mubr.f32.mxu0 0.0
    %1475 = vmatmul.mubr.f32.gmra.mrb[0].mxu0 %v1402
    %v1476 = vpop.f32.mrb[0].mxu0
    %v1477 = vadd.f32 0.0, %v1476
    %v1478 = vpop.f32.mrb[0].mxu0
    %1479 = vmatprep.mubr.f32.mxu0 0.0
    %1480 = vmatmul.mubr.f32.gmra.mrb[0].mxu0 %v1404
    %v1481 = vpop.f32.mrb[0].mxu0
    %v1482 = vadd.f32 0.0, %v1481
    %v1483 = vpop.f32.mrb[0].mxu0
    %1484 = vdwg.mxu0
    %v1485 = vmul.f32 %v1477, 0.25
    %v1486 = vmul.f32 %v1482, 0.25
    %v1487 = vadd.f32 %v1485, %v78
    %v1488 = vadd.f32 %v1486, %v79
    %v1489 = vsel %vm230, %v1487, -inf
    %1490 = vmax.xlane.f32.xlu0 %v1489
    %v1491 = vpop.xlane.xlu0 %1490
    %v1492 = vsel %vm230, %v1488, -inf
    %1493 = vmax.xlane.f32.xlu0 %v1492
    %v1494 = vpop.xlane.xlu0 %1493
    %v1495 = vsub.f32 %v1487, %v1491
    %v1496 = vsub.f32 %v1488, %v1494
    %v1497 = vmul.f32 %v1495, 1.442695
    %v1498 = vpow.pop %v1497
    %v1499 = vmul.f32 %v1496, 1.442695
    %v1500 = vpow.pop %v1499
    %v1501 = vsel %vm230, %v1498, 0.0
    %1502 = vadd.xlane.f32.xlu0 %v1501
    %v1503 = vpop.xlane.xlu0 %1502
    %v1504 = vsel %vm230, %v1500, 0.0
    %1505 = vadd.xlane.f32.xlu0 %v1504
    %v1506 = vpop.xlane.xlu0 %1505
    %v1507 = vrcp.pop %v1503
    %v1508 = vmul.f32 %v1498, %v1507
    %v1509 = vrcp.pop %v1506
    %v1510 = vmul.f32 %v1500, %v1509
    %1511 = vrot.lane.b32.xlu0 %v1179, 48
    %v1512 = vpop.permute.xlu0 %1511
    %1513 = vrot.lane.b32.xlu0 %v1184, 48
    %v1514 = vpop.permute.xlu0 %1513
    %v1518 = vsel %vm230, %v1508, 0
    %v1521 = vsel %vm230, %v1510, 0
    %1523 = vmatprep.subr.mxu0 0.0
    %1524 = vmatpush1.msra.mxu0 %v1512
    %1525 = vmatprep.subr.mxu0 0.0
    %1526 = vmatpush1.msra.mxu0 %v1514
    %1527 = vmatprep.subr.mxu0 0.0
    %1528 = vmatpush1.msra.mxu0 0.0
    %1529 = vmatprep.subr.mxu0 0.0
    %1530 = vmatpush1.msra.mxu0 0.0
    %1531 = vmatprep.subr.mxu0 0.0
    %1532 = vmatpush1.msra.mxu0 0.0
    %1533 = vmatprep.subr.mxu0 0.0
    %1534 = vmatpush1.msra.mxu0 0.0
    %1535 = vmatprep.subr.mxu0 0.0
    %1536 = vmatpush1.msra.mxu0 0.0
    %1537 = vmatprep.subr.mxu0 0.0
    %1538 = vmatpush1.msra.mxu0 0.0
    %1539 = vmatprep.subr.mxu0 0.0
    %1540 = vmatpush1.msra.mxu0 0.0
    %1541 = vmatprep.subr.mxu0 0.0
    %1542 = vmatpush1.msra.mxu0 0.0
    %1543 = vmatprep.subr.mxu0 0.0
    %1544 = vmatpush1.msra.mxu0 0.0
    %1545 = vmatprep.subr.mxu0 0.0
    %1546 = vmatpush1.msra.mxu0 0.0
    %1547 = vmatprep.subr.mxu0 0.0
    %1548 = vmatpush1.msra.mxu0 0.0
    %1549 = vmatprep.subr.mxu0 0.0
    %1550 = vmatpush1.msra.mxu0 0.0
    %1551 = vmatprep.subr.mxu0 0.0
    %1552 = vmatpush1.msra.mxu0 0.0
    %1553 = vmatprep.subr.mxu0 0.0
    %1554 = vmatpush1.msra.mxu0 0.0
    %1555 = vmatprep.subr.mxu0 0.0
    %1556 = vmatpush1.msra.mxu0 0.0
    %1557 = vmatprep.subr.mxu0 0.0
    %1558 = vmatpush1.msra.mxu0 0.0
    %1559 = vmatprep.subr.mxu0 0.0
    %1560 = vmatpush1.msra.mxu0 0.0
    %1561 = vmatprep.subr.mxu0 0.0
    %1562 = vmatpush1.msra.mxu0 0.0
    %1563 = vmatprep.subr.mxu0 0.0
    %1564 = vmatpush1.msra.mxu0 0.0
    %1565 = vmatprep.subr.mxu0 0.0
    %1566 = vmatpush1.msra.mxu0 0.0
    %1567 = vmatprep.subr.mxu0 0.0
    %1568 = vmatpush1.msra.mxu0 0.0
    %1569 = vmatprep.subr.mxu0 0.0
    %1570 = vmatpush1.msra.mxu0 0.0
    %1571 = vmatprep.subr.mxu0 0.0
    %1572 = vmatpush1.msra.mxu0 0.0
    %1573 = vmatprep.subr.mxu0 0.0
    %1574 = vmatpush1.msra.mxu0 0.0
    %1575 = vmatprep.subr.mxu0 0.0
    %1576 = vmatpush1.msra.mxu0 0.0
    %1577 = vmatprep.subr.mxu0 0.0
    %1578 = vmatpush1.msra.mxu0 0.0
    %1579 = vmatprep.subr.mxu0 0.0
    %1580 = vmatpush1.msra.mxu0 0.0
    %1581 = vmatprep.subr.mxu0 0.0
    %1582 = vmatpush1.msra.mxu0 0.0
    %1583 = vmatprep.subr.mxu0 0.0
    %1584 = vmatpush1.msra.mxu0 0.0
    %1585 = vmatprep.subr.mxu0 0.0
    %1586 = vmatpush1.msra.mxu0 0.0
    %1587 = vmatprep.mubr.f32.mxu0 0.0
    %1588 = vmatmul.mubr.f32.gmra.mrb[0].mxu0 %v1518
    %v1589 = vpop.f32.mrb[0].mxu0
    %v1590 = vadd.f32 0.0, %v1589
    %v1591 = vpop.f32.mrb[0].mxu0
    %1592 = vmatprep.mubr.f32.mxu0 0.0
    %1593 = vmatmul.mubr.f32.gmra.mrb[0].mxu0 %v1521
    %v1594 = vpop.f32.mrb[0].mxu0
    %v1595 = vadd.f32 0.0, %v1594
    %v1596 = vpop.f32.mrb[0].mxu0
    %1597 = vdwg.mxu0
    %v1599 = vsel %vm230, %v1590, 0
    %v1602 = vsel %vm230, %v1595, 0
    %1604 = vmatprep.subr.mxu0 0.0
    %1605 = vmatpush1.msra.mxu0 %v1190
    %1606 = vmatprep.subr.mxu0 0.0
    %1607 = vmatpush1.msra.mxu0 %v1191
    %1608 = vmatprep.subr.mxu0 0.0
    %1609 = vmatpush1.msra.mxu0 0.0
    %1610 = vmatprep.subr.mxu0 0.0
    %1611 = vmatpush1.msra.mxu0 0.0
    %1612 = vmatprep.subr.mxu0 0.0
    %1613 = vmatpush1.msra.mxu0 0.0
    %1614 = vmatprep.subr.mxu0 0.0
    %1615 = vmatpush1.msra.mxu0 0.0
    %1616 = vmatprep.subr.mxu0 0.0
    %1617 = vmatpush1.msra.mxu0 0.0
    %1618 = vmatprep.subr.mxu0 0.0
    %1619 = vmatpush1.msra.mxu0 0.0
    %1620 = vmatprep.subr.mxu0 0.0
    %1621 = vmatpush1.msra.mxu0 0.0
    %1622 = vmatprep.subr.mxu0 0.0
    %1623 = vmatpush1.msra.mxu0 0.0
    %1624 = vmatprep.subr.mxu0 0.0
    %1625 = vmatpush1.msra.mxu0 0.0
    %1626 = vmatprep.subr.mxu0 0.0
    %1627 = vmatpush1.msra.mxu0 0.0
    %1628 = vmatprep.subr.mxu0 0.0
    %1629 = vmatpush1.msra.mxu0 0.0
    %1630 = vmatprep.subr.mxu0 0.0
    %1631 = vmatpush1.msra.mxu0 0.0
    %1632 = vmatprep.subr.mxu0 0.0
    %1633 = vmatpush1.msra.mxu0 0.0
    %1634 = vmatprep.subr.mxu0 0.0
    %1635 = vmatpush1.msra.mxu0 0.0
    %1636 = vmatprep.subr.mxu0 0.0
    %1637 = vmatpush1.msra.mxu0 0.0
    %1638 = vmatprep.subr.mxu0 0.0
    %1639 = vmatpush1.msra.mxu0 0.0
    %1640 = vmatprep.subr.mxu0 0.0
    %1641 = vmatpush1.msra.mxu0 0.0
    %1642 = vmatprep.subr.mxu0 0.0
    %1643 = vmatpush1.msra.mxu0 0.0
    %1644 = vmatprep.subr.mxu0 0.0
    %1645 = vmatpush1.msra.mxu0 0.0
    %1646 = vmatprep.subr.mxu0 0.0
    %1647 = vmatpush1.msra.mxu0 0.0
    %1648 = vmatprep.subr.mxu0 0.0
    %1649 = vmatpush1.msra.mxu0 0.0
    %1650 = vmatprep.subr.mxu0 0.0
    %1651 = vmatpush1.msra.mxu0 0.0
    %1652 = vmatprep.subr.mxu0 0.0
    %1653 = vmatpush1.msra.mxu0 0.0
    %1654 = vmatprep.subr.mxu0 0.0
    %1655 = vmatpush1.msra.mxu0 0.0
    %1656 = vmatprep.subr.mxu0 0.0
    %1657 = vmatpush1.msra.mxu0 0.0
    %1658 = vmatprep.subr.mxu0 0.0
    %1659 = vmatpush1.msra.mxu0 0.0
    %1660 = vmatprep.subr.mxu0 0.0
    %1661 = vmatpush1.msra.mxu0 0.0
    %1662 = vmatprep.subr.mxu0 0.0
    %1663 = vmatpush1.msra.mxu0 0.0
    %1664 = vmatprep.subr.mxu0 0.0
    %1665 = vmatpush1.msra.mxu0 0.0
    %1666 = vmatprep.subr.mxu0 0.0
    %1667 = vmatpush1.msra.mxu0 0.0
    %1668 = vmatprep.mubr.f32.mxu0 0.0
    %1669 = vmatmul.mubr.f32.gmra.mrb[0].mxu0 %v1599
    %v1670 = vpop.f32.mrb[0].mxu0
    %v1671 = vadd.f32 0.0, %v1670
    %v1672 = vpop.f32.mrb[0].mxu0
    %1673 = vmatprep.mubr.f32.mxu0 0.0
    %1674 = vmatmul.mubr.f32.gmra.mrb[0].mxu0 %v1602
    %v1675 = vpop.f32.mrb[0].mxu0
    %v1676 = vadd.f32 0.0, %v1675
    %v1677 = vpop.f32.mrb[0].mxu0
    %1678 = vdwg.mxu0
    %v1680 = vsel %vm230, %v1386, 0
    %v1683 = vsel %vm230, %v1391, 0
    %1685 = vmatprep.subr.mxu0 0.0
    %1686 = vmatpush1.msra.mxu0 %v1188
    %1687 = vmatprep.subr.mxu0 0.0
    %1688 = vmatpush1.msra.mxu0 %v1189
    %1689 = vmatprep.subr.mxu0 0.0
    %1690 = vmatpush1.msra.mxu0 0.0
    %1691 = vmatprep.subr.mxu0 0.0
    %1692 = vmatpush1.msra.mxu0 0.0
    %1693 = vmatprep.subr.mxu0 0.0
    %1694 = vmatpush1.msra.mxu0 0.0
    %1695 = vmatprep.subr.mxu0 0.0
    %1696 = vmatpush1.msra.mxu0 0.0
    %1697 = vmatprep.subr.mxu0 0.0
    %1698 = vmatpush1.msra.mxu0 0.0
    %1699 = vmatprep.subr.mxu0 0.0
    %1700 = vmatpush1.msra.mxu0 0.0
    %1701 = vmatprep.subr.mxu0 0.0
    %1702 = vmatpush1.msra.mxu0 0.0
    %1703 = vmatprep.subr.mxu0 0.0
    %1704 = vmatpush1.msra.mxu0 0.0
    %1705 = vmatprep.subr.mxu0 0.0
    %1706 = vmatpush1.msra.mxu0 0.0
    %1707 = vmatprep.subr.mxu0 0.0
    %1708 = vmatpush1.msra.mxu0 0.0
    %1709 = vmatprep.subr.mxu0 0.0
    %1710 = vmatpush1.msra.mxu0 0.0
    %1711 = vmatprep.subr.mxu0 0.0
    %1712 = vmatpush1.msra.mxu0 0.0
    %1713 = vmatprep.subr.mxu0 0.0
    %1714 = vmatpush1.msra.mxu0 0.0
    %1715 = vmatprep.subr.mxu0 0.0
    %1716 = vmatpush1.msra.mxu0 0.0
    %1717 = vmatprep.subr.mxu0 0.0
    %1718 = vmatpush1.msra.mxu0 0.0
    %1719 = vmatprep.subr.mxu0 0.0
    %1720 = vmatpush1.msra.mxu0 0.0
    %1721 = vmatprep.subr.mxu0 0.0
    %1722 = vmatpush1.msra.mxu0 0.0
    %1723 = vmatprep.subr.mxu0 0.0
    %1724 = vmatpush1.msra.mxu0 0.0
    %1725 = vmatprep.subr.mxu0 0.0
    %1726 = vmatpush1.msra.mxu0 0.0
    %1727 = vmatprep.subr.mxu0 0.0
    %1728 = vmatpush1.msra.mxu0 0.0
    %1729 = vmatprep.subr.mxu0 0.0
    %1730 = vmatpush1.msra.mxu0 0.0
    %1731 = vmatprep.subr.mxu0 0.0
    %1732 = vmatpush1.msra.mxu0 0.0
    %1733 = vmatprep.subr.mxu0 0.0
    %1734 = vmatpush1.msra.mxu0 0.0
    %1735 = vmatprep.subr.mxu0 0.0
    %1736 = vmatpush1.msra.mxu0 0.0
    %1737 = vmatprep.subr.mxu0 0.0
    %1738 = vmatpush1.msra.mxu0 0.0
    %1739 = vmatprep.subr.mxu0 0.0
    %1740 = vmatpush1.msra.mxu0 0.0
    %1741 = vmatprep.subr.mxu0 0.0
    %1742 = vmatpush1.msra.mxu0 0.0
    %1743 = vmatprep.subr.mxu0 0.0
    %1744 = vmatpush1.msra.mxu0 0.0
    %1745 = vmatprep.subr.mxu0 0.0
    %1746 = vmatpush1.msra.mxu0 0.0
    %1747 = vmatprep.subr.mxu0 0.0
    %1748 = vmatpush1.msra.mxu0 0.0
    %1749 = vmatprep.mubr.f32.mxu0 0.0
    %1750 = vmatmul.mubr.f32.gmra.mrb[0].mxu0 %v1680
    %v1751 = vpop.f32.mrb[0].mxu0
    %v1752 = vadd.f32 %v1671, %v1751
    %v1753 = vpop.f32.mrb[0].mxu0
    %1754 = vmatprep.mubr.f32.mxu0 0.0
    %1755 = vmatmul.mubr.f32.gmra.mrb[0].mxu0 %v1683
    %v1756 = vpop.f32.mrb[0].mxu0
    %v1757 = vadd.f32 %v1676, %v1756
    %v1758 = vpop.f32.mrb[0].mxu0
    %1759 = vdwg.mxu0
    %s1760 = scalar_lea.vmem %s8, 1
    %v1761 = vld [vmem:[%s1760] sm:$0x1]
    %v1763 = vlaneseq
    %v1764 = vshrl.u32 %v1763, 7
    %v1765 = vsub.s32 0, %v1764
    %v1766 = vrot.slane %v1761, %v1765
    %v1768 = vadd.f32 %v1752, %v1766
    %v1769 = vadd.f32 %v1757, %v1766
    %v1770 = vadd.f32 %v1091, %v1768
    %v1771 = vadd.f32 %v1092, %v1769
    %s1772 = scalar_lea.vmem %s9, 1
    %v1773 = vld [vmem:[%s1772] sm:$0x1]
    %s1774 = scalar_lea.vmem %s10, 1
    %v1775 = vld [vmem:[%s1774] sm:$0x1]
    %v1776 = vsel %vm84, %v1770, 0.0
    %1777 = vadd.xlane.f32.xlu0 %v1776
    %v1778 = vpop.xlane.xlu0 %1777
    %v1779 = vsel %vm84, %v1771, 0.0
    %1780 = vadd.xlane.f32.xlu0 %v1779
    %v1781 = vpop.xlane.xlu0 %1780
    %v1782 = vmul.f32 %v1778, %v91
    %v1783 = vmul.f32 %v1781, %v91
    %v1784 = vsub.f32 %v1770, %v1782
    %v1785 = vsub.f32 %v1771, %v1783
    %v1786 = vmul.f32 %v1784, %v1784
    %v1787 = vmul.f32 %v1785, %v1785
    %v1788 = vsel %vm84, %v1786, 0.0
    %1789 = vadd.xlane.f32.xlu0 %v1788
    %v1790 = vpop.xlane.xlu0 %1789
    %v1791 = vsel %vm84, %v1787, 0.0
    %1792 = vadd.xlane.f32.xlu0 %v1791
    %v1793 = vpop.xlane.xlu0 %1792
    %v1794 = vmul.f32 %v1790, %v91
    %v1795 = vmul.f32 %v1793, %v91
    %v1796 = vadd.f32 %v1794, 1e-12
    %v1797 = vadd.f32 %v1795, 1e-12
    %v1798 = vrsqrt.pop %v1796
    %v1799 = vrsqrt.pop %v1797
    %v1800 = vmul.f32 %v1784, %v1798
    %v1801 = vmul.f32 %v1785, %v1799
    %v1803 = vlaneseq
    %v1804 = vshrl.u32 %v1803, 7
    %v1805 = vsub.s32 0, %v1804
    %v1806 = vrot.slane %v1773, %v1805
    %v1808 = vmul.f32 %v1800, %v1806
    %v1809 = vmul.f32 %v1801, %v1806
    %v1811 = vlaneseq
    %v1812 = vshrl.u32 %v1811, 7
    %v1813 = vsub.s32 0, %v1812
    %v1814 = vrot.slane %v1775, %v1813
    %v1816 = vadd.f32 %v1808, %v1814
    %v1817 = vadd.f32 %v1809, %v1814
    %s1818 = scalar_lea.vmem %s11, 32
    %v1819 = vld [vmem:[%s1818] sm:$0xff]
    %v1820 = vld [vmem:[%s1818 + $0x8] sm:$0xff]
    %v1821 = vld [vmem:[%s1818 + $0x10] sm:$0xff]
    %v1822 = vld [vmem:[%s1818 + $0x18] sm:$0xff]
    %s1823 = scalar_lea.vmem %s12, 1
    %v1824 = vld [vmem:[%s1823] sm:$0x1]
    %v1826 = vlaneseq
    %v1827 = vshrl.u32 %v1826, 7
    %v1828 = vsub.s32 0, %v1827
    %v1829 = vrot.slane %v1824, %v1828
    %v1832 = vsel %vm84, %v1816, 0
    %v1835 = vsel %vm84, %v1817, 0
    %1837 = vmatprep.subr.mxu0 0.0
    %1838 = vmatpush1.msra.mxu0 %v1819
    %1839 = vmatprep.subr.mxu0 0.0
    %1840 = vmatpush1.msra.mxu0 %v1820
    %1841 = vmatprep.subr.mxu0 0.0
    %1842 = vmatpush1.msra.mxu0 %v1821
    %1843 = vmatprep.subr.mxu0 0.0
    %1844 = vmatpush1.msra.mxu0 %v1822
    %1845 = vmatprep.subr.mxu0 0.0
    %1846 = vmatpush1.msra.mxu0 0.0
    %1847 = vmatprep.subr.mxu0 0.0
    %1848 = vmatpush1.msra.mxu0 0.0
    %1849 = vmatprep.subr.mxu0 0.0
    %1850 = vmatpush1.msra.mxu0 0.0
    %1851 = vmatprep.subr.mxu0 0.0
    %1852 = vmatpush1.msra.mxu0 0.0
    %1853 = vmatprep.subr.mxu0 0.0
    %1854 = vmatpush1.msra.mxu0 0.0
    %1855 = vmatprep.subr.mxu0 0.0
    %1856 = vmatpush1.msra.mxu0 0.0
    %1857 = vmatprep.subr.mxu0 0.0
    %1858 = vmatpush1.msra.mxu0 0.0
    %1859 = vmatprep.subr.mxu0 0.0
    %1860 = vmatpush1.msra.mxu0 0.0
    %1861 = vmatprep.subr.mxu0 0.0
    %1862 = vmatpush1.msra.mxu0 0.0
    %1863 = vmatprep.subr.mxu0 0.0
    %1864 = vmatpush1.msra.mxu0 0.0
    %1865 = vmatprep.subr.mxu0 0.0
    %1866 = vmatpush1.msra.mxu0 0.0
    %1867 = vmatprep.subr.mxu0 0.0
    %1868 = vmatpush1.msra.mxu0 0.0
    %1869 = vmatprep.subr.mxu0 0.0
    %1870 = vmatpush1.msra.mxu0 0.0
    %1871 = vmatprep.subr.mxu0 0.0
    %1872 = vmatpush1.msra.mxu0 0.0
    %1873 = vmatprep.subr.mxu0 0.0
    %1874 = vmatpush1.msra.mxu0 0.0
    %1875 = vmatprep.subr.mxu0 0.0
    %1876 = vmatpush1.msra.mxu0 0.0
    %1877 = vmatprep.subr.mxu0 0.0
    %1878 = vmatpush1.msra.mxu0 0.0
    %1879 = vmatprep.subr.mxu0 0.0
    %1880 = vmatpush1.msra.mxu0 0.0
    %1881 = vmatprep.subr.mxu0 0.0
    %1882 = vmatpush1.msra.mxu0 0.0
    %1883 = vmatprep.subr.mxu0 0.0
    %1884 = vmatpush1.msra.mxu0 0.0
    %1885 = vmatprep.subr.mxu0 0.0
    %1886 = vmatpush1.msra.mxu0 0.0
    %1887 = vmatprep.subr.mxu0 0.0
    %1888 = vmatpush1.msra.mxu0 0.0
    %1889 = vmatprep.subr.mxu0 0.0
    %1890 = vmatpush1.msra.mxu0 0.0
    %1891 = vmatprep.subr.mxu0 0.0
    %1892 = vmatpush1.msra.mxu0 0.0
    %1893 = vmatprep.subr.mxu0 0.0
    %1894 = vmatpush1.msra.mxu0 0.0
    %1895 = vmatprep.subr.mxu0 0.0
    %1896 = vmatpush1.msra.mxu0 0.0
    %1897 = vmatprep.subr.mxu0 0.0
    %1898 = vmatpush1.msra.mxu0 0.0
    %1899 = vmatprep.subr.mxu0 0.0
    %1900 = vmatpush1.msra.mxu0 0.0
    %1901 = vmatprep.mubr.f32.mxu0 0.0
    %1902 = vmatmul.mubr.f32.gmra.mrb[0].mxu0 %v1832
    %v1903 = vpop.f32.mrb[0].mxu0
    %v1904 = vadd.f32 %v1829, %v1903
    %v1905 = vpop.f32.mrb[0].mxu0
    %1906 = vmatprep.mubr.f32.mxu0 0.0
    %1907 = vmatmul.mubr.f32.gmra.mrb[0].mxu0 %v1835
    %v1908 = vpop.f32.mrb[0].mxu0
    %v1909 = vadd.f32 %v1829, %v1908
    %v1910 = vpop.f32.mrb[0].mxu0
    %1911 = vdwg.mxu0
    %v1912 = vmul.f32 %v1904, 0.5
    %v1913 = vmul.f32 %v1909, 0.5
    %v1914 = vmul.f32 %v1904, 0.70710677
    %v1915 = vmul.f32 %v1909, 0.70710677
    %v1916 = verf.f32.pop %v1914
    %v1917 = verf.f32.pop %v1915
    %v1918 = vadd.f32 %v1916, 1.0
    %v1919 = vadd.f32 %v1917, 1.0
    %v1920 = vmul.f32 %v1912, %v1918
    %v1921 = vmul.f32 %v1913, %v1919
    %s1922 = scalar_lea.vmem %s13, 64
    %v1923 = vld [vmem:[%s1922] sm:$0xff]
    %v1924 = vld [vmem:[%s1922 + $0x8] sm:$0xff]
    %v1925 = vld [vmem:[%s1922 + $0x10] sm:$0xff]
    %v1926 = vld [vmem:[%s1922 + $0x18] sm:$0xff]
    %v1927 = vld [vmem:[%s1922 + $0x20] sm:$0xff]
    %v1928 = vld [vmem:[%s1922 + $0x28] sm:$0xff]
    %v1929 = vld [vmem:[%s1922 + $0x30] sm:$0xff]
    %v1930 = vld [vmem:[%s1922 + $0x38] sm:$0xff]
    %s1931 = scalar_lea.vmem %s14, 1
    %v1932 = vld [vmem:[%s1931] sm:$0x1]
    %v1934 = vlaneseq
    %v1935 = vshrl.u32 %v1934, 7
    %v1936 = vsub.s32 0, %v1935
    %v1937 = vrot.slane %v1932, %v1936
    %v1940 = vsel %vm965, %v1920, 0
    %v1943 = vsel %vm965, %v1921, 0
    %1945 = vmatprep.subr.mxu0 0.0
    %1946 = vmatpush1.msra.mxu0 %v1923
    %1947 = vmatprep.subr.mxu0 0.0
    %1948 = vmatpush1.msra.mxu0 %v1924
    %1949 = vmatprep.subr.mxu0 0.0
    %1950 = vmatpush1.msra.mxu0 %v1925
    %1951 = vmatprep.subr.mxu0 0.0
    %1952 = vmatpush1.msra.mxu0 %v1926
    %1953 = vmatprep.subr.mxu0 0.0
    %1954 = vmatpush1.msra.mxu0 %v1927
    %1955 = vmatprep.subr.mxu0 0.0
    %1956 = vmatpush1.msra.mxu0 %v1928
    %1957 = vmatprep.subr.mxu0 0.0
    %1958 = vmatpush1.msra.mxu0 %v1929
    %1959 = vmatprep.subr.mxu0 0.0
    %1960 = vmatpush1.msra.mxu0 %v1930
    %1961 = vmatprep.subr.mxu0 0.0
    %1962 = vmatpush1.msra.mxu0 0.0
    %1963 = vmatprep.subr.mxu0 0.0
    %1964 = vmatpush1.msra.mxu0 0.0
    %1965 = vmatprep.subr.mxu0 0.0
    %1966 = vmatpush1.msra.mxu0 0.0
    %1967 = vmatprep.subr.mxu0 0.0
    %1968 = vmatpush1.msra.mxu0 0.0
    %1969 = vmatprep.subr.mxu0 0.0
    %1970 = vmatpush1.msra.mxu0 0.0
    %1971 = vmatprep.subr.mxu0 0.0
    %1972 = vmatpush1.msra.mxu0 0.0
    %1973 = vmatprep.subr.mxu0 0.0
    %1974 = vmatpush1.msra.mxu0 0.0
    %1975 = vmatprep.subr.mxu0 0.0
    %1976 = vmatpush1.msra.mxu0 0.0
    %1977 = vmatprep.subr.mxu0 0.0
    %1978 = vmatpush1.msra.mxu0 0.0
    %1979 = vmatprep.subr.mxu0 0.0
    %1980 = vmatpush1.msra.mxu0 0.0
    %1981 = vmatprep.subr.mxu0 0.0
    %1982 = vmatpush1.msra.mxu0 0.0
    %1983 = vmatprep.subr.mxu0 0.0
    %1984 = vmatpush1.msra.mxu0 0.0
    %1985 = vmatprep.subr.mxu0 0.0
    %1986 = vmatpush1.msra.mxu0 0.0
    %1987 = vmatprep.subr.mxu0 0.0
    %1988 = vmatpush1.msra.mxu0 0.0
    %1989 = vmatprep.subr.mxu0 0.0
    %1990 = vmatpush1.msra.mxu0 0.0
    %1991 = vmatprep.subr.mxu0 0.0
    %1992 = vmatpush1.msra.mxu0 0.0
    %1993 = vmatprep.subr.mxu0 0.0
    %1994 = vmatpush1.msra.mxu0 0.0
    %1995 = vmatprep.subr.mxu0 0.0
    %1996 = vmatpush1.msra.mxu0 0.0
    %1997 = vmatprep.subr.mxu0 0.0
    %1998 = vmatpush1.msra.mxu0 0.0
    %1999 = vmatprep.subr.mxu0 0.0
    %2000 = vmatpush1.msra.mxu0 0.0
    %2001 = vmatprep.subr.mxu0 0.0
    %2002 = vmatpush1.msra.mxu0 0.0
    %2003 = vmatprep.subr.mxu0 0.0
    %2004 = vmatpush1.msra.mxu0 0.0
    %2005 = vmatprep.subr.mxu0 0.0
    %2006 = vmatpush1.msra.mxu0 0.0
    %2007 = vmatprep.subr.mxu0 0.0
    %2008 = vmatpush1.msra.mxu0 0.0
    %2009 = vmatprep.mubr.f32.mxu0 0.0
    %2010 = vmatmul.mubr.f32.gmra.mrb[0].mxu0 %v1940
    %v2011 = vpop.f32.mrb[0].mxu0
    %v2012 = vadd.f32 %v1937, %v2011
    %v2013 = vpop.f32.mrb[0].mxu0
    %2014 = vmatprep.mubr.f32.mxu0 0.0
    %2015 = vmatmul.mubr.f32.gmra.mrb[0].mxu0 %v1943
    %v2016 = vpop.f32.mrb[0].mxu0
    %v2017 = vadd.f32 %v1937, %v2016
    %v2018 = vpop.f32.mrb[0].mxu0
    %2019 = vdwg.mxu0
    %v2020 = vadd.f32 %v1816, %v2012
    %v2021 = vadd.f32 %v1817, %v2017
    %s2022 = scalar_lea.vmem %s15, 1
    %v2023 = vld [vmem:[%s2022] sm:$0x1]
    %s2024 = scalar_lea.vmem %s16, 1
    %v2025 = vld [vmem:[%s2024] sm:$0x1]
    %v2026 = vsel %vm84, %v2020, 0.0
    %2027 = vadd.xlane.f32.xlu0 %v2026
    %v2028 = vpop.xlane.xlu0 %2027
    %v2029 = vsel %vm84, %v2021, 0.0
    %2030 = vadd.xlane.f32.xlu0 %v2029
    %v2031 = vpop.xlane.xlu0 %2030
    %v2032 = vmul.f32 %v2028, %v91
    %v2033 = vmul.f32 %v2031, %v91
    %v2034 = vsub.f32 %v2020, %v2032
    %v2035 = vsub.f32 %v2021, %v2033
    %v2036 = vmul.f32 %v2034, %v2034
    %v2037 = vmul.f32 %v2035, %v2035
    %v2038 = vsel %vm84, %v2036, 0.0
    %2039 = vadd.xlane.f32.xlu0 %v2038
    %v2040 = vpop.xlane.xlu0 %2039
    %v2041 = vsel %vm84, %v2037, 0.0
    %2042 = vadd.xlane.f32.xlu0 %v2041
    %v2043 = vpop.xlane.xlu0 %2042
    %v2044 = vmul.f32 %v2040, %v91
    %v2045 = vmul.f32 %v2043, %v91
    %v2046 = vadd.f32 %v2044, 1e-12
    %v2047 = vadd.f32 %v2045, 1e-12
    %v2048 = vrsqrt.pop %v2046
    %v2049 = vrsqrt.pop %v2047
    %v2050 = vmul.f32 %v2034, %v2048
    %v2051 = vmul.f32 %v2035, %v2049
    %v2053 = vlaneseq
    %v2054 = vshrl.u32 %v2053, 7
    %v2055 = vsub.s32 0, %v2054
    %v2056 = vrot.slane %v2023, %v2055
    %v2058 = vmul.f32 %v2050, %v2056
    %v2059 = vmul.f32 %v2051, %v2056
    %v2061 = vlaneseq
    %v2062 = vshrl.u32 %v2061, 7
    %v2063 = vsub.s32 0, %v2062
    %v2064 = vrot.slane %v2025, %v2063
    %v2066 = vadd.f32 %v2058, %v2064
    %v2067 = vadd.f32 %v2059, %v2064
    %v2068 = vld [vmem:[%s17] sm:$0xff]
    %v2069 = vld [vmem:[%s17 + $0x8] sm:$0xff]
    %v2070 = vld [vmem:[%s17 + $0x10] sm:$0xff]
    %v2071 = vld [vmem:[%s17 + $0x18] sm:$0xff]
    %v2072 = vld [vmem:[%s18] sm:$0x1]
    %v2074 = vlaneseq
    %v2075 = vshrl.u32 %v2074, 7
    %v2076 = vsub.s32 0, %v2075
    %v2077 = vrot.slane %v2072, %v2076
    %v2080 = vsel %vm84, %v2066, 0
    %v2083 = vsel %vm84, %v2067, 0
    %2085 = vmatprep.subr.mxu0 0.0
    %2086 = vmatpush1.msra.mxu0 %v2068
    %2087 = vmatprep.subr.mxu0 0.0
    %2088 = vmatpush1.msra.mxu0 %v2069
    %2089 = vmatprep.subr.mxu0 0.0
    %2090 = vmatpush1.msra.mxu0 %v2070
    %2091 = vmatprep.subr.mxu0 0.0
    %2092 = vmatpush1.msra.mxu0 %v2071
    %2093 = vmatprep.subr.mxu0 0.0
    %2094 = vmatpush1.msra.mxu0 0.0
    %2095 = vmatprep.subr.mxu0 0.0
    %2096 = vmatpush1.msra.mxu0 0.0
    %2097 = vmatprep.subr.mxu0 0.0
    %2098 = vmatpush1.msra.mxu0 0.0
    %2099 = vmatprep.subr.mxu0 0.0
    %2100 = vmatpush1.msra.mxu0 0.0
    %2101 = vmatprep.subr.mxu0 0.0
    %2102 = vmatpush1.msra.mxu0 0.0
    %2103 = vmatprep.subr.mxu0 0.0
    %2104 = vmatpush1.msra.mxu0 0.0
    %2105 = vmatprep.subr.mxu0 0.0
    %2106 = vmatpush1.msra.mxu0 0.0
    %2107 = vmatprep.subr.mxu0 0.0
    %2108 = vmatpush1.msra.mxu0 0.0
    %2109 = vmatprep.subr.mxu0 0.0
    %2110 = vmatpush1.msra.mxu0 0.0
    %2111 = vmatprep.subr.mxu0 0.0
    %2112 = vmatpush1.msra.mxu0 0.0
    %2113 = vmatprep.subr.mxu0 0.0
    %2114 = vmatpush1.msra.mxu0 0.0
    %2115 = vmatprep.subr.mxu0 0.0
    %2116 = vmatpush1.msra.mxu0 0.0
    %2117 = vmatprep.subr.mxu0 0.0
    %2118 = vmatpush1.msra.mxu0 0.0
    %2119 = vmatprep.subr.mxu0 0.0
    %2120 = vmatpush1.msra.mxu0 0.0
    %2121 = vmatprep.subr.mxu0 0.0
    %2122 = vmatpush1.msra.mxu0 0.0
    %2123 = vmatprep.subr.mxu0 0.0
    %2124 = vmatpush1.msra.mxu0 0.0
    %2125 = vmatprep.subr.mxu0 0.0
    %2126 = vmatpush1.msra.mxu0 0.0
    %2127 = vmatprep.subr.mxu0 0.0
    %2128 = vmatpush1.msra.mxu0 0.0
    %2129 = vmatprep.subr.mxu0 0.0
    %2130 = vmatpush1.msra.mxu0 0.0
    %2131 = vmatprep.subr.mxu0 0.0
    %2132 = vmatpush1.msra.mxu0 0.0
    %2133 = vmatprep.subr.mxu0 0.0
    %2134 = vmatpush1.msra.mxu0 0.0
    %2135 = vmatprep.subr.mxu0 0.0
    %2136 = vmatpush1.msra.mxu0 0.0
    %2137 = vmatprep.subr.mxu0 0.0
    %2138 = vmatpush1.msra.mxu0 0.0
    %2139 = vmatprep.subr.mxu0 0.0
    %2140 = vmatpush1.msra.mxu0 0.0
    %2141 = vmatprep.subr.mxu0 0.0
    %2142 = vmatpush1.msra.mxu0 0.0
    %2143 = vmatprep.subr.mxu0 0.0
    %2144 = vmatpush1.msra.mxu0 0.0
    %2145 = vmatprep.subr.mxu0 0.0
    %2146 = vmatpush1.msra.mxu0 0.0
    %2147 = vmatprep.subr.mxu0 0.0
    %2148 = vmatpush1.msra.mxu0 0.0
    %2149 = vmatprep.mubr.f32.mxu0 0.0
    %2150 = vmatmul.mubr.f32.gmra.mrb[0].mxu0 %v2080
    %v2151 = vpop.f32.mrb[0].mxu0
    %v2152 = vadd.f32 %v2077, %v2151
    %v2153 = vpop.f32.mrb[0].mxu0
    %2154 = vmatprep.mubr.f32.mxu0 0.0
    %2155 = vmatmul.mubr.f32.gmra.mrb[0].mxu0 %v2083
    %v2156 = vpop.f32.mrb[0].mxu0
    %v2157 = vadd.f32 %v2077, %v2156
    %v2158 = vpop.f32.mrb[0].mxu0
    %2159 = vdwg.mxu0
    %v2160 = vmul.f32 %v2152, 0.5
    %v2161 = vmul.f32 %v2157, 0.5
    %v2162 = vmul.f32 %v2152, 0.70710677
    %v2163 = vmul.f32 %v2157, 0.70710677
    %v2164 = verf.f32.pop %v2162
    %v2165 = verf.f32.pop %v2163
    %v2166 = vadd.f32 %v2164, 1.0
    %v2167 = vadd.f32 %v2165, 1.0
    %v2168 = vmul.f32 %v2160, %v2166
    %v2169 = vmul.f32 %v2161, %v2167
    %v2170 = vld [vmem:[%s19] sm:$0x1]
    %v2171 = vld [vmem:[%s20] sm:$0x1]
    %v2172 = vsel %vm84, %v2168, 0.0
    %2173 = vadd.xlane.f32.xlu0 %v2172
    %v2174 = vpop.xlane.xlu0 %2173
    %v2175 = vsel %vm84, %v2169, 0.0
    %2176 = vadd.xlane.f32.xlu0 %v2175
    %v2177 = vpop.xlane.xlu0 %2176
    %v2178 = vmul.f32 %v2174, %v91
    %v2179 = vmul.f32 %v2177, %v91
    %v2180 = vsub.f32 %v2168, %v2178
    %v2181 = vsub.f32 %v2169, %v2179
    %v2182 = vmul.f32 %v2180, %v2180
    %v2183 = vmul.f32 %v2181, %v2181
    %v2184 = vsel %vm84, %v2182, 0.0
    %2185 = vadd.xlane.f32.xlu0 %v2184
    %v2186 = vpop.xlane.xlu0 %2185
    %v2187 = vsel %vm84, %v2183, 0.0
    %2188 = vadd.xlane.f32.xlu0 %v2187
    %v2189 = vpop.xlane.xlu0 %2188
    %v2190 = vmul.f32 %v2186, %v91
    %v2191 = vmul.f32 %v2189, %v91
    %v2192 = vadd.f32 %v2190, 1e-12
    %v2193 = vadd.f32 %v2191, 1e-12
    %v2194 = vrsqrt.pop %v2192
    %v2195 = vrsqrt.pop %v2193
    %v2196 = vmul.f32 %v2180, %v2194
    %v2197 = vmul.f32 %v2181, %v2195
    %v2199 = vlaneseq
    %v2200 = vshrl.u32 %v2199, 7
    %v2201 = vsub.s32 0, %v2200
    %v2202 = vrot.slane %v2170, %v2201
    %v2204 = vmul.f32 %v2196, %v2202
    %v2205 = vmul.f32 %v2197, %v2202
    %v2207 = vlaneseq
    %v2208 = vshrl.u32 %v2207, 7
    %v2209 = vsub.s32 0, %v2208
    %v2210 = vrot.slane %v2171, %v2209
    %v2212 = vadd.f32 %v2204, %v2210
    %v2213 = vadd.f32 %v2205, %v2210
    %v2214 = vld [vmem:[%s21] sm:$0xff]
    %v2215 = vld [vmem:[%s21 + $0x8] sm:$0xff]
    %v2216 = vld [vmem:[%s21 + $0x10] sm:$0xff]
    %v2217 = vld [vmem:[%s21 + $0x18] sm:$0xff]
    %v2218 = vld [vmem:[%s22] sm:$0x1]
    %v2220 = vlaneseq
    %v2221 = vshrl.u32 %v2220, 7
    %v2222 = vsub.s32 0, %v2221
    %v2223 = vrot.slane %v2218, %v2222
    %v2226 = vsel %vm84, %v2212, 0
    %v2229 = vsel %vm84, %v2213, 0
    %2231 = vmatprep.subr.mxu0 0.0
    %2232 = vmatpush1.msra.mxu0 %v2214
    %2233 = vmatprep.subr.mxu0 0.0
    %2234 = vmatpush1.msra.mxu0 %v2215
    %2235 = vmatprep.subr.mxu0 0.0
    %2236 = vmatpush1.msra.mxu0 %v2216
    %2237 = vmatprep.subr.mxu0 0.0
    %2238 = vmatpush1.msra.mxu0 %v2217
    %2239 = vmatprep.subr.mxu0 0.0
    %2240 = vmatpush1.msra.mxu0 0.0
    %2241 = vmatprep.subr.mxu0 0.0
    %2242 = vmatpush1.msra.mxu0 0.0
    %2243 = vmatprep.subr.mxu0 0.0
    %2244 = vmatpush1.msra.mxu0 0.0
    %2245 = vmatprep.subr.mxu0 0.0
    %2246 = vmatpush1.msra.mxu0 0.0
    %2247 = vmatprep.subr.mxu0 0.0
    %2248 = vmatpush1.msra.mxu0 0.0
    %2249 = vmatprep.subr.mxu0 0.0
    %2250 = vmatpush1.msra.mxu0 0.0
    %2251 = vmatprep.subr.mxu0 0.0
    %2252 = vmatpush1.msra.mxu0 0.0
    %2253 = vmatprep.subr.mxu0 0.0
    %2254 = vmatpush1.msra.mxu0 0.0
    %2255 = vmatprep.subr.mxu0 0.0
    %2256 = vmatpush1.msra.mxu0 0.0
    %2257 = vmatprep.subr.mxu0 0.0
    %2258 = vmatpush1.msra.mxu0 0.0
    %2259 = vmatprep.subr.mxu0 0.0
    %2260 = vmatpush1.msra.mxu0 0.0
    %2261 = vmatprep.subr.mxu0 0.0
    %2262 = vmatpush1.msra.mxu0 0.0
    %2263 = vmatprep.subr.mxu0 0.0
    %2264 = vmatpush1.msra.mxu0 0.0
    %2265 = vmatprep.subr.mxu0 0.0
    %2266 = vmatpush1.msra.mxu0 0.0
    %2267 = vmatprep.subr.mxu0 0.0
    %2268 = vmatpush1.msra.mxu0 0.0
    %2269 = vmatprep.subr.mxu0 0.0
    %2270 = vmatpush1.msra.mxu0 0.0
    %2271 = vmatprep.subr.mxu0 0.0
    %2272 = vmatpush1.msra.mxu0 0.0
    %2273 = vmatprep.subr.mxu0 0.0
    %2274 = vmatpush1.msra.mxu0 0.0
    %2275 = vmatprep.subr.mxu0 0.0
    %2276 = vmatpush1.msra.mxu0 0.0
    %2277 = vmatprep.subr.mxu0 0.0
    %2278 = vmatpush1.msra.mxu0 0.0
    %2279 = vmatprep.subr.mxu0 0.0
    %2280 = vmatpush1.msra.mxu0 0.0
    %2281 = vmatprep.subr.mxu0 0.0
    %2282 = vmatpush1.msra.mxu0 0.0
    %2283 = vmatprep.subr.mxu0 0.0
    %2284 = vmatpush1.msra.mxu0 0.0
    %2285 = vmatprep.subr.mxu0 0.0
    %2286 = vmatpush1.msra.mxu0 0.0
    %2287 = vmatprep.subr.mxu0 0.0
    %2288 = vmatpush1.msra.mxu0 0.0
    %2289 = vmatprep.subr.mxu0 0.0
    %2290 = vmatpush1.msra.mxu0 0.0
    %2291 = vmatprep.subr.mxu0 0.0
    %2292 = vmatpush1.msra.mxu0 0.0
    %2293 = vmatprep.subr.mxu0 0.0
    %2294 = vmatpush1.msra.mxu0 0.0
    %2295 = vmatprep.mubr.f32.mxu0 0.0
    %2296 = vmatmul.mubr.f32.gmra.mrb[0].mxu0 %v2226
    %v2297 = vpop.f32.mrb[0].mxu0
    %v2298 = vadd.f32 %v2223, %v2297
    %v2299 = vpop.f32.mrb[0].mxu0
    %2300 = vmatprep.mubr.f32.mxu0 0.0
    %2301 = vmatmul.mubr.f32.gmra.mrb[0].mxu0 %v2229
    %v2302 = vpop.f32.mrb[0].mxu0
    %v2303 = vadd.f32 %v2223, %v2302
    %v2304 = vpop.f32.mrb[0].mxu0
    %2305 = vdwg.mxu0
    %v2306 = vld [vmem:[%s1] sm:$0xff]
    %v2307 = vld [vmem:[%s1 + $0x8] sm:$0xff]
    %2308 = vmax.xlane.f32.xlu0 %v2298
    %v2309 = vpop.xlane.xlu0 %2308
    %2310 = vmax.xlane.f32.xlu0 %v2303
    %v2311 = vpop.xlane.xlu0 %2310
    %v2312 = vsub.f32 %v2298, %v2309
    %v2313 = vsub.f32 %v2303, %v2311
    %v2314 = vmul.f32 %v2312, 1.442695
    %v2315 = vpow.pop %v2314
    %v2316 = vmul.f32 %v2313, 1.442695
    %v2317 = vpow.pop %v2316
    %2318 = vadd.xlane.f32.xlu0 %v2315
    %v2319 = vpop.xlane.xlu0 %2318
    %2320 = vadd.xlane.f32.xlu0 %v2317
    %v2321 = vpop.xlane.xlu0 %2320
    %v2322 = vlog2.pop %v2319
    %v2323 = vmul.f32 %v2322, 0.6931472
    %v2324 = vlog2.pop %v2321
    %v2325 = vmul.f32 %v2324, 0.6931472
    %v2326 = vadd.f32 %v2323, %v2309
    %v2327 = vadd.f32 %v2325, %v2311
    %v2328 = vlaneseq
    %v2329 = vand.u32 %v2328, 127
    %2330 = vset.pattern.permute.xlu0 0
    %2331 = vperm.xlu0 %2330, %v2306
    %v2332 = vpop.permute.xlu0 %2331
    %2333 = vset.pattern.permute.xlu0 0
    %2334 = vperm.xlu0 %2333, %v2307
    %v2335 = vpop.permute.xlu0 %2334
    %vm2336 = vcmp.eq.s32.totalorder %v2329, %v2332
    %vm2337 = vcmp.eq.s32.totalorder %v2329, %v2335
    %v2338 = vsel %vm2336, 1, 0
    %v2339 = vsel %vm2337, 1, 0
    %v2340 = vcvt.s32.f32 %v2338
    %v2341 = vcvt.s32.f32 %v2339
    %v2342 = vmul.f32 %v2298, %v2340
    %v2343 = vmul.f32 %v2303, %v2341
    %2344 = vadd.xlane.f32.xlu0 %v2342
    %v2345 = vpop.xlane.xlu0 %2344
    %2346 = vadd.xlane.f32.xlu0 %v2343
    %v2347 = vpop.xlane.xlu0 %2346
    %vm2348 = vcmp.ne.s32.totalorder %v2306, 4294967196
    %vm2349 = vcmp.ne.s32.totalorder %v2307, 4294967196
    %v2350 = vsel %vm2348, 1, 0
    %v2351 = vsel %vm2349, 1, 0
    %v2352 = vcvt.s32.f32 %v2350
    %v2353 = vcvt.s32.f32 %v2351
    %v2354 = vsub.f32 %v2326, %v2345
    %v2355 = vsub.f32 %v2327, %v2347
    %v2356 = vmul.f32 %v2354, %v2352
    %v2357 = vmul.f32 %v2355, %v2353
    %vm2358 = vcmask 7168
    %v2359 = vsel %vm2358, %v2356, 0.0
    %v2360 = vsel %vm2358, %v2357, 0.0
    %v2361 = vadd.f32 %v2359, %v2360
    %v2362 = vrot.slane %v2361, 4
    %v2363 = vadd.f32 %v2361, %v2362
    %v2364 = vrot.slane %v2363, 2
    %v2365 = vadd.f32 %v2363, %v2364
    %v2366 = vrot.slane %v2365, 1
    %v2367 = vadd.f32 %v2365, %v2366
    %vm2368 = vcmask 0
    %2369 = vst.msk [vmem:[#allocation2] sm:$0x1] %vm2368, %v2367
    %v2370 = vsel %vm2358, %v2352, 0.0
    %v2371 = vsel %vm2358, %v2353, 0.0
    %v2372 = vadd.f32 %v2370, %v2371
    %v2373 = vrot.slane %v2372, 4
    %v2374 = vadd.f32 %v2372, %v2373
    %v2375 = vrot.slane %v2374, 2
    %v2376 = vadd.f32 %v2374, %v2375
    %v2377 = vrot.slane %v2376, 1
    %v2378 = vadd.f32 %v2376, %v2377
    %2379 = vst.msk [vmem:[#allocation4] sm:$0x1] %vm2368, %v2378
    // Predicated region
    $region94: #{bert_pretrain_forward.1} parent=1 // pred_check
      _
    $region95: #{bert_pretrain_forward.1} parent=1 // pred_check_branch
      %2381 = sbr.rel (0) target = $region97
    $region96: #{bert_pretrain_forward.1} parent=1 // pred_region
      %s2383 = ssub.s32 16, 16
      %2384 = vsyncadd [#allocation3], %s2383
      %s2386 = sshll.u32 [#allocation2], 4
      %s2387 = int_to_ptr.vmem [resolvable:$true] %s2386
      %2389 = dma.vmem_to_hbm [thread:$0]  %s2387, 16, %s23, [#allocation3]
    $region97: #{bert_pretrain_forward.1} parent=1 // pred_fallthru
      _
    // Predicated region
    $region98: #{bert_pretrain_forward.1} parent=1 // pred_check
      _
    $region99: #{bert_pretrain_forward.1} parent=1 // pred_check_branch
      %2391 = sbr.rel (0) target = $region101
    $region100: #{bert_pretrain_forward.1} parent=1 // pred_region
      %s2393 = ssub.s32 16, 16
      %2394 = vsyncadd [#allocation5], %s2393
      %s2396 = sshll.u32 [#allocation4], 4
      %s2397 = int_to_ptr.vmem [resolvable:$true] %s2396
      %2399 = dma.vmem_to_hbm [thread:$0]  %s2397, 16, %s24, [#allocation5]
    $region101: #{bert_pretrain_forward.1} parent=1 // pred_fallthru
      _
    // Predicated region
    $region102: #{bert_pretrain_forward.1} parent=1 // pred_check
      _
    $region103: #{bert_pretrain_forward.1} parent=1 // pred_check_branch
      %2401 = sbr.rel (0) target = $region105
    $region104: #{bert_pretrain_forward.1} parent=1 // pred_region
      %2402 = dma.done [#allocation3], 16
    $region105: #{bert_pretrain_forward.1} parent=1 // pred_fallthru
      _
    // Predicated region
    $region106: #{bert_pretrain_forward.1} parent=1 // pred_check
      _
    $region107: #{bert_pretrain_forward.1} parent=1 // pred_check_branch
      %2404 = sbr.rel (0) target = $region109
    $region108: #{bert_pretrain_forward.1} parent=1 // pred_region
      %2405 = dma.done [#allocation5], 16
    $region109: #{bert_pretrain_forward.1} parent=1 // pred_fallthru
      _
    %2406 = vsyncpa [#allocation3], 1
    %2407 = vsyncpa [#allocation5], 1

</llo_original>
